<compile_context>
chip_gen: v7x
topology: tpu7x:2x2x1
jax: 0.10.0
libtpu: 0.0.40
codegen_flags: <defaults>
</compile_context>

<pallas_src>
import functools

import jax
import jax.numpy as jnp
from jax.experimental import pallas as pl
from jax.experimental.pallas import tpu as pltpu


_SPLIT = 2                      # leading "parallel" grid axis in pass 1 (megacore on v7x)
_TILE_TARGET_BYTES = 2 << 20    # ~2 MiB per streamed z tile buffer


def _round_up(x, m):
    return ((x + m - 1) // m) * m


def _vmem_limit(need_bytes):
    # Generous floor, capped under v7x's 64 MiB physical VMEM.
    return int(min(max(need_bytes, 32 << 20), 64 << 20))


def _choose_tile_n(n_nodes, n_meta, d, tile_n):
    bytes_per_node = n_meta * d * 4
    if tile_n is None:
        tile_n = max(1, _TILE_TARGET_BYTES // bytes_per_node)
    # Keep (tile_n, D) output tiles sublane-aligned and avoid padding N by more
    # than one (SPLIT * tile_n) chunk.
    cap = _round_up(max(1, -(-n_nodes // _SPLIT)), 8)
    return min(_round_up(max(int(tile_n), 8), 8), cap)


# --------------------------------------------------------------------------- #
# Fused path: z fully VMEM-resident, one kernel invocation.                    #
# --------------------------------------------------------------------------- #
def _fused_kernel(z_ref, w1_ref, b1_ref, w2_ref, o_ref, *, compute_dtype):
    n, m, d = z_ref.shape
    h_dim = w1_ref.shape[1]
    z3 = z_ref[...]                                     # (N, M, D) f32, resident
    z2 = z3.reshape(n * m, d)                           # layout-trivial when M == 8
    h = jnp.tanh(
        jnp.dot(z2.astype(compute_dtype), w1_ref[...].astype(compute_dtype),
                preferred_element_type=jnp.float32) + b1_ref[...])     # (N*M, H) f32
    hw = (h * w2_ref[...]).reshape(n, m, h_dim)         # lane-dense
    scores = jnp.sum(jnp.sum(hw, axis=0), axis=-1, keepdims=True)      # (M, 1)
    mean = scores * (1.0 / n)
    mx = jnp.max(mean, axis=0, keepdims=True)
    e = jnp.exp(mean - mx)
    beta = e / jnp.sum(e, axis=0, keepdims=True)        # exact softmax, runs once
    o_ref[...] = jnp.sum(z3 * beta[None, :, :], axis=1).astype(o_ref.dtype)


# --------------------------------------------------------------------------- #
# Tiled path, pass 1: per-metapath score sums (lane-dense reduction).          #
# --------------------------------------------------------------------------- #
def _score_kernel(z_ref, w1_ref, b1_ref, w2_ref, ssum_ref, *,
                  num_metapaths, num_valid_nodes, tile_nodes, tiles_per_core,
                  padded, compute_dtype):
    m = num_metapaths
    h_dim = w1_ref.shape[1]
    c = pl.program_id(0)
    i = pl.program_id(1)

    @pl.when(i == 0)
    def _init():
        ssum_ref[...] = jnp.zeros_like(ssum_ref)

    # One tall (tile_n*M, D) x (D, H) MXU matmul per tile; f32 accumulation.
    zf = z_ref[...].astype(compute_dtype)
    w1 = w1_ref[...].astype(compute_dtype)
    h = jnp.tanh(
        jnp.dot(zf, w1, preferred_element_type=jnp.float32) + b1_ref[...])
    hw = h * w2_ref[...]                                # (tile_n*M, H), lane-dense

    if padded:  # mask node rows beyond the true N (pad rows are node-major trailing)
        tile_base = (c * tiles_per_core + i) * tile_nodes
        valid_rows = (num_valid_nodes - tile_base) * m
        rows = jax.lax.broadcasted_iota(jnp.int32, hw.shape, 0)
        hw = jnp.where(rows < valid_rows, hw, 0.0)

    hw3 = hw.reshape(tile_nodes, m, h_dim)              # layout-trivial when M == 8
    s_mh = jnp.sum(hw3, axis=0)                         # (M, H) — plain VPU adds
    part = jnp.sum(s_mh, axis=-1, keepdims=True)        # (M, 1) — one lane reduce
    ssum_ref[...] += part[None, :, :]                   # resident (1, M, 1) accumulator


# --------------------------------------------------------------------------- #
# Tiled path, pass 2: out[n, :] = sum_m beta[m] * z[n, m, :]                    #
# --------------------------------------------------------------------------- #
def _apply_kernel(beta_ref, z_ref, o_ref):
    beta = beta_ref[...]                                # (M, 1), VMEM-resident
    # (tile_n, M, D) * (1, M, 1) -> sum over the metapath (sublane) axis.
    o_ref[...] = jnp.sum(z_ref[...] * beta[None, :, :], axis=1).astype(o_ref.dtype)


# --------------------------------------------------------------------------- #
# Wrapper                                                                       #
# --------------------------------------------------------------------------- #
def semantic_attention(z, w1, b1, w2, *, tile_n=None,
                       compute_dtype=jnp.float32, fuse=None):
    """Forward pass of HAN SemanticAttention (attention=False path).

    z : (N, M, D) — per-node, per-metapath embeddings
    w1: (D, H)    — Linear1 weight in x @ W layout (PyTorch weight transposed)
    b1: (H,)      — Linear1 bias
    w2: (H,)      — Linear2 weight (no bias)
    Returns (N, D) float32.  compute_dtype=jnp.bfloat16 runs the dominant
    Linear1 matmul on the bf16 MXU path (recommended on v6e/v7x).
    """
    n_nodes, n_meta, d = z.shape
    h_dim = w1.shape[1]
    zf = z.astype(jnp.float32)
    w1f = w1.astype(jnp.float32)
    b1_2d = b1.astype(jnp.float32).reshape(1, h_dim)
    w2_2d = w2.astype(jnp.float32).reshape(1, h_dim)

    z_bytes = n_nodes * n_meta * d * 4
    h_bytes = n_nodes * n_meta * h_dim * 4
    out_bytes = n_nodes * d * 4
    w_bytes = d * h_dim * 4
    fused_need = 2 * z_bytes + 2 * h_bytes + 2 * out_bytes + 4 * w_bytes + (4 << 20)
    if fuse is None:
        fuse = fused_need <= (24 << 20)      # safe on v7x's 64 MiB physical VMEM

    # ---------------- fused single-call path (z read from HBM once) ----------
    if fuse:
        return pl.pallas_call(
            functools.partial(_fused_kernel, compute_dtype=compute_dtype),
            out_shape=jax.ShapeDtypeStruct((n_nodes, d), jnp.float32),
            grid=(1,),
            in_specs=[
                pl.BlockSpec((n_nodes, n_meta, d), lambda i: (0, 0, 0)),
                pl.BlockSpec((d, h_dim), lambda i: (0, 0)),
                pl.BlockSpec((1, h_dim), lambda i: (0, 0)),
                pl.BlockSpec((1, h_dim), lambda i: (0, 0)),
            ],
            out_specs=pl.BlockSpec((n_nodes, d), lambda i: (0, 0)),
            compiler_params=pltpu.CompilerParams(
                dimension_semantics=("arbitrary",),
                vmem_limit_bytes=_vmem_limit(fused_need)),
        )(zf, w1f, b1_2d, w2_2d)

    # ---------------- tiled two-pass path ------------------------------------
    tile_n = _choose_tile_n(n_nodes, n_meta, d, tile_n)
    n_pad = _round_up(n_nodes, _SPLIT * tile_n)
    padded = n_pad != n_nodes
    if padded:
        zf = jnp.pad(zf, ((0, n_pad - n_nodes), (0, 0), (0, 0)))
    z2d = zf.reshape(n_pad * n_meta, d)                 # row-major view, no copy
    tiles_total = n_pad // tile_n
    tiles_per_core = tiles_total // _SPLIT

    tile_z_bytes = tile_n * n_meta * d * 4
    tile_h_bytes = tile_n * n_meta * h_dim * 4
    vmem1 = _vmem_limit(2 * tile_z_bytes + 2 * tile_h_bytes + 4 * w_bytes + (4 << 20))
    vmem2 = _vmem_limit(2 * tile_z_bytes + 2 * tile_n * d * 4 + (4 << 20))

    # Pass 1: per-core per-metapath score sums (accumulated over node tiles).
    ssum = pl.pallas_call(
        functools.partial(_score_kernel,
                          num_metapaths=n_meta, num_valid_nodes=n_nodes,
                          tile_nodes=tile_n, tiles_per_core=tiles_per_core,
                          padded=padded, compute_dtype=compute_dtype),
        out_shape=jax.ShapeDtypeStruct((_SPLIT, n_meta, 1), jnp.float32),
        grid=(_SPLIT, tiles_per_core),
        in_specs=[
            pl.BlockSpec((tile_n * n_meta, d),
                         lambda c, i: (c * tiles_per_core + i, 0)),   # z streamed
            pl.BlockSpec((d, h_dim), lambda c, i: (0, 0)),            # w1 resident
            pl.BlockSpec((1, h_dim), lambda c, i: (0, 0)),            # b1 resident
            pl.BlockSpec((1, h_dim), lambda c, i: (0, 0)),            # w2 resident
        ],
        out_specs=pl.BlockSpec((1, n_meta, 1), lambda c, i: (c, 0, 0)),
        compiler_params=pltpu.CompilerParams(
            dimension_semantics=("parallel", "arbitrary"),
            vmem_limit_bytes=vmem1),
    )(z2d, w1f, b1_2d, w2_2d)

    # Tiny finalize (M scalars) in plain JAX: mean over nodes + exact softmax.
    beta = jax.nn.softmax(jnp.sum(ssum, axis=0) / n_nodes, axis=0)     # (M, 1)

    # Pass 2: weighted sum over metapaths, lane-dense output tiles.
    # (pipeline_mode=pl.Buffered(3) on the z spec is an optional further tweak.)
    out_pad = pl.pallas_call(
        _apply_kernel,
        out_shape=jax.ShapeDtypeStruct((n_pad, d), jnp.float32),
        grid=(tiles_total,),
        in_specs=[
            pl.BlockSpec((n_meta, 1), lambda i: (0, 0)),              # beta resident
            pl.BlockSpec((tile_n, n_meta, d), lambda i: (i, 0, 0)),   # z streamed
        ],
        out_specs=pl.BlockSpec((tile_n, d), lambda i: (i, 0)),
        compiler_params=pltpu.CompilerParams(
            dimension_semantics=("parallel",),
            vmem_limit_bytes=vmem2),
    )(beta, zf)

    return out_pad[:n_nodes] if padded else out_pad


def semantic_attention_ref(z, w1, b1, w2):
    """Pure-JAX reference matching the PyTorch forward exactly."""
    w = jnp.tanh(jnp.einsum("nmd,dh->nmh", z, w1) + b1)          # (N, M, H)
    w = jnp.einsum("nmh,h->nm", w, w2.reshape(-1))[..., None]    # (N, M, 1)
    w = w.mean(0)                                                # (M, 1)
    beta = jax.nn.softmax(w, axis=0)                             # (M, 1)
    beta = jnp.broadcast_to(beta, (z.shape[0],) + beta.shape)    # (N, M, 1)
    return (beta * z).sum(1)                                     # (N, D)


if __name__ == "__main__":
    # N nodes, M metapaths, in_size D, hidden_size H (PyTorch default 128).
    N, M, D, H = 256, 8, 128, 128

    key = jax.random.PRNGKey(0)
    kz, kw1, kb1, kw2, kz2 = jax.random.split(key, 5)

    z = jax.random.normal(kz, (N, M, D), dtype=jnp.float32)
    # PyTorch params: Linear1.weight (H, D), Linear1.bias (H,), Linear2.weight
    # (1, H); stored here pre-transposed for the x @ W layout.
    w1 = jax.random.normal(kw1, (D, H), dtype=jnp.float32) * 0.1
    b1 = jax.random.normal(kb1, (H,), dtype=jnp.float32) * 0.1
    w2 = jax.random.normal(kw2, (H,), dtype=jnp.float32) * 0.1

    ref = semantic_attention_ref(z, w1, b1, w2)

    # 1) Fused single-call path (auto-selected: z + intermediates fit in VMEM).
    fused_fn = jax.jit(semantic_attention)
    out_fused = jax.block_until_ready(fused_fn(z, w1, b1, w2))
    assert out_fused.shape == (N, D)
    assert jnp.allclose(out_fused, ref, rtol=1e-2, atol=1e-3), "fused mismatch"

    # 2) Tiled two-pass path (exercises the grid, megacore split, accumulation).
    tiled_fn = jax.jit(functools.partial(semantic_attention, fuse=False, tile_n=64))
    out_tiled = jax.block_until_ready(tiled_fn(z, w1, b1, w2))
    assert jnp.allclose(out_tiled, ref, rtol=1e-2, atol=1e-3), "tiled mismatch"

    # 3) Tiled path with an N that needs padding + in-kernel masking.
    z_odd = jax.random.normal(kz2, (100, M, D), dtype=jnp.float32)
    ref_odd = semantic_attention_ref(z_odd, w1, b1, w2)
    ragged_fn = jax.jit(functools.partial(semantic_attention, fuse=False))
    out_odd = jax.block_until_ready(ragged_fn(z_odd, w1, b1, w2))
    assert out_odd.shape == (100, D)
    assert jnp.allclose(out_odd, ref_odd, rtol=1e-2, atol=1e-3), "padded mismatch"

    # 4) bf16 MXU path (recommended on v6e/v7x), looser tolerance.
    bf16_fn = jax.jit(functools.partial(semantic_attention, fuse=False, tile_n=64,
                                        compute_dtype=jnp.bfloat16))
    out_bf16 = jax.block_until_ready(bf16_fn(z, w1, b1, w2))
    assert jnp.allclose(out_bf16, ref, rtol=1e-1, atol=1e-1), "bf16 mismatch"

    print("KERNEL_OK")
</pallas_src>

<mosaic_0001>
module attributes {stable_mosaic.version = 11 : i64} {
  func.func @_fused_kernel(%arg0: i32, %arg1: memref<256x8x128xf32, #tpu.memory_space<vmem>>, %arg2: memref<128x128xf32, #tpu.memory_space<vmem>>, %arg3: memref<1x128xf32, #tpu.memory_space<vmem>>, %arg4: memref<1x128xf32, #tpu.memory_space<vmem>>, %arg5: memref<256x128xf32, #tpu.memory_space<vmem>>) attributes {dimension_semantics = [#tpu.dimension_semantics<arbitrary>], iteration_bounds = array<i64: 1>, scalar_prefetch = 0 : i64, scratch_operands = 0 : i64, tpu.core_type = #tpu.core_type<tc>, window_params = [{pipeline_mode = #tpu.pipeline_mode<synchronous>, transform_indices = @transform_0, window_bounds = array<i64: 256, 8, 128>}, {pipeline_mode = #tpu.pipeline_mode<synchronous>, transform_indices = @transform_1, window_bounds = array<i64: 128, 128>}, {pipeline_mode = #tpu.pipeline_mode<synchronous>, transform_indices = @transform_2, window_bounds = array<i64: 1, 128>}, {pipeline_mode = #tpu.pipeline_mode<synchronous>, transform_indices = @transform_3, window_bounds = array<i64: 1, 128>}, {pipeline_mode = #tpu.pipeline_mode<synchronous>, transform_indices = @transform_4, window_bounds = array<i64: 256, 128>}]} {
    %c0 = arith.constant 0 : index
    %c0_0 = arith.constant 0 : index
    %c0_1 = arith.constant 0 : index
    %0 = vector.load %arg1[%c0, %c0_0, %c0_1] : memref<256x8x128xf32, #tpu.memory_space<vmem>>, vector<256x8x128xf32>
    %1 = vector.shape_cast %0 : vector<256x8x128xf32> to vector<2048x128xf32>
    %c0_2 = arith.constant 0 : index
    %c0_3 = arith.constant 0 : index
    %2 = vector.load %arg2[%c0_2, %c0_3] : memref<128x128xf32, #tpu.memory_space<vmem>>, vector<128x128xf32>
    %cst = arith.constant dense<0.000000e+00> : vector<2048x128xf32>
    %3 = tpu.matmul %1, %2, %cst {dimension_numbers = #tpu.dot_dimension_numbers<[1], [0], [0], [1], [0, 0, 1, 1], [], []>} : vector<2048x128xf32>, vector<128x128xf32>, vector<2048x128xf32> -> vector<2048x128xf32>
    %c0_4 = arith.constant 0 : index
    %c0_5 = arith.constant 0 : index
    %4 = vector.load %arg3[%c0_4, %c0_5] : memref<1x128xf32, #tpu.memory_space<vmem>>, vector<1x128xf32>
    %5 = vector.broadcast %4 : vector<1x128xf32> to vector<2048x128xf32>
    %6 = arith.addf %3, %5 : vector<2048x128xf32>
    %7 = math.tanh %6 : vector<2048x128xf32>
    %c0_6 = arith.constant 0 : index
    %c0_7 = arith.constant 0 : index
    %8 = vector.load %arg4[%c0_6, %c0_7] : memref<1x128xf32, #tpu.memory_space<vmem>>, vector<1x128xf32>
    %9 = vector.broadcast %8 : vector<1x128xf32> to vector<2048x128xf32>
    %10 = arith.mulf %7, %9 : vector<2048x128xf32>
    %11 = vector.shape_cast %10 : vector<2048x128xf32> to vector<256x8x128xf32>
    %cst_8 = arith.constant dense<0.000000e+00> : vector<8x128xf32>
    %12 = vector.multi_reduction <add>, %11, %cst_8 [0] : vector<256x8x128xf32> to vector<8x128xf32>
    %cst_9 = arith.constant dense<0.000000e+00> : vector<8xf32>
    %13 = vector.multi_reduction <add>, %12, %cst_9 [1] : vector<8x128xf32> to vector<8xf32>
    %14 = vector.shape_cast %13 : vector<8xf32> to vector<8x1xf32>
    %cst_10 = arith.constant 3.906250e-03 : f32
    %15 = vector.broadcast %cst_10 : f32 to vector<8x1xf32>
    %16 = arith.mulf %14, %15 : vector<8x1xf32>
    %cst_11 = arith.constant dense<0xFF800000> : vector<1xf32>
    %17 = vector.multi_reduction <maximumf>, %16, %cst_11 [0] : vector<8x1xf32> to vector<1xf32>
    %18 = vector.shape_cast %17 : vector<1xf32> to vector<1x1xf32>
    %19 = vector.broadcast %18 : vector<1x1xf32> to vector<8x1xf32>
    %20 = arith.subf %16, %19 : vector<8x1xf32>
    %21 = math.exp %20 : vector<8x1xf32>
    %cst_12 = arith.constant dense<0.000000e+00> : vector<1xf32>
    %22 = vector.multi_reduction <add>, %21, %cst_12 [0] : vector<8x1xf32> to vector<1xf32>
    %23 = vector.shape_cast %22 : vector<1xf32> to vector<1x1xf32>
    %24 = vector.broadcast %23 : vector<1x1xf32> to vector<8x1xf32>
    %25 = arith.divf %21, %24 : vector<8x1xf32>
    %26 = vector.shape_cast %25 : vector<8x1xf32> to vector<1x8x1xf32>
    %27 = vector.broadcast %26 : vector<1x8x1xf32> to vector<256x8x128xf32>
    %28 = arith.mulf %0, %27 : vector<256x8x128xf32>
    %cst_13 = arith.constant dense<0.000000e+00> : vector<256x128xf32>
    %29 = vector.multi_reduction <add>, %28, %cst_13 [1] : vector<256x8x128xf32> to vector<256x128xf32>
    %c0_14 = arith.constant 0 : index
    %c0_15 = arith.constant 0 : index
    %30 = vector.load %arg5[%c0_14, %c0_15] : memref<256x128xf32, #tpu.memory_space<vmem>>, vector<256x128xf32>
    tpu.vector_store %arg5[%c0_14, %c0_15], %29 {strides = array<i32>} : memref<256x128xf32, #tpu.memory_space<vmem>>, vector<256x128xf32>,
    return
  }
  func.func @transform_0(%arg0: i32) -> (i32, i32, i32) {
    %c0_i32 = arith.constant 0 : i32
    %c0_i32_0 = arith.constant 0 : i32
    %c0_i32_1 = arith.constant 0 : i32
    %c0_i32_2 = arith.constant 0 : i32
    return %c0_i32, %c0_i32_0, %c0_i32_1 : i32, i32, i32
  }
  func.func @transform_1(%arg0: i32) -> (i32, i32) {
    %c0_i32 = arith.constant 0 : i32
    %c0_i32_0 = arith.constant 0 : i32
    %c0_i32_1 = arith.constant 0 : i32
    return %c0_i32, %c0_i32_0 : i32, i32
  }
  func.func @transform_2(%arg0: i32) -> (i32, i32) {
    %c0_i32 = arith.constant 0 : i32
    %c0_i32_0 = arith.constant 0 : i32
    %c0_i32_1 = arith.constant 0 : i32
    return %c0_i32, %c0_i32_0 : i32, i32
  }
  func.func @transform_3(%arg0: i32) -> (i32, i32) {
    %c0_i32 = arith.constant 0 : i32
    %c0_i32_0 = arith.constant 0 : i32
    %c0_i32_1 = arith.constant 0 : i32
    return %c0_i32, %c0_i32_0 : i32, i32
  }
  func.func @transform_4(%arg0: i32) -> (i32, i32) {
    %c0_i32 = arith.constant 0 : i32
    %c0_i32_0 = arith.constant 0 : i32
    %c0_i32_1 = arith.constant 0 : i32
    return %c0_i32, %c0_i32_0 : i32, i32
  }
}

</mosaic_0001>

<llo_original>
// kernel: semantic_attention.1
$region0: #{semantic_attention.1}
  #allocation0 [shape = 'u32[]', space=smem, size = 0x4, offset = 0x4, fixed_abs, tag = 'smem constant byte address 0x4 - core index']
  #allocation1 [shape = 'u32[144,128]{1,0:T(1,128)}', space=vmem, size = 0x12000, scoped, tag = 'internal scratch']
  %s0 = inlined_call_operand.hbm [shape: f32[256,8,128], index: 0, kind: input, shape index: {}]
  %s1 = inlined_call_operand.hbm [shape: f32[128,128], index: 1, kind: input, shape index: {}]
  %s2 = inlined_call_operand.vmem [shape: f32[1,128], index: 2, kind: input, shape index: {}]
  %s3 = inlined_call_operand.vmem [shape: f32[1,128], index: 3, kind: input, shape index: {}]
  %s4 = inlined_call_operand.hbm [shape: f32[256,128], index: 4, kind: output, shape index: {}]
  %s5 = sld [smem:[#allocation0]]
  $region34: #{semantic_attention.1} parent=0
    _
  %s7 = ssub.s32 1, %s5
  %s8 = scalar_select 0, %s7, %s5
  $region1: #{semantic_attention.1} parent=0
    #allocation2 [shape = 'u8[1048576]{0}', space=vmem, size = 0x100000, scoped, tag = 'input window, operand 0, single buffered']
    #allocation3 [shape = 's32[1]{0}', space=sflag, size = 0x4, scoped, tag = 'scoped memory for semantic_attention.1']
    #allocation4 [shape = 's32[1]{0}', space=sflag, size = 0x4, scoped, tag = 'scoped memory for semantic_attention.1']
    #allocation5 [shape = 'u8[65536]{0}', space=vmem, size = 0x10000, scoped, tag = 'input window, operand 1, single buffered']
    #allocation6 [shape = 's32[1]{0}', space=sflag, size = 0x4, scoped, tag = 'scoped memory for semantic_attention.1']
    #allocation7 [shape = 'u8[131072]{0}', space=vmem, size = 0x20000, scoped, tag = 'output window, operand 0, single buffered']
    %9 = vsyncpa [#allocation3], 0
    %10 = vsyncpa [#allocation6], 0
    %11 = vsyncpa [#allocation4], 0
    // Predicated region
    $region2: #{semantic_attention.1} parent=1 // pred_check
      _
    $region3: #{semantic_attention.1} parent=1 // pred_check_branch
      %13 = sbr.rel (0) target = $region5
    $region4: #{semantic_attention.1} parent=1 // pred_region
      %s15 = ssub.s32 32768, 32768
      %16 = vsyncadd [#allocation3], %s15
      %s17 = sshll.u32 [#allocation2], 4
      %s18 = int_to_ptr.vmem [resolvable:$true] %s17
      %23 = dma.hbm_to_vmem [thread:$0]  %s0, 32768, %s18, [#allocation3], 128, 128, 8
    $region5: #{semantic_attention.1} parent=1 // pred_fallthru
      _
    // Predicated region
    $region6: #{semantic_attention.1} parent=1 // pred_check
      _
    $region7: #{semantic_attention.1} parent=1 // pred_check_branch
      %25 = sbr.rel (0) target = $region9
    $region8: #{semantic_attention.1} parent=1 // pred_region
      %s27 = ssub.s32 2048, 2048
      %28 = vsyncadd [#allocation6], %s27
      %s29 = sshll.u32 [#allocation5], 4
      %s30 = int_to_ptr.vmem [resolvable:$true] %s29
      %35 = dma.hbm_to_vmem [thread:$0]  %s1, 2048, %s30, [#allocation6], 128, 128, 8
    $region9: #{semantic_attention.1} parent=1 // pred_fallthru
      _
    // Predicated region
    $region10: #{semantic_attention.1} parent=1 // pred_check
      _
    $region11: #{semantic_attention.1} parent=1 // pred_check_branch
      %37 = sbr.rel (0) target = $region13
    $region12: #{semantic_attention.1} parent=1 // pred_region
      _
    $region13: #{semantic_attention.1} parent=1 // pred_fallthru
      _
    // Predicated region
    $region14: #{semantic_attention.1} parent=1 // pred_check
      _
    $region15: #{semantic_attention.1} parent=1 // pred_check_branch
      %39 = sbr.rel (0) target = $region17
    $region16: #{semantic_attention.1} parent=1 // pred_region
      _
    $region17: #{semantic_attention.1} parent=1 // pred_fallthru
      _
    // Predicated region
    $region18: #{semantic_attention.1} parent=1 // pred_check
      _
    $region19: #{semantic_attention.1} parent=1 // pred_check_branch
      %41 = sbr.rel (0) target = $region21
    $region20: #{semantic_attention.1} parent=1 // pred_region
      %42 = dma.done [#allocation3], 32768
    $region21: #{semantic_attention.1} parent=1 // pred_fallthru
      _
    // Predicated region
    $region22: #{semantic_attention.1} parent=1 // pred_check
      _
    $region23: #{semantic_attention.1} parent=1 // pred_check_branch
      %44 = sbr.rel (0) target = $region25
    $region24: #{semantic_attention.1} parent=1 // pred_region
      %45 = dma.done [#allocation6], 2048
    $region25: #{semantic_attention.1} parent=1 // pred_fallthru
      _
    %v46 = vld [vmem:[#allocation2] sm:$0xff]
    %v47 = vld [vmem:[#allocation2 + $0x8] sm:$0xff]
    %v48 = vld [vmem:[#allocation2 + $0x10] sm:$0xff]
    %v49 = vld [vmem:[#allocation2 + $0x18] sm:$0xff]
    %v50 = vld [vmem:[#allocation2 + $0x20] sm:$0xff]
    %v51 = vld [vmem:[#allocation2 + $0x28] sm:$0xff]
    %v52 = vld [vmem:[#allocation2 + $0x30] sm:$0xff]
    %v53 = vld [vmem:[#allocation2 + $0x38] sm:$0xff]
    %v54 = vld [vmem:[#allocation2 + $0x40] sm:$0xff]
    %v55 = vld [vmem:[#allocation2 + $0x48] sm:$0xff]
    %v56 = vld [vmem:[#allocation2 + $0x50] sm:$0xff]
    %v57 = vld [vmem:[#allocation2 + $0x58] sm:$0xff]
    %v58 = vld [vmem:[#allocation2 + $0x60] sm:$0xff]
    %v59 = vld [vmem:[#allocation2 + $0x68] sm:$0xff]
    %v60 = vld [vmem:[#allocation2 + $0x70] sm:$0xff]
    %v61 = vld [vmem:[#allocation2 + $0x78] sm:$0xff]
    %v62 = vld [vmem:[#allocation2 + $0x80] sm:$0xff]
    %v63 = vld [vmem:[#allocation2 + $0x88] sm:$0xff]
    %v64 = vld [vmem:[#allocation2 + $0x90] sm:$0xff]
    %v65 = vld [vmem:[#allocation2 + $0x98] sm:$0xff]
    %v66 = vld [vmem:[#allocation2 + $0xa0] sm:$0xff]
    %v67 = vld [vmem:[#allocation2 + $0xa8] sm:$0xff]
    %v68 = vld [vmem:[#allocation2 + $0xb0] sm:$0xff]
    %v69 = vld [vmem:[#allocation2 + $0xb8] sm:$0xff]
    %v70 = vld [vmem:[#allocation2 + $0xc0] sm:$0xff]
    %v71 = vld [vmem:[#allocation2 + $0xc8] sm:$0xff]
    %v72 = vld [vmem:[#allocation2 + $0xd0] sm:$0xff]
    %v73 = vld [vmem:[#allocation2 + $0xd8] sm:$0xff]
    %v74 = vld [vmem:[#allocation2 + $0xe0] sm:$0xff]
    %v75 = vld [vmem:[#allocation2 + $0xe8] sm:$0xff]
    %v76 = vld [vmem:[#allocation2 + $0xf0] sm:$0xff]
    %v77 = vld [vmem:[#allocation2 + $0xf8] sm:$0xff]
    %v78 = vld [vmem:[#allocation2 + $0x100] sm:$0xff]
    %v79 = vld [vmem:[#allocation2 + $0x108] sm:$0xff]
    %v80 = vld [vmem:[#allocation2 + $0x110] sm:$0xff]
    %v81 = vld [vmem:[#allocation2 + $0x118] sm:$0xff]
    %v82 = vld [vmem:[#allocation2 + $0x120] sm:$0xff]
    %v83 = vld [vmem:[#allocation2 + $0x128] sm:$0xff]
    %v84 = vld [vmem:[#allocation2 + $0x130] sm:$0xff]
    %v85 = vld [vmem:[#allocation2 + $0x138] sm:$0xff]
    %v86 = vld [vmem:[#allocation2 + $0x140] sm:$0xff]
    %v87 = vld [vmem:[#allocation2 + $0x148] sm:$0xff]
    %v88 = vld [vmem:[#allocation2 + $0x150] sm:$0xff]
    %v89 = vld [vmem:[#allocation2 + $0x158] sm:$0xff]
    %v90 = vld [vmem:[#allocation2 + $0x160] sm:$0xff]
    %v91 = vld [vmem:[#allocation2 + $0x168] sm:$0xff]
    %v92 = vld [vmem:[#allocation2 + $0x170] sm:$0xff]
    %v93 = vld [vmem:[#allocation2 + $0x178] sm:$0xff]
    %v94 = vld [vmem:[#allocation2 + $0x180] sm:$0xff]
    %v95 = vld [vmem:[#allocation2 + $0x188] sm:$0xff]
    %v96 = vld [vmem:[#allocation2 + $0x190] sm:$0xff]
    %v97 = vld [vmem:[#allocation2 + $0x198] sm:$0xff]
    %v98 = vld [vmem:[#allocation2 + $0x1a0] sm:$0xff]
    %v99 = vld [vmem:[#allocation2 + $0x1a8] sm:$0xff]
    %v100 = vld [vmem:[#allocation2 + $0x1b0] sm:$0xff]
    %v101 = vld [vmem:[#allocation2 + $0x1b8] sm:$0xff]
    %v102 = vld [vmem:[#allocation2 + $0x1c0] sm:$0xff]
    %v103 = vld [vmem:[#allocation2 + $0x1c8] sm:$0xff]
    %v104 = vld [vmem:[#allocation2 + $0x1d0] sm:$0xff]
    %v105 = vld [vmem:[#allocation2 + $0x1d8] sm:$0xff]
    %v106 = vld [vmem:[#allocation2 + $0x1e0] sm:$0xff]
    %v107 = vld [vmem:[#allocation2 + $0x1e8] sm:$0xff]
    %v108 = vld [vmem:[#allocation2 + $0x1f0] sm:$0xff]
    %v109 = vld [vmem:[#allocation2 + $0x1f8] sm:$0xff]
    %v110 = vld [vmem:[#allocation2 + $0x200] sm:$0xff]
    %v111 = vld [vmem:[#allocation2 + $0x208] sm:$0xff]
    %v112 = vld [vmem:[#allocation2 + $0x210] sm:$0xff]
    %v113 = vld [vmem:[#allocation2 + $0x218] sm:$0xff]
    %v114 = vld [vmem:[#allocation2 + $0x220] sm:$0xff]
    %v115 = vld [vmem:[#allocation2 + $0x228] sm:$0xff]
    %v116 = vld [vmem:[#allocation2 + $0x230] sm:$0xff]
    %v117 = vld [vmem:[#allocation2 + $0x238] sm:$0xff]
    %v118 = vld [vmem:[#allocation2 + $0x240] sm:$0xff]
    %v119 = vld [vmem:[#allocation2 + $0x248] sm:$0xff]
    %v120 = vld [vmem:[#allocation2 + $0x250] sm:$0xff]
    %v121 = vld [vmem:[#allocation2 + $0x258] sm:$0xff]
    %v122 = vld [vmem:[#allocation2 + $0x260] sm:$0xff]
    %v123 = vld [vmem:[#allocation2 + $0x268] sm:$0xff]
    %v124 = vld [vmem:[#allocation2 + $0x270] sm:$0xff]
    %v125 = vld [vmem:[#allocation2 + $0x278] sm:$0xff]
    %v126 = vld [vmem:[#allocation2 + $0x280] sm:$0xff]
    %v127 = vld [vmem:[#allocation2 + $0x288] sm:$0xff]
    %v128 = vld [vmem:[#allocation2 + $0x290] sm:$0xff]
    %v129 = vld [vmem:[#allocation2 + $0x298] sm:$0xff]
    %v130 = vld [vmem:[#allocation2 + $0x2a0] sm:$0xff]
    %v131 = vld [vmem:[#allocation2 + $0x2a8] sm:$0xff]
    %v132 = vld [vmem:[#allocation2 + $0x2b0] sm:$0xff]
    %v133 = vld [vmem:[#allocation2 + $0x2b8] sm:$0xff]
    %v134 = vld [vmem:[#allocation2 + $0x2c0] sm:$0xff]
    %v135 = vld [vmem:[#allocation2 + $0x2c8] sm:$0xff]
    %v136 = vld [vmem:[#allocation2 + $0x2d0] sm:$0xff]
    %v137 = vld [vmem:[#allocation2 + $0x2d8] sm:$0xff]
    %v138 = vld [vmem:[#allocation2 + $0x2e0] sm:$0xff]
    %v139 = vld [vmem:[#allocation2 + $0x2e8] sm:$0xff]
    %v140 = vld [vmem:[#allocation2 + $0x2f0] sm:$0xff]
    %v141 = vld [vmem:[#allocation2 + $0x2f8] sm:$0xff]
    %v142 = vld [vmem:[#allocation2 + $0x300] sm:$0xff]
    %v143 = vld [vmem:[#allocation2 + $0x308] sm:$0xff]
    %v144 = vld [vmem:[#allocation2 + $0x310] sm:$0xff]
    %v145 = vld [vmem:[#allocation2 + $0x318] sm:$0xff]
    %v146 = vld [vmem:[#allocation2 + $0x320] sm:$0xff]
    %v147 = vld [vmem:[#allocation2 + $0x328] sm:$0xff]
    %v148 = vld [vmem:[#allocation2 + $0x330] sm:$0xff]
    %v149 = vld [vmem:[#allocation2 + $0x338] sm:$0xff]
    %v150 = vld [vmem:[#allocation2 + $0x340] sm:$0xff]
    %v151 = vld [vmem:[#allocation2 + $0x348] sm:$0xff]
    %v152 = vld [vmem:[#allocation2 + $0x350] sm:$0xff]
    %v153 = vld [vmem:[#allocation2 + $0x358] sm:$0xff]
    %v154 = vld [vmem:[#allocation2 + $0x360] sm:$0xff]
    %v155 = vld [vmem:[#allocation2 + $0x368] sm:$0xff]
    %v156 = vld [vmem:[#allocation2 + $0x370] sm:$0xff]
    %v157 = vld [vmem:[#allocation2 + $0x378] sm:$0xff]
    %v158 = vld [vmem:[#allocation2 + $0x380] sm:$0xff]
    %v159 = vld [vmem:[#allocation2 + $0x388] sm:$0xff]
    %v160 = vld [vmem:[#allocation2 + $0x390] sm:$0xff]
    %v161 = vld [vmem:[#allocation2 + $0x398] sm:$0xff]
    %v162 = vld [vmem:[#allocation2 + $0x3a0] sm:$0xff]
    %v163 = vld [vmem:[#allocation2 + $0x3a8] sm:$0xff]
    %v164 = vld [vmem:[#allocation2 + $0x3b0] sm:$0xff]
    %v165 = vld [vmem:[#allocation2 + $0x3b8] sm:$0xff]
    %v166 = vld [vmem:[#allocation2 + $0x3c0] sm:$0xff]
    %v167 = vld [vmem:[#allocation2 + $0x3c8] sm:$0xff]
    %v168 = vld [vmem:[#allocation2 + $0x3d0] sm:$0xff]
    %v169 = vld [vmem:[#allocation2 + $0x3d8] sm:$0xff]
    %v170 = vld [vmem:[#allocation2 + $0x3e0] sm:$0xff]
    %v171 = vld [vmem:[#allocation2 + $0x3e8] sm:$0xff]
    %v172 = vld [vmem:[#allocation2 + $0x3f0] sm:$0xff]
    %v173 = vld [vmem:[#allocation2 + $0x3f8] sm:$0xff]
    %v174 = vld [vmem:[#allocation2 + $0x400] sm:$0xff]
    %v175 = vld [vmem:[#allocation2 + $0x408] sm:$0xff]
    %v176 = vld [vmem:[#allocation2 + $0x410] sm:$0xff]
    %v177 = vld [vmem:[#allocation2 + $0x418] sm:$0xff]
    %v178 = vld [vmem:[#allocation2 + $0x420] sm:$0xff]
    %v179 = vld [vmem:[#allocation2 + $0x428] sm:$0xff]
    %v180 = vld [vmem:[#allocation2 + $0x430] sm:$0xff]
    %v181 = vld [vmem:[#allocation2 + $0x438] sm:$0xff]
    %v182 = vld [vmem:[#allocation2 + $0x440] sm:$0xff]
    %v183 = vld [vmem:[#allocation2 + $0x448] sm:$0xff]
    %v184 = vld [vmem:[#allocation2 + $0x450] sm:$0xff]
    %v185 = vld [vmem:[#allocation2 + $0x458] sm:$0xff]
    %v186 = vld [vmem:[#allocation2 + $0x460] sm:$0xff]
    %v187 = vld [vmem:[#allocation2 + $0x468] sm:$0xff]
    %v188 = vld [vmem:[#allocation2 + $0x470] sm:$0xff]
    %v189 = vld [vmem:[#allocation2 + $0x478] sm:$0xff]
    %v190 = vld [vmem:[#allocation2 + $0x480] sm:$0xff]
    %v191 = vld [vmem:[#allocation2 + $0x488] sm:$0xff]
    %v192 = vld [vmem:[#allocation2 + $0x490] sm:$0xff]
    %v193 = vld [vmem:[#allocation2 + $0x498] sm:$0xff]
    %v194 = vld [vmem:[#allocation2 + $0x4a0] sm:$0xff]
    %v195 = vld [vmem:[#allocation2 + $0x4a8] sm:$0xff]
    %v196 = vld [vmem:[#allocation2 + $0x4b0] sm:$0xff]
    %v197 = vld [vmem:[#allocation2 + $0x4b8] sm:$0xff]
    %v198 = vld [vmem:[#allocation2 + $0x4c0] sm:$0xff]
    %v199 = vld [vmem:[#allocation2 + $0x4c8] sm:$0xff]
    %v200 = vld [vmem:[#allocation2 + $0x4d0] sm:$0xff]
    %v201 = vld [vmem:[#allocation2 + $0x4d8] sm:$0xff]
    %v202 = vld [vmem:[#allocation2 + $0x4e0] sm:$0xff]
    %v203 = vld [vmem:[#allocation2 + $0x4e8] sm:$0xff]
    %v204 = vld [vmem:[#allocation2 + $0x4f0] sm:$0xff]
    %v205 = vld [vmem:[#allocation2 + $0x4f8] sm:$0xff]
    %v206 = vld [vmem:[#allocation2 + $0x500] sm:$0xff]
    %v207 = vld [vmem:[#allocation2 + $0x508] sm:$0xff]
    %v208 = vld [vmem:[#allocation2 + $0x510] sm:$0xff]
    %v209 = vld [vmem:[#allocation2 + $0x518] sm:$0xff]
    %v210 = vld [vmem:[#allocation2 + $0x520] sm:$0xff]
    %v211 = vld [vmem:[#allocation2 + $0x528] sm:$0xff]
    %v212 = vld [vmem:[#allocation2 + $0x530] sm:$0xff]
    %v213 = vld [vmem:[#allocation2 + $0x538] sm:$0xff]
    %v214 = vld [vmem:[#allocation2 + $0x540] sm:$0xff]
    %v215 = vld [vmem:[#allocation2 + $0x548] sm:$0xff]
    %v216 = vld [vmem:[#allocation2 + $0x550] sm:$0xff]
    %v217 = vld [vmem:[#allocation2 + $0x558] sm:$0xff]
    %v218 = vld [vmem:[#allocation2 + $0x560] sm:$0xff]
    %v219 = vld [vmem:[#allocation2 + $0x568] sm:$0xff]
    %v220 = vld [vmem:[#allocation2 + $0x570] sm:$0xff]
    %v221 = vld [vmem:[#allocation2 + $0x578] sm:$0xff]
    %v222 = vld [vmem:[#allocation2 + $0x580] sm:$0xff]
    %v223 = vld [vmem:[#allocation2 + $0x588] sm:$0xff]
    %v224 = vld [vmem:[#allocation2 + $0x590] sm:$0xff]
    %v225 = vld [vmem:[#allocation2 + $0x598] sm:$0xff]
    %v226 = vld [vmem:[#allocation2 + $0x5a0] sm:$0xff]
    %v227 = vld [vmem:[#allocation2 + $0x5a8] sm:$0xff]
    %v228 = vld [vmem:[#allocation2 + $0x5b0] sm:$0xff]
    %v229 = vld [vmem:[#allocation2 + $0x5b8] sm:$0xff]
    %v230 = vld [vmem:[#allocation2 + $0x5c0] sm:$0xff]
    %v231 = vld [vmem:[#allocation2 + $0x5c8] sm:$0xff]
    %v232 = vld [vmem:[#allocation2 + $0x5d0] sm:$0xff]
    %v233 = vld [vmem:[#allocation2 + $0x5d8] sm:$0xff]
    %v234 = vld [vmem:[#allocation2 + $0x5e0] sm:$0xff]
    %v235 = vld [vmem:[#allocation2 + $0x5e8] sm:$0xff]
    %v236 = vld [vmem:[#allocation2 + $0x5f0] sm:$0xff]
    %v237 = vld [vmem:[#allocation2 + $0x5f8] sm:$0xff]
    %v238 = vld [vmem:[#allocation2 + $0x600] sm:$0xff]
    %v239 = vld [vmem:[#allocation2 + $0x608] sm:$0xff]
    %v240 = vld [vmem:[#allocation2 + $0x610] sm:$0xff]
    %v241 = vld [vmem:[#allocation2 + $0x618] sm:$0xff]
    %v242 = vld [vmem:[#allocation2 + $0x620] sm:$0xff]
    %v243 = vld [vmem:[#allocation2 + $0x628] sm:$0xff]
    %v244 = vld [vmem:[#allocation2 + $0x630] sm:$0xff]
    %v245 = vld [vmem:[#allocation2 + $0x638] sm:$0xff]
    %v246 = vld [vmem:[#allocation2 + $0x640] sm:$0xff]
    %v247 = vld [vmem:[#allocation2 + $0x648] sm:$0xff]
    %v248 = vld [vmem:[#allocation2 + $0x650] sm:$0xff]
    %v249 = vld [vmem:[#allocation2 + $0x658] sm:$0xff]
    %v250 = vld [vmem:[#allocation2 + $0x660] sm:$0xff]
    %v251 = vld [vmem:[#allocation2 + $0x668] sm:$0xff]
    %v252 = vld [vmem:[#allocation2 + $0x670] sm:$0xff]
    %v253 = vld [vmem:[#allocation2 + $0x678] sm:$0xff]
    %v254 = vld [vmem:[#allocation2 + $0x680] sm:$0xff]
    %v255 = vld [vmem:[#allocation2 + $0x688] sm:$0xff]
    %v256 = vld [vmem:[#allocation2 + $0x690] sm:$0xff]
    %v257 = vld [vmem:[#allocation2 + $0x698] sm:$0xff]
    %v258 = vld [vmem:[#allocation2 + $0x6a0] sm:$0xff]
    %v259 = vld [vmem:[#allocation2 + $0x6a8] sm:$0xff]
    %v260 = vld [vmem:[#allocation2 + $0x6b0] sm:$0xff]
    %v261 = vld [vmem:[#allocation2 + $0x6b8] sm:$0xff]
    %v262 = vld [vmem:[#allocation2 + $0x6c0] sm:$0xff]
    %v263 = vld [vmem:[#allocation2 + $0x6c8] sm:$0xff]
    %v264 = vld [vmem:[#allocation2 + $0x6d0] sm:$0xff]
    %v265 = vld [vmem:[#allocation2 + $0x6d8] sm:$0xff]
    %v266 = vld [vmem:[#allocation2 + $0x6e0] sm:$0xff]
    %v267 = vld [vmem:[#allocation2 + $0x6e8] sm:$0xff]
    %v268 = vld [vmem:[#allocation2 + $0x6f0] sm:$0xff]
    %v269 = vld [vmem:[#allocation2 + $0x6f8] sm:$0xff]
    %v270 = vld [vmem:[#allocation2 + $0x700] sm:$0xff]
    %v271 = vld [vmem:[#allocation2 + $0x708] sm:$0xff]
    %v272 = vld [vmem:[#allocation2 + $0x710] sm:$0xff]
    %v273 = vld [vmem:[#allocation2 + $0x718] sm:$0xff]
    %v274 = vld [vmem:[#allocation2 + $0x720] sm:$0xff]
    %v275 = vld [vmem:[#allocation2 + $0x728] sm:$0xff]
    %v276 = vld [vmem:[#allocation2 + $0x730] sm:$0xff]
    %v277 = vld [vmem:[#allocation2 + $0x738] sm:$0xff]
    %v278 = vld [vmem:[#allocation2 + $0x740] sm:$0xff]
    %v279 = vld [vmem:[#allocation2 + $0x748] sm:$0xff]
    %v280 = vld [vmem:[#allocation2 + $0x750] sm:$0xff]
    %v281 = vld [vmem:[#allocation2 + $0x758] sm:$0xff]
    %v282 = vld [vmem:[#allocation2 + $0x760] sm:$0xff]
    %v283 = vld [vmem:[#allocation2 + $0x768] sm:$0xff]
    %v284 = vld [vmem:[#allocation2 + $0x770] sm:$0xff]
    %v285 = vld [vmem:[#allocation2 + $0x778] sm:$0xff]
    %v286 = vld [vmem:[#allocation2 + $0x780] sm:$0xff]
    %v287 = vld [vmem:[#allocation2 + $0x788] sm:$0xff]
    %v288 = vld [vmem:[#allocation2 + $0x790] sm:$0xff]
    %v289 = vld [vmem:[#allocation2 + $0x798] sm:$0xff]
    %v290 = vld [vmem:[#allocation2 + $0x7a0] sm:$0xff]
    %v291 = vld [vmem:[#allocation2 + $0x7a8] sm:$0xff]
    %v292 = vld [vmem:[#allocation2 + $0x7b0] sm:$0xff]
    %v293 = vld [vmem:[#allocation2 + $0x7b8] sm:$0xff]
    %v294 = vld [vmem:[#allocation2 + $0x7c0] sm:$0xff]
    %v295 = vld [vmem:[#allocation2 + $0x7c8] sm:$0xff]
    %v296 = vld [vmem:[#allocation2 + $0x7d0] sm:$0xff]
    %v297 = vld [vmem:[#allocation2 + $0x7d8] sm:$0xff]
    %v298 = vld [vmem:[#allocation2 + $0x7e0] sm:$0xff]
    %v299 = vld [vmem:[#allocation2 + $0x7e8] sm:$0xff]
    %v300 = vld [vmem:[#allocation2 + $0x7f0] sm:$0xff]
    %v301 = vld [vmem:[#allocation2 + $0x7f8] sm:$0xff]
    %v302 = vld [vmem:[#allocation5] sm:$0xff]
    %v303 = vld [vmem:[#allocation5 + $0x8] sm:$0xff]
    %v304 = vld [vmem:[#allocation5 + $0x10] sm:$0xff]
    %v305 = vld [vmem:[#allocation5 + $0x18] sm:$0xff]
    %v306 = vld [vmem:[#allocation5 + $0x20] sm:$0xff]
    %v307 = vld [vmem:[#allocation5 + $0x28] sm:$0xff]
    %v308 = vld [vmem:[#allocation5 + $0x30] sm:$0xff]
    %v309 = vld [vmem:[#allocation5 + $0x38] sm:$0xff]
    %v310 = vld [vmem:[#allocation5 + $0x40] sm:$0xff]
    %v311 = vld [vmem:[#allocation5 + $0x48] sm:$0xff]
    %v312 = vld [vmem:[#allocation5 + $0x50] sm:$0xff]
    %v313 = vld [vmem:[#allocation5 + $0x58] sm:$0xff]
    %v314 = vld [vmem:[#allocation5 + $0x60] sm:$0xff]
    %v315 = vld [vmem:[#allocation5 + $0x68] sm:$0xff]
    %v316 = vld [vmem:[#allocation5 + $0x70] sm:$0xff]
    %v317 = vld [vmem:[#allocation5 + $0x78] sm:$0xff]
    %v318 = vld [vmem:[%s2] sm:$0x1]
    %v320 = vlaneseq
    %v321 = vshrl.u32 %v320, 7
    %v322 = vsub.s32 0, %v321
    %v323 = vrot.slane %v318, %v322
    %325 = vmatprep.subr.mxu0 0.0
    %326 = vmatpush1.msra.mxu0 %v302
    %327 = vmatprep.subr.mxu0 0.0
    %328 = vmatpush1.msra.mxu0 %v303
    %329 = vmatprep.subr.mxu0 0.0
    %330 = vmatpush1.msra.mxu0 %v304
    %331 = vmatprep.subr.mxu0 0.0
    %332 = vmatpush1.msra.mxu0 %v305
    %333 = vmatprep.subr.mxu0 0.0
    %334 = vmatpush1.msra.mxu0 %v306
    %335 = vmatprep.subr.mxu0 0.0
    %336 = vmatpush1.msra.mxu0 %v307
    %337 = vmatprep.subr.mxu0 0.0
    %338 = vmatpush1.msra.mxu0 %v308
    %339 = vmatprep.subr.mxu0 0.0
    %340 = vmatpush1.msra.mxu0 %v309
    %341 = vmatprep.subr.mxu0 0.0
    %342 = vmatpush1.msra.mxu0 %v310
    %343 = vmatprep.subr.mxu0 0.0
    %344 = vmatpush1.msra.mxu0 %v311
    %345 = vmatprep.subr.mxu0 0.0
    %346 = vmatpush1.msra.mxu0 %v312
    %347 = vmatprep.subr.mxu0 0.0
    %348 = vmatpush1.msra.mxu0 %v313
    %349 = vmatprep.subr.mxu0 0.0
    %350 = vmatpush1.msra.mxu0 %v314
    %351 = vmatprep.subr.mxu0 0.0
    %352 = vmatpush1.msra.mxu0 %v315
    %353 = vmatprep.subr.mxu0 0.0
    %354 = vmatpush1.msra.mxu0 %v316
    %355 = vmatprep.subr.mxu0 0.0
    %356 = vmatpush1.msra.mxu0 %v317
    %357 = vmatprep.subr.mxu0 0.0
    %358 = vmatpush1.msra.mxu0 0.0
    %359 = vmatprep.subr.mxu0 0.0
    %360 = vmatpush1.msra.mxu0 0.0
    %361 = vmatprep.subr.mxu0 0.0
    %362 = vmatpush1.msra.mxu0 0.0
    %363 = vmatprep.subr.mxu0 0.0
    %364 = vmatpush1.msra.mxu0 0.0
    %365 = vmatprep.subr.mxu0 0.0
    %366 = vmatpush1.msra.mxu0 0.0
    %367 = vmatprep.subr.mxu0 0.0
    %368 = vmatpush1.msra.mxu0 0.0
    %369 = vmatprep.subr.mxu0 0.0
    %370 = vmatpush1.msra.mxu0 0.0
    %371 = vmatprep.subr.mxu0 0.0
    %372 = vmatpush1.msra.mxu0 0.0
    %373 = vmatprep.subr.mxu0 0.0
    %374 = vmatpush1.msra.mxu0 0.0
    %375 = vmatprep.subr.mxu0 0.0
    %376 = vmatpush1.msra.mxu0 0.0
    %377 = vmatprep.subr.mxu0 0.0
    %378 = vmatpush1.msra.mxu0 0.0
    %379 = vmatprep.subr.mxu0 0.0
    %380 = vmatpush1.msra.mxu0 0.0
    %381 = vmatprep.subr.mxu0 0.0
    %382 = vmatpush1.msra.mxu0 0.0
    %383 = vmatprep.subr.mxu0 0.0
    %384 = vmatpush1.msra.mxu0 0.0
    %385 = vmatprep.subr.mxu0 0.0
    %386 = vmatpush1.msra.mxu0 0.0
    %387 = vmatprep.subr.mxu0 0.0
    %388 = vmatpush1.msra.mxu0 0.0
    %389 = vmatprep.mubr.f32.mxu0 0.0
    %390 = vmatmul.mubr.f32.gmra.mrb[0].mxu0 %v46
    %v391 = vpop.f32.mrb[0].mxu0
    %v392 = vadd.f32 %v323, %v391
    %v393 = vpop.f32.mrb[0].mxu0
    %394 = vmatprep.mubr.f32.mxu0 0.0
    %395 = vmatmul.mubr.f32.gmra.mrb[0].mxu0 %v47
    %v396 = vpop.f32.mrb[0].mxu0
    %v397 = vadd.f32 %v323, %v396
    %v398 = vpop.f32.mrb[0].mxu0
    %399 = vmatprep.mubr.f32.mxu0 0.0
    %400 = vmatmul.mubr.f32.gmra.mrb[0].mxu0 %v48
    %v401 = vpop.f32.mrb[0].mxu0
    %v402 = vadd.f32 %v323, %v401
    %v403 = vpop.f32.mrb[0].mxu0
    %404 = vmatprep.mubr.f32.mxu0 0.0
    %405 = vmatmul.mubr.f32.gmra.mrb[0].mxu0 %v49
    %v406 = vpop.f32.mrb[0].mxu0
    %v407 = vadd.f32 %v323, %v406
    %v408 = vpop.f32.mrb[0].mxu0
    %409 = vmatprep.mubr.f32.mxu0 0.0
    %410 = vmatmul.mubr.f32.gmra.mrb[0].mxu0 %v50
    %v411 = vpop.f32.mrb[0].mxu0
    %v412 = vadd.f32 %v323, %v411
    %v413 = vpop.f32.mrb[0].mxu0
    %414 = vmatprep.mubr.f32.mxu0 0.0
    %415 = vmatmul.mubr.f32.gmra.mrb[0].mxu0 %v51
    %v416 = vpop.f32.mrb[0].mxu0
    %v417 = vadd.f32 %v323, %v416
    %v418 = vpop.f32.mrb[0].mxu0
    %419 = vmatprep.mubr.f32.mxu0 0.0
    %420 = vmatmul.mubr.f32.gmra.mrb[0].mxu0 %v52
    %v421 = vpop.f32.mrb[0].mxu0
    %v422 = vadd.f32 %v323, %v421
    %v423 = vpop.f32.mrb[0].mxu0
    %424 = vmatprep.mubr.f32.mxu0 0.0
    %425 = vmatmul.mubr.f32.gmra.mrb[0].mxu0 %v53
    %v426 = vpop.f32.mrb[0].mxu0
    %v427 = vadd.f32 %v323, %v426
    %v428 = vpop.f32.mrb[0].mxu0
    %429 = vmatprep.mubr.f32.mxu0 0.0
    %430 = vmatmul.mubr.f32.gmra.mrb[0].mxu0 %v54
    %v431 = vpop.f32.mrb[0].mxu0
    %v432 = vadd.f32 %v323, %v431
    %v433 = vpop.f32.mrb[0].mxu0
    %434 = vmatprep.mubr.f32.mxu0 0.0
    %435 = vmatmul.mubr.f32.gmra.mrb[0].mxu0 %v55
    %v436 = vpop.f32.mrb[0].mxu0
    %v437 = vadd.f32 %v323, %v436
    %v438 = vpop.f32.mrb[0].mxu0
    %439 = vmatprep.mubr.f32.mxu0 0.0
    %440 = vmatmul.mubr.f32.gmra.mrb[0].mxu0 %v56
    %v441 = vpop.f32.mrb[0].mxu0
    %v442 = vadd.f32 %v323, %v441
    %v443 = vpop.f32.mrb[0].mxu0
    %444 = vmatprep.mubr.f32.mxu0 0.0
    %445 = vmatmul.mubr.f32.gmra.mrb[0].mxu0 %v57
    %v446 = vpop.f32.mrb[0].mxu0
    %v447 = vadd.f32 %v323, %v446
    %v448 = vpop.f32.mrb[0].mxu0
    %449 = vmatprep.mubr.f32.mxu0 0.0
    %450 = vmatmul.mubr.f32.gmra.mrb[0].mxu0 %v58
    %v451 = vpop.f32.mrb[0].mxu0
    %v452 = vadd.f32 %v323, %v451
    %v453 = vpop.f32.mrb[0].mxu0
    %454 = vmatprep.mubr.f32.mxu0 0.0
    %455 = vmatmul.mubr.f32.gmra.mrb[0].mxu0 %v59
    %v456 = vpop.f32.mrb[0].mxu0
    %v457 = vadd.f32 %v323, %v456
    %v458 = vpop.f32.mrb[0].mxu0
    %459 = vmatprep.mubr.f32.mxu0 0.0
    %460 = vmatmul.mubr.f32.gmra.mrb[0].mxu0 %v60
    %v461 = vpop.f32.mrb[0].mxu0
    %v462 = vadd.f32 %v323, %v461
    %v463 = vpop.f32.mrb[0].mxu0
    %464 = vmatprep.mubr.f32.mxu0 0.0
    %465 = vmatmul.mubr.f32.gmra.mrb[0].mxu0 %v61
    %v466 = vpop.f32.mrb[0].mxu0
    %v467 = vadd.f32 %v323, %v466
    %v468 = vpop.f32.mrb[0].mxu0
    %469 = vmatprep.mubr.f32.mxu0 0.0
    %470 = vmatmul.mubr.f32.gmra.mrb[0].mxu0 %v62
    %v471 = vpop.f32.mrb[0].mxu0
    %v472 = vadd.f32 %v323, %v471
    %v473 = vpop.f32.mrb[0].mxu0
    %474 = vmatprep.mubr.f32.mxu0 0.0
    %475 = vmatmul.mubr.f32.gmra.mrb[0].mxu0 %v63
    %v476 = vpop.f32.mrb[0].mxu0
    %v477 = vadd.f32 %v323, %v476
    %v478 = vpop.f32.mrb[0].mxu0
    %479 = vmatprep.mubr.f32.mxu0 0.0
    %480 = vmatmul.mubr.f32.gmra.mrb[0].mxu0 %v64
    %v481 = vpop.f32.mrb[0].mxu0
    %v482 = vadd.f32 %v323, %v481
    %v483 = vpop.f32.mrb[0].mxu0
    %484 = vmatprep.mubr.f32.mxu0 0.0
    %485 = vmatmul.mubr.f32.gmra.mrb[0].mxu0 %v65
    %v486 = vpop.f32.mrb[0].mxu0
    %v487 = vadd.f32 %v323, %v486
    %v488 = vpop.f32.mrb[0].mxu0
    %489 = vmatprep.mubr.f32.mxu0 0.0
    %490 = vmatmul.mubr.f32.gmra.mrb[0].mxu0 %v66
    %v491 = vpop.f32.mrb[0].mxu0
    %v492 = vadd.f32 %v323, %v491
    %v493 = vpop.f32.mrb[0].mxu0
    %494 = vmatprep.mubr.f32.mxu0 0.0
    %495 = vmatmul.mubr.f32.gmra.mrb[0].mxu0 %v67
    %v496 = vpop.f32.mrb[0].mxu0
    %v497 = vadd.f32 %v323, %v496
    %v498 = vpop.f32.mrb[0].mxu0
    %499 = vmatprep.mubr.f32.mxu0 0.0
    %500 = vmatmul.mubr.f32.gmra.mrb[0].mxu0 %v68
    %v501 = vpop.f32.mrb[0].mxu0
    %v502 = vadd.f32 %v323, %v501
    %v503 = vpop.f32.mrb[0].mxu0
    %504 = vmatprep.mubr.f32.mxu0 0.0
    %505 = vmatmul.mubr.f32.gmra.mrb[0].mxu0 %v69
    %v506 = vpop.f32.mrb[0].mxu0
    %v507 = vadd.f32 %v323, %v506
    %v508 = vpop.f32.mrb[0].mxu0
    %509 = vmatprep.mubr.f32.mxu0 0.0
    %510 = vmatmul.mubr.f32.gmra.mrb[0].mxu0 %v70
    %v511 = vpop.f32.mrb[0].mxu0
    %v512 = vadd.f32 %v323, %v511
    %v513 = vpop.f32.mrb[0].mxu0
    %514 = vmatprep.mubr.f32.mxu0 0.0
    %515 = vmatmul.mubr.f32.gmra.mrb[0].mxu0 %v71
    %v516 = vpop.f32.mrb[0].mxu0
    %v517 = vadd.f32 %v323, %v516
    %v518 = vpop.f32.mrb[0].mxu0
    %519 = vmatprep.mubr.f32.mxu0 0.0
    %520 = vmatmul.mubr.f32.gmra.mrb[0].mxu0 %v72
    %v521 = vpop.f32.mrb[0].mxu0
    %v522 = vadd.f32 %v323, %v521
    %v523 = vpop.f32.mrb[0].mxu0
    %524 = vmatprep.mubr.f32.mxu0 0.0
    %525 = vmatmul.mubr.f32.gmra.mrb[0].mxu0 %v73
    %v526 = vpop.f32.mrb[0].mxu0
    %v527 = vadd.f32 %v323, %v526
    %v528 = vpop.f32.mrb[0].mxu0
    %529 = vmatprep.mubr.f32.mxu0 0.0
    %530 = vmatmul.mubr.f32.gmra.mrb[0].mxu0 %v74
    %v531 = vpop.f32.mrb[0].mxu0
    %v532 = vadd.f32 %v323, %v531
    %v533 = vpop.f32.mrb[0].mxu0
    %534 = vmatprep.mubr.f32.mxu0 0.0
    %535 = vmatmul.mubr.f32.gmra.mrb[0].mxu0 %v75
    %v536 = vpop.f32.mrb[0].mxu0
    %v537 = vadd.f32 %v323, %v536
    %v538 = vpop.f32.mrb[0].mxu0
    %539 = vmatprep.mubr.f32.mxu0 0.0
    %540 = vmatmul.mubr.f32.gmra.mrb[0].mxu0 %v76
    %v541 = vpop.f32.mrb[0].mxu0
    %v542 = vadd.f32 %v323, %v541
    %v543 = vpop.f32.mrb[0].mxu0
    %544 = vmatprep.mubr.f32.mxu0 0.0
    %545 = vmatmul.mubr.f32.gmra.mrb[0].mxu0 %v77
    %v546 = vpop.f32.mrb[0].mxu0
    %v547 = vadd.f32 %v323, %v546
    %v548 = vpop.f32.mrb[0].mxu0
    %549 = vmatprep.mubr.f32.mxu0 0.0
    %550 = vmatmul.mubr.f32.gmra.mrb[0].mxu0 %v78
    %v551 = vpop.f32.mrb[0].mxu0
    %v552 = vadd.f32 %v323, %v551
    %v553 = vpop.f32.mrb[0].mxu0
    %554 = vmatprep.mubr.f32.mxu0 0.0
    %555 = vmatmul.mubr.f32.gmra.mrb[0].mxu0 %v79
    %v556 = vpop.f32.mrb[0].mxu0
    %v557 = vadd.f32 %v323, %v556
    %v558 = vpop.f32.mrb[0].mxu0
    %559 = vmatprep.mubr.f32.mxu0 0.0
    %560 = vmatmul.mubr.f32.gmra.mrb[0].mxu0 %v80
    %v561 = vpop.f32.mrb[0].mxu0
    %v562 = vadd.f32 %v323, %v561
    %v563 = vpop.f32.mrb[0].mxu0
    %564 = vmatprep.mubr.f32.mxu0 0.0
    %565 = vmatmul.mubr.f32.gmra.mrb[0].mxu0 %v81
    %v566 = vpop.f32.mrb[0].mxu0
    %v567 = vadd.f32 %v323, %v566
    %v568 = vpop.f32.mrb[0].mxu0
    %569 = vmatprep.mubr.f32.mxu0 0.0
    %570 = vmatmul.mubr.f32.gmra.mrb[0].mxu0 %v82
    %v571 = vpop.f32.mrb[0].mxu0
    %v572 = vadd.f32 %v323, %v571
    %v573 = vpop.f32.mrb[0].mxu0
    %574 = vmatprep.mubr.f32.mxu0 0.0
    %575 = vmatmul.mubr.f32.gmra.mrb[0].mxu0 %v83
    %v576 = vpop.f32.mrb[0].mxu0
    %v577 = vadd.f32 %v323, %v576
    %v578 = vpop.f32.mrb[0].mxu0
    %579 = vmatprep.mubr.f32.mxu0 0.0
    %580 = vmatmul.mubr.f32.gmra.mrb[0].mxu0 %v84
    %v581 = vpop.f32.mrb[0].mxu0
    %v582 = vadd.f32 %v323, %v581
    %v583 = vpop.f32.mrb[0].mxu0
    %584 = vmatprep.mubr.f32.mxu0 0.0
    %585 = vmatmul.mubr.f32.gmra.mrb[0].mxu0 %v85
    %v586 = vpop.f32.mrb[0].mxu0
    %v587 = vadd.f32 %v323, %v586
    %v588 = vpop.f32.mrb[0].mxu0
    %589 = vmatprep.mubr.f32.mxu0 0.0
    %590 = vmatmul.mubr.f32.gmra.mrb[0].mxu0 %v86
    %v591 = vpop.f32.mrb[0].mxu0
    %v592 = vadd.f32 %v323, %v591
    %v593 = vpop.f32.mrb[0].mxu0
    %594 = vmatprep.mubr.f32.mxu0 0.0
    %595 = vmatmul.mubr.f32.gmra.mrb[0].mxu0 %v87
    %v596 = vpop.f32.mrb[0].mxu0
    %v597 = vadd.f32 %v323, %v596
    %v598 = vpop.f32.mrb[0].mxu0
    %599 = vmatprep.mubr.f32.mxu0 0.0
    %600 = vmatmul.mubr.f32.gmra.mrb[0].mxu0 %v88
    %v601 = vpop.f32.mrb[0].mxu0
    %v602 = vadd.f32 %v323, %v601
    %v603 = vpop.f32.mrb[0].mxu0
    %604 = vmatprep.mubr.f32.mxu0 0.0
    %605 = vmatmul.mubr.f32.gmra.mrb[0].mxu0 %v89
    %v606 = vpop.f32.mrb[0].mxu0
    %v607 = vadd.f32 %v323, %v606
    %v608 = vpop.f32.mrb[0].mxu0
    %609 = vmatprep.mubr.f32.mxu0 0.0
    %610 = vmatmul.mubr.f32.gmra.mrb[0].mxu0 %v90
    %v611 = vpop.f32.mrb[0].mxu0
    %v612 = vadd.f32 %v323, %v611
    %v613 = vpop.f32.mrb[0].mxu0
    %614 = vmatprep.mubr.f32.mxu0 0.0
    %615 = vmatmul.mubr.f32.gmra.mrb[0].mxu0 %v91
    %v616 = vpop.f32.mrb[0].mxu0
    %v617 = vadd.f32 %v323, %v616
    %v618 = vpop.f32.mrb[0].mxu0
    %619 = vmatprep.mubr.f32.mxu0 0.0
    %620 = vmatmul.mubr.f32.gmra.mrb[0].mxu0 %v92
    %v621 = vpop.f32.mrb[0].mxu0
    %v622 = vadd.f32 %v323, %v621
    %v623 = vpop.f32.mrb[0].mxu0
    %624 = vmatprep.mubr.f32.mxu0 0.0
    %625 = vmatmul.mubr.f32.gmra.mrb[0].mxu0 %v93
    %v626 = vpop.f32.mrb[0].mxu0
    %v627 = vadd.f32 %v323, %v626
    %v628 = vpop.f32.mrb[0].mxu0
    %629 = vmatprep.mubr.f32.mxu0 0.0
    %630 = vmatmul.mubr.f32.gmra.mrb[0].mxu0 %v94
    %v631 = vpop.f32.mrb[0].mxu0
    %v632 = vadd.f32 %v323, %v631
    %v633 = vpop.f32.mrb[0].mxu0
    %634 = vmatprep.mubr.f32.mxu0 0.0
    %635 = vmatmul.mubr.f32.gmra.mrb[0].mxu0 %v95
    %v636 = vpop.f32.mrb[0].mxu0
    %v637 = vadd.f32 %v323, %v636
    %v638 = vpop.f32.mrb[0].mxu0
    %639 = vmatprep.mubr.f32.mxu0 0.0
    %640 = vmatmul.mubr.f32.gmra.mrb[0].mxu0 %v96
    %v641 = vpop.f32.mrb[0].mxu0
    %v642 = vadd.f32 %v323, %v641
    %v643 = vpop.f32.mrb[0].mxu0
    %644 = vmatprep.mubr.f32.mxu0 0.0
    %645 = vmatmul.mubr.f32.gmra.mrb[0].mxu0 %v97
    %v646 = vpop.f32.mrb[0].mxu0
    %v647 = vadd.f32 %v323, %v646
    %v648 = vpop.f32.mrb[0].mxu0
    %649 = vmatprep.mubr.f32.mxu0 0.0
    %650 = vmatmul.mubr.f32.gmra.mrb[0].mxu0 %v98
    %v651 = vpop.f32.mrb[0].mxu0
    %v652 = vadd.f32 %v323, %v651
    %v653 = vpop.f32.mrb[0].mxu0
    %654 = vmatprep.mubr.f32.mxu0 0.0
    %655 = vmatmul.mubr.f32.gmra.mrb[0].mxu0 %v99
    %v656 = vpop.f32.mrb[0].mxu0
    %v657 = vadd.f32 %v323, %v656
    %v658 = vpop.f32.mrb[0].mxu0
    %659 = vmatprep.mubr.f32.mxu0 0.0
    %660 = vmatmul.mubr.f32.gmra.mrb[0].mxu0 %v100
    %v661 = vpop.f32.mrb[0].mxu0
    %v662 = vadd.f32 %v323, %v661
    %v663 = vpop.f32.mrb[0].mxu0
    %664 = vmatprep.mubr.f32.mxu0 0.0
    %665 = vmatmul.mubr.f32.gmra.mrb[0].mxu0 %v101
    %v666 = vpop.f32.mrb[0].mxu0
    %v667 = vadd.f32 %v323, %v666
    %v668 = vpop.f32.mrb[0].mxu0
    %669 = vmatprep.mubr.f32.mxu0 0.0
    %670 = vmatmul.mubr.f32.gmra.mrb[0].mxu0 %v102
    %v671 = vpop.f32.mrb[0].mxu0
    %v672 = vadd.f32 %v323, %v671
    %v673 = vpop.f32.mrb[0].mxu0
    %674 = vmatprep.mubr.f32.mxu0 0.0
    %675 = vmatmul.mubr.f32.gmra.mrb[0].mxu0 %v103
    %v676 = vpop.f32.mrb[0].mxu0
    %v677 = vadd.f32 %v323, %v676
    %v678 = vpop.f32.mrb[0].mxu0
    %679 = vmatprep.mubr.f32.mxu0 0.0
    %680 = vmatmul.mubr.f32.gmra.mrb[0].mxu0 %v104
    %v681 = vpop.f32.mrb[0].mxu0
    %v682 = vadd.f32 %v323, %v681
    %v683 = vpop.f32.mrb[0].mxu0
    %684 = vmatprep.mubr.f32.mxu0 0.0
    %685 = vmatmul.mubr.f32.gmra.mrb[0].mxu0 %v105
    %v686 = vpop.f32.mrb[0].mxu0
    %v687 = vadd.f32 %v323, %v686
    %v688 = vpop.f32.mrb[0].mxu0
    %689 = vmatprep.mubr.f32.mxu0 0.0
    %690 = vmatmul.mubr.f32.gmra.mrb[0].mxu0 %v106
    %v691 = vpop.f32.mrb[0].mxu0
    %v692 = vadd.f32 %v323, %v691
    %v693 = vpop.f32.mrb[0].mxu0
    %694 = vmatprep.mubr.f32.mxu0 0.0
    %695 = vmatmul.mubr.f32.gmra.mrb[0].mxu0 %v107
    %v696 = vpop.f32.mrb[0].mxu0
    %v697 = vadd.f32 %v323, %v696
    %v698 = vpop.f32.mrb[0].mxu0
    %699 = vmatprep.mubr.f32.mxu0 0.0
    %700 = vmatmul.mubr.f32.gmra.mrb[0].mxu0 %v108
    %v701 = vpop.f32.mrb[0].mxu0
    %v702 = vadd.f32 %v323, %v701
    %v703 = vpop.f32.mrb[0].mxu0
    %704 = vmatprep.mubr.f32.mxu0 0.0
    %705 = vmatmul.mubr.f32.gmra.mrb[0].mxu0 %v109
    %v706 = vpop.f32.mrb[0].mxu0
    %v707 = vadd.f32 %v323, %v706
    %v708 = vpop.f32.mrb[0].mxu0
    %709 = vmatprep.mubr.f32.mxu0 0.0
    %710 = vmatmul.mubr.f32.gmra.mrb[0].mxu0 %v110
    %v711 = vpop.f32.mrb[0].mxu0
    %v712 = vadd.f32 %v323, %v711
    %v713 = vpop.f32.mrb[0].mxu0
    %714 = vmatprep.mubr.f32.mxu0 0.0
    %715 = vmatmul.mubr.f32.gmra.mrb[0].mxu0 %v111
    %v716 = vpop.f32.mrb[0].mxu0
    %v717 = vadd.f32 %v323, %v716
    %v718 = vpop.f32.mrb[0].mxu0
    %719 = vmatprep.mubr.f32.mxu0 0.0
    %720 = vmatmul.mubr.f32.gmra.mrb[0].mxu0 %v112
    %v721 = vpop.f32.mrb[0].mxu0
    %v722 = vadd.f32 %v323, %v721
    %v723 = vpop.f32.mrb[0].mxu0
    %724 = vmatprep.mubr.f32.mxu0 0.0
    %725 = vmatmul.mubr.f32.gmra.mrb[0].mxu0 %v113
    %v726 = vpop.f32.mrb[0].mxu0
    %v727 = vadd.f32 %v323, %v726
    %v728 = vpop.f32.mrb[0].mxu0
    %729 = vmatprep.mubr.f32.mxu0 0.0
    %730 = vmatmul.mubr.f32.gmra.mrb[0].mxu0 %v114
    %v731 = vpop.f32.mrb[0].mxu0
    %v732 = vadd.f32 %v323, %v731
    %v733 = vpop.f32.mrb[0].mxu0
    %734 = vmatprep.mubr.f32.mxu0 0.0
    %735 = vmatmul.mubr.f32.gmra.mrb[0].mxu0 %v115
    %v736 = vpop.f32.mrb[0].mxu0
    %v737 = vadd.f32 %v323, %v736
    %v738 = vpop.f32.mrb[0].mxu0
    %739 = vmatprep.mubr.f32.mxu0 0.0
    %740 = vmatmul.mubr.f32.gmra.mrb[0].mxu0 %v116
    %v741 = vpop.f32.mrb[0].mxu0
    %v742 = vadd.f32 %v323, %v741
    %v743 = vpop.f32.mrb[0].mxu0
    %744 = vmatprep.mubr.f32.mxu0 0.0
    %745 = vmatmul.mubr.f32.gmra.mrb[0].mxu0 %v117
    %v746 = vpop.f32.mrb[0].mxu0
    %v747 = vadd.f32 %v323, %v746
    %v748 = vpop.f32.mrb[0].mxu0
    %749 = vmatprep.mubr.f32.mxu0 0.0
    %750 = vmatmul.mubr.f32.gmra.mrb[0].mxu0 %v118
    %v751 = vpop.f32.mrb[0].mxu0
    %v752 = vadd.f32 %v323, %v751
    %v753 = vpop.f32.mrb[0].mxu0
    %754 = vmatprep.mubr.f32.mxu0 0.0
    %755 = vmatmul.mubr.f32.gmra.mrb[0].mxu0 %v119
    %v756 = vpop.f32.mrb[0].mxu0
    %v757 = vadd.f32 %v323, %v756
    %v758 = vpop.f32.mrb[0].mxu0
    %759 = vmatprep.mubr.f32.mxu0 0.0
    %760 = vmatmul.mubr.f32.gmra.mrb[0].mxu0 %v120
    %v761 = vpop.f32.mrb[0].mxu0
    %v762 = vadd.f32 %v323, %v761
    %v763 = vpop.f32.mrb[0].mxu0
    %764 = vmatprep.mubr.f32.mxu0 0.0
    %765 = vmatmul.mubr.f32.gmra.mrb[0].mxu0 %v121
    %v766 = vpop.f32.mrb[0].mxu0
    %v767 = vadd.f32 %v323, %v766
    %v768 = vpop.f32.mrb[0].mxu0
    %769 = vmatprep.mubr.f32.mxu0 0.0
    %770 = vmatmul.mubr.f32.gmra.mrb[0].mxu0 %v122
    %v771 = vpop.f32.mrb[0].mxu0
    %v772 = vadd.f32 %v323, %v771
    %v773 = vpop.f32.mrb[0].mxu0
    %774 = vmatprep.mubr.f32.mxu0 0.0
    %775 = vmatmul.mubr.f32.gmra.mrb[0].mxu0 %v123
    %v776 = vpop.f32.mrb[0].mxu0
    %v777 = vadd.f32 %v323, %v776
    %v778 = vpop.f32.mrb[0].mxu0
    %779 = vmatprep.mubr.f32.mxu0 0.0
    %780 = vmatmul.mubr.f32.gmra.mrb[0].mxu0 %v124
    %v781 = vpop.f32.mrb[0].mxu0
    %v782 = vadd.f32 %v323, %v781
    %v783 = vpop.f32.mrb[0].mxu0
    %784 = vmatprep.mubr.f32.mxu0 0.0
    %785 = vmatmul.mubr.f32.gmra.mrb[0].mxu0 %v125
    %v786 = vpop.f32.mrb[0].mxu0
    %v787 = vadd.f32 %v323, %v786
    %v788 = vpop.f32.mrb[0].mxu0
    %789 = vmatprep.mubr.f32.mxu0 0.0
    %790 = vmatmul.mubr.f32.gmra.mrb[0].mxu0 %v126
    %v791 = vpop.f32.mrb[0].mxu0
    %v792 = vadd.f32 %v323, %v791
    %v793 = vpop.f32.mrb[0].mxu0
    %794 = vmatprep.mubr.f32.mxu0 0.0
    %795 = vmatmul.mubr.f32.gmra.mrb[0].mxu0 %v127
    %v796 = vpop.f32.mrb[0].mxu0
    %v797 = vadd.f32 %v323, %v796
    %v798 = vpop.f32.mrb[0].mxu0
    %799 = vmatprep.mubr.f32.mxu0 0.0
    %800 = vmatmul.mubr.f32.gmra.mrb[0].mxu0 %v128
    %v801 = vpop.f32.mrb[0].mxu0
    %v802 = vadd.f32 %v323, %v801
    %v803 = vpop.f32.mrb[0].mxu0
    %804 = vmatprep.mubr.f32.mxu0 0.0
    %805 = vmatmul.mubr.f32.gmra.mrb[0].mxu0 %v129
    %v806 = vpop.f32.mrb[0].mxu0
    %v807 = vadd.f32 %v323, %v806
    %v808 = vpop.f32.mrb[0].mxu0
    %809 = vmatprep.mubr.f32.mxu0 0.0
    %810 = vmatmul.mubr.f32.gmra.mrb[0].mxu0 %v130
    %v811 = vpop.f32.mrb[0].mxu0
    %v812 = vadd.f32 %v323, %v811
    %v813 = vpop.f32.mrb[0].mxu0
    %814 = vmatprep.mubr.f32.mxu0 0.0
    %815 = vmatmul.mubr.f32.gmra.mrb[0].mxu0 %v131
    %v816 = vpop.f32.mrb[0].mxu0
    %v817 = vadd.f32 %v323, %v816
    %v818 = vpop.f32.mrb[0].mxu0
    %819 = vmatprep.mubr.f32.mxu0 0.0
    %820 = vmatmul.mubr.f32.gmra.mrb[0].mxu0 %v132
    %v821 = vpop.f32.mrb[0].mxu0
    %v822 = vadd.f32 %v323, %v821
    %v823 = vpop.f32.mrb[0].mxu0
    %824 = vmatprep.mubr.f32.mxu0 0.0
    %825 = vmatmul.mubr.f32.gmra.mrb[0].mxu0 %v133
    %v826 = vpop.f32.mrb[0].mxu0
    %v827 = vadd.f32 %v323, %v826
    %v828 = vpop.f32.mrb[0].mxu0
    %829 = vmatprep.mubr.f32.mxu0 0.0
    %830 = vmatmul.mubr.f32.gmra.mrb[0].mxu0 %v134
    %v831 = vpop.f32.mrb[0].mxu0
    %v832 = vadd.f32 %v323, %v831
    %v833 = vpop.f32.mrb[0].mxu0
    %834 = vmatprep.mubr.f32.mxu0 0.0
    %835 = vmatmul.mubr.f32.gmra.mrb[0].mxu0 %v135
    %v836 = vpop.f32.mrb[0].mxu0
    %v837 = vadd.f32 %v323, %v836
    %v838 = vpop.f32.mrb[0].mxu0
    %839 = vmatprep.mubr.f32.mxu0 0.0
    %840 = vmatmul.mubr.f32.gmra.mrb[0].mxu0 %v136
    %v841 = vpop.f32.mrb[0].mxu0
    %v842 = vadd.f32 %v323, %v841
    %v843 = vpop.f32.mrb[0].mxu0
    %844 = vmatprep.mubr.f32.mxu0 0.0
    %845 = vmatmul.mubr.f32.gmra.mrb[0].mxu0 %v137
    %v846 = vpop.f32.mrb[0].mxu0
    %v847 = vadd.f32 %v323, %v846
    %v848 = vpop.f32.mrb[0].mxu0
    %849 = vmatprep.mubr.f32.mxu0 0.0
    %850 = vmatmul.mubr.f32.gmra.mrb[0].mxu0 %v138
    %v851 = vpop.f32.mrb[0].mxu0
    %v852 = vadd.f32 %v323, %v851
    %v853 = vpop.f32.mrb[0].mxu0
    %854 = vmatprep.mubr.f32.mxu0 0.0
    %855 = vmatmul.mubr.f32.gmra.mrb[0].mxu0 %v139
    %v856 = vpop.f32.mrb[0].mxu0
    %v857 = vadd.f32 %v323, %v856
    %v858 = vpop.f32.mrb[0].mxu0
    %859 = vmatprep.mubr.f32.mxu0 0.0
    %860 = vmatmul.mubr.f32.gmra.mrb[0].mxu0 %v140
    %v861 = vpop.f32.mrb[0].mxu0
    %v862 = vadd.f32 %v323, %v861
    %v863 = vpop.f32.mrb[0].mxu0
    %864 = vmatprep.mubr.f32.mxu0 0.0
    %865 = vmatmul.mubr.f32.gmra.mrb[0].mxu0 %v141
    %v866 = vpop.f32.mrb[0].mxu0
    %v867 = vadd.f32 %v323, %v866
    %v868 = vpop.f32.mrb[0].mxu0
    %869 = vmatprep.mubr.f32.mxu0 0.0
    %870 = vmatmul.mubr.f32.gmra.mrb[0].mxu0 %v142
    %v871 = vpop.f32.mrb[0].mxu0
    %v872 = vadd.f32 %v323, %v871
    %v873 = vpop.f32.mrb[0].mxu0
    %874 = vmatprep.mubr.f32.mxu0 0.0
    %875 = vmatmul.mubr.f32.gmra.mrb[0].mxu0 %v143
    %v876 = vpop.f32.mrb[0].mxu0
    %v877 = vadd.f32 %v323, %v876
    %v878 = vpop.f32.mrb[0].mxu0
    %879 = vmatprep.mubr.f32.mxu0 0.0
    %880 = vmatmul.mubr.f32.gmra.mrb[0].mxu0 %v144
    %v881 = vpop.f32.mrb[0].mxu0
    %v882 = vadd.f32 %v323, %v881
    %v883 = vpop.f32.mrb[0].mxu0
    %884 = vmatprep.mubr.f32.mxu0 0.0
    %885 = vmatmul.mubr.f32.gmra.mrb[0].mxu0 %v145
    %v886 = vpop.f32.mrb[0].mxu0
    %v887 = vadd.f32 %v323, %v886
    %v888 = vpop.f32.mrb[0].mxu0
    %889 = vmatprep.mubr.f32.mxu0 0.0
    %890 = vmatmul.mubr.f32.gmra.mrb[0].mxu0 %v146
    %v891 = vpop.f32.mrb[0].mxu0
    %v892 = vadd.f32 %v323, %v891
    %v893 = vpop.f32.mrb[0].mxu0
    %894 = vmatprep.mubr.f32.mxu0 0.0
    %895 = vmatmul.mubr.f32.gmra.mrb[0].mxu0 %v147
    %v896 = vpop.f32.mrb[0].mxu0
    %v897 = vadd.f32 %v323, %v896
    %v898 = vpop.f32.mrb[0].mxu0
    %899 = vmatprep.mubr.f32.mxu0 0.0
    %900 = vmatmul.mubr.f32.gmra.mrb[0].mxu0 %v148
    %v901 = vpop.f32.mrb[0].mxu0
    %v902 = vadd.f32 %v323, %v901
    %v903 = vpop.f32.mrb[0].mxu0
    %904 = vmatprep.mubr.f32.mxu0 0.0
    %905 = vmatmul.mubr.f32.gmra.mrb[0].mxu0 %v149
    %v906 = vpop.f32.mrb[0].mxu0
    %v907 = vadd.f32 %v323, %v906
    %v908 = vpop.f32.mrb[0].mxu0
    %909 = vmatprep.mubr.f32.mxu0 0.0
    %910 = vmatmul.mubr.f32.gmra.mrb[0].mxu0 %v150
    %v911 = vpop.f32.mrb[0].mxu0
    %v912 = vadd.f32 %v323, %v911
    %v913 = vpop.f32.mrb[0].mxu0
    %914 = vmatprep.mubr.f32.mxu0 0.0
    %915 = vmatmul.mubr.f32.gmra.mrb[0].mxu0 %v151
    %v916 = vpop.f32.mrb[0].mxu0
    %v917 = vadd.f32 %v323, %v916
    %v918 = vpop.f32.mrb[0].mxu0
    %919 = vmatprep.mubr.f32.mxu0 0.0
    %920 = vmatmul.mubr.f32.gmra.mrb[0].mxu0 %v152
    %v921 = vpop.f32.mrb[0].mxu0
    %v922 = vadd.f32 %v323, %v921
    %v923 = vpop.f32.mrb[0].mxu0
    %924 = vmatprep.mubr.f32.mxu0 0.0
    %925 = vmatmul.mubr.f32.gmra.mrb[0].mxu0 %v153
    %v926 = vpop.f32.mrb[0].mxu0
    %v927 = vadd.f32 %v323, %v926
    %v928 = vpop.f32.mrb[0].mxu0
    %929 = vmatprep.mubr.f32.mxu0 0.0
    %930 = vmatmul.mubr.f32.gmra.mrb[0].mxu0 %v154
    %v931 = vpop.f32.mrb[0].mxu0
    %v932 = vadd.f32 %v323, %v931
    %v933 = vpop.f32.mrb[0].mxu0
    %934 = vmatprep.mubr.f32.mxu0 0.0
    %935 = vmatmul.mubr.f32.gmra.mrb[0].mxu0 %v155
    %v936 = vpop.f32.mrb[0].mxu0
    %v937 = vadd.f32 %v323, %v936
    %v938 = vpop.f32.mrb[0].mxu0
    %939 = vmatprep.mubr.f32.mxu0 0.0
    %940 = vmatmul.mubr.f32.gmra.mrb[0].mxu0 %v156
    %v941 = vpop.f32.mrb[0].mxu0
    %v942 = vadd.f32 %v323, %v941
    %v943 = vpop.f32.mrb[0].mxu0
    %944 = vmatprep.mubr.f32.mxu0 0.0
    %945 = vmatmul.mubr.f32.gmra.mrb[0].mxu0 %v157
    %v946 = vpop.f32.mrb[0].mxu0
    %v947 = vadd.f32 %v323, %v946
    %v948 = vpop.f32.mrb[0].mxu0
    %949 = vmatprep.mubr.f32.mxu0 0.0
    %950 = vmatmul.mubr.f32.gmra.mrb[0].mxu0 %v158
    %v951 = vpop.f32.mrb[0].mxu0
    %v952 = vadd.f32 %v323, %v951
    %v953 = vpop.f32.mrb[0].mxu0
    %954 = vmatprep.mubr.f32.mxu0 0.0
    %955 = vmatmul.mubr.f32.gmra.mrb[0].mxu0 %v159
    %v956 = vpop.f32.mrb[0].mxu0
    %v957 = vadd.f32 %v323, %v956
    %v958 = vpop.f32.mrb[0].mxu0
    %959 = vmatprep.mubr.f32.mxu0 0.0
    %960 = vmatmul.mubr.f32.gmra.mrb[0].mxu0 %v160
    %v961 = vpop.f32.mrb[0].mxu0
    %v962 = vadd.f32 %v323, %v961
    %v963 = vpop.f32.mrb[0].mxu0
    %964 = vmatprep.mubr.f32.mxu0 0.0
    %965 = vmatmul.mubr.f32.gmra.mrb[0].mxu0 %v161
    %v966 = vpop.f32.mrb[0].mxu0
    %v967 = vadd.f32 %v323, %v966
    %v968 = vpop.f32.mrb[0].mxu0
    %969 = vmatprep.mubr.f32.mxu0 0.0
    %970 = vmatmul.mubr.f32.gmra.mrb[0].mxu0 %v162
    %v971 = vpop.f32.mrb[0].mxu0
    %v972 = vadd.f32 %v323, %v971
    %v973 = vpop.f32.mrb[0].mxu0
    %974 = vmatprep.mubr.f32.mxu0 0.0
    %975 = vmatmul.mubr.f32.gmra.mrb[0].mxu0 %v163
    %v976 = vpop.f32.mrb[0].mxu0
    %v977 = vadd.f32 %v323, %v976
    %v978 = vpop.f32.mrb[0].mxu0
    %979 = vmatprep.mubr.f32.mxu0 0.0
    %980 = vmatmul.mubr.f32.gmra.mrb[0].mxu0 %v164
    %v981 = vpop.f32.mrb[0].mxu0
    %v982 = vadd.f32 %v323, %v981
    %v983 = vpop.f32.mrb[0].mxu0
    %984 = vmatprep.mubr.f32.mxu0 0.0
    %985 = vmatmul.mubr.f32.gmra.mrb[0].mxu0 %v165
    %v986 = vpop.f32.mrb[0].mxu0
    %v987 = vadd.f32 %v323, %v986
    %v988 = vpop.f32.mrb[0].mxu0
    %989 = vmatprep.mubr.f32.mxu0 0.0
    %990 = vmatmul.mubr.f32.gmra.mrb[0].mxu0 %v166
    %v991 = vpop.f32.mrb[0].mxu0
    %v992 = vadd.f32 %v323, %v991
    %v993 = vpop.f32.mrb[0].mxu0
    %994 = vmatprep.mubr.f32.mxu0 0.0
    %995 = vmatmul.mubr.f32.gmra.mrb[0].mxu0 %v167
    %v996 = vpop.f32.mrb[0].mxu0
    %v997 = vadd.f32 %v323, %v996
    %v998 = vpop.f32.mrb[0].mxu0
    %999 = vmatprep.mubr.f32.mxu0 0.0
    %1000 = vmatmul.mubr.f32.gmra.mrb[0].mxu0 %v168
    %v1001 = vpop.f32.mrb[0].mxu0
    %v1002 = vadd.f32 %v323, %v1001
    %v1003 = vpop.f32.mrb[0].mxu0
    %1004 = vmatprep.mubr.f32.mxu0 0.0
    %1005 = vmatmul.mubr.f32.gmra.mrb[0].mxu0 %v169
    %v1006 = vpop.f32.mrb[0].mxu0
    %v1007 = vadd.f32 %v323, %v1006
    %v1008 = vpop.f32.mrb[0].mxu0
    %1009 = vmatprep.mubr.f32.mxu0 0.0
    %1010 = vmatmul.mubr.f32.gmra.mrb[0].mxu0 %v170
    %v1011 = vpop.f32.mrb[0].mxu0
    %v1012 = vadd.f32 %v323, %v1011
    %v1013 = vpop.f32.mrb[0].mxu0
    %1014 = vmatprep.mubr.f32.mxu0 0.0
    %1015 = vmatmul.mubr.f32.gmra.mrb[0].mxu0 %v171
    %v1016 = vpop.f32.mrb[0].mxu0
    %v1017 = vadd.f32 %v323, %v1016
    %v1018 = vpop.f32.mrb[0].mxu0
    %1019 = vmatprep.mubr.f32.mxu0 0.0
    %1020 = vmatmul.mubr.f32.gmra.mrb[0].mxu0 %v172
    %v1021 = vpop.f32.mrb[0].mxu0
    %v1022 = vadd.f32 %v323, %v1021
    %v1023 = vpop.f32.mrb[0].mxu0
    %1024 = vmatprep.mubr.f32.mxu0 0.0
    %1025 = vmatmul.mubr.f32.gmra.mrb[0].mxu0 %v173
    %v1026 = vpop.f32.mrb[0].mxu0
    %v1027 = vadd.f32 %v323, %v1026
    %v1028 = vpop.f32.mrb[0].mxu0
    %1029 = vmatprep.mubr.f32.mxu0 0.0
    %1030 = vmatmul.mubr.f32.gmra.mrb[0].mxu0 %v174
    %v1031 = vpop.f32.mrb[0].mxu0
    %v1032 = vadd.f32 %v323, %v1031
    %v1033 = vpop.f32.mrb[0].mxu0
    %1034 = vmatprep.mubr.f32.mxu0 0.0
    %1035 = vmatmul.mubr.f32.gmra.mrb[0].mxu0 %v175
    %v1036 = vpop.f32.mrb[0].mxu0
    %v1037 = vadd.f32 %v323, %v1036
    %v1038 = vpop.f32.mrb[0].mxu0
    %1039 = vmatprep.mubr.f32.mxu0 0.0
    %1040 = vmatmul.mubr.f32.gmra.mrb[0].mxu0 %v176
    %v1041 = vpop.f32.mrb[0].mxu0
    %v1042 = vadd.f32 %v323, %v1041
    %v1043 = vpop.f32.mrb[0].mxu0
    %1044 = vmatprep.mubr.f32.mxu0 0.0
    %1045 = vmatmul.mubr.f32.gmra.mrb[0].mxu0 %v177
    %v1046 = vpop.f32.mrb[0].mxu0
    %v1047 = vadd.f32 %v323, %v1046
    %v1048 = vpop.f32.mrb[0].mxu0
    %1049 = vmatprep.mubr.f32.mxu0 0.0
    %1050 = vmatmul.mubr.f32.gmra.mrb[0].mxu0 %v178
    %v1051 = vpop.f32.mrb[0].mxu0
    %v1052 = vadd.f32 %v323, %v1051
    %v1053 = vpop.f32.mrb[0].mxu0
    %1054 = vmatprep.mubr.f32.mxu0 0.0
    %1055 = vmatmul.mubr.f32.gmra.mrb[0].mxu0 %v179
    %v1056 = vpop.f32.mrb[0].mxu0
    %v1057 = vadd.f32 %v323, %v1056
    %v1058 = vpop.f32.mrb[0].mxu0
    %1059 = vmatprep.mubr.f32.mxu0 0.0
    %1060 = vmatmul.mubr.f32.gmra.mrb[0].mxu0 %v180
    %v1061 = vpop.f32.mrb[0].mxu0
    %v1062 = vadd.f32 %v323, %v1061
    %v1063 = vpop.f32.mrb[0].mxu0
    %1064 = vmatprep.mubr.f32.mxu0 0.0
    %1065 = vmatmul.mubr.f32.gmra.mrb[0].mxu0 %v181
    %v1066 = vpop.f32.mrb[0].mxu0
    %v1067 = vadd.f32 %v323, %v1066
    %v1068 = vpop.f32.mrb[0].mxu0
    %1069 = vmatprep.mubr.f32.mxu0 0.0
    %1070 = vmatmul.mubr.f32.gmra.mrb[0].mxu0 %v182
    %v1071 = vpop.f32.mrb[0].mxu0
    %v1072 = vadd.f32 %v323, %v1071
    %v1073 = vpop.f32.mrb[0].mxu0
    %1074 = vmatprep.mubr.f32.mxu0 0.0
    %1075 = vmatmul.mubr.f32.gmra.mrb[0].mxu0 %v183
    %v1076 = vpop.f32.mrb[0].mxu0
    %v1077 = vadd.f32 %v323, %v1076
    %v1078 = vpop.f32.mrb[0].mxu0
    %1079 = vmatprep.mubr.f32.mxu0 0.0
    %1080 = vmatmul.mubr.f32.gmra.mrb[0].mxu0 %v184
    %v1081 = vpop.f32.mrb[0].mxu0
    %v1082 = vadd.f32 %v323, %v1081
    %v1083 = vpop.f32.mrb[0].mxu0
    %1084 = vmatprep.mubr.f32.mxu0 0.0
    %1085 = vmatmul.mubr.f32.gmra.mrb[0].mxu0 %v185
    %v1086 = vpop.f32.mrb[0].mxu0
    %v1087 = vadd.f32 %v323, %v1086
    %v1088 = vpop.f32.mrb[0].mxu0
    %1089 = vmatprep.mubr.f32.mxu0 0.0
    %1090 = vmatmul.mubr.f32.gmra.mrb[0].mxu0 %v186
    %v1091 = vpop.f32.mrb[0].mxu0
    %v1092 = vadd.f32 %v323, %v1091
    %v1093 = vpop.f32.mrb[0].mxu0
    %1094 = vmatprep.mubr.f32.mxu0 0.0
    %1095 = vmatmul.mubr.f32.gmra.mrb[0].mxu0 %v187
    %v1096 = vpop.f32.mrb[0].mxu0
    %v1097 = vadd.f32 %v323, %v1096
    %v1098 = vpop.f32.mrb[0].mxu0
    %1099 = vmatprep.mubr.f32.mxu0 0.0
    %1100 = vmatmul.mubr.f32.gmra.mrb[0].mxu0 %v188
    %v1101 = vpop.f32.mrb[0].mxu0
    %v1102 = vadd.f32 %v323, %v1101
    %v1103 = vpop.f32.mrb[0].mxu0
    %1104 = vmatprep.mubr.f32.mxu0 0.0
    %1105 = vmatmul.mubr.f32.gmra.mrb[0].mxu0 %v189
    %v1106 = vpop.f32.mrb[0].mxu0
    %v1107 = vadd.f32 %v323, %v1106
    %v1108 = vpop.f32.mrb[0].mxu0
    %1109 = vmatprep.mubr.f32.mxu0 0.0
    %1110 = vmatmul.mubr.f32.gmra.mrb[0].mxu0 %v190
    %v1111 = vpop.f32.mrb[0].mxu0
    %v1112 = vadd.f32 %v323, %v1111
    %v1113 = vpop.f32.mrb[0].mxu0
    %1114 = vmatprep.mubr.f32.mxu0 0.0
    %1115 = vmatmul.mubr.f32.gmra.mrb[0].mxu0 %v191
    %v1116 = vpop.f32.mrb[0].mxu0
    %v1117 = vadd.f32 %v323, %v1116
    %v1118 = vpop.f32.mrb[0].mxu0
    %1119 = vmatprep.mubr.f32.mxu0 0.0
    %1120 = vmatmul.mubr.f32.gmra.mrb[0].mxu0 %v192
    %v1121 = vpop.f32.mrb[0].mxu0
    %v1122 = vadd.f32 %v323, %v1121
    %v1123 = vpop.f32.mrb[0].mxu0
    %1124 = vmatprep.mubr.f32.mxu0 0.0
    %1125 = vmatmul.mubr.f32.gmra.mrb[0].mxu0 %v193
    %v1126 = vpop.f32.mrb[0].mxu0
    %v1127 = vadd.f32 %v323, %v1126
    %v1128 = vpop.f32.mrb[0].mxu0
    %1129 = vmatprep.mubr.f32.mxu0 0.0
    %1130 = vmatmul.mubr.f32.gmra.mrb[0].mxu0 %v194
    %v1131 = vpop.f32.mrb[0].mxu0
    %v1132 = vadd.f32 %v323, %v1131
    %v1133 = vpop.f32.mrb[0].mxu0
    %1134 = vmatprep.mubr.f32.mxu0 0.0
    %1135 = vmatmul.mubr.f32.gmra.mrb[0].mxu0 %v195
    %v1136 = vpop.f32.mrb[0].mxu0
    %v1137 = vadd.f32 %v323, %v1136
    %v1138 = vpop.f32.mrb[0].mxu0
    %1139 = vmatprep.mubr.f32.mxu0 0.0
    %1140 = vmatmul.mubr.f32.gmra.mrb[0].mxu0 %v196
    %v1141 = vpop.f32.mrb[0].mxu0
    %v1142 = vadd.f32 %v323, %v1141
    %v1143 = vpop.f32.mrb[0].mxu0
    %1144 = vmatprep.mubr.f32.mxu0 0.0
    %1145 = vmatmul.mubr.f32.gmra.mrb[0].mxu0 %v197
    %v1146 = vpop.f32.mrb[0].mxu0
    %v1147 = vadd.f32 %v323, %v1146
    %v1148 = vpop.f32.mrb[0].mxu0
    %1149 = vmatprep.mubr.f32.mxu0 0.0
    %1150 = vmatmul.mubr.f32.gmra.mrb[0].mxu0 %v198
    %v1151 = vpop.f32.mrb[0].mxu0
    %v1152 = vadd.f32 %v323, %v1151
    %v1153 = vpop.f32.mrb[0].mxu0
    %1154 = vmatprep.mubr.f32.mxu0 0.0
    %1155 = vmatmul.mubr.f32.gmra.mrb[0].mxu0 %v199
    %v1156 = vpop.f32.mrb[0].mxu0
    %v1157 = vadd.f32 %v323, %v1156
    %v1158 = vpop.f32.mrb[0].mxu0
    %1159 = vmatprep.mubr.f32.mxu0 0.0
    %1160 = vmatmul.mubr.f32.gmra.mrb[0].mxu0 %v200
    %v1161 = vpop.f32.mrb[0].mxu0
    %v1162 = vadd.f32 %v323, %v1161
    %v1163 = vpop.f32.mrb[0].mxu0
    %1164 = vmatprep.mubr.f32.mxu0 0.0
    %1165 = vmatmul.mubr.f32.gmra.mrb[0].mxu0 %v201
    %v1166 = vpop.f32.mrb[0].mxu0
    %v1167 = vadd.f32 %v323, %v1166
    %v1168 = vpop.f32.mrb[0].mxu0
    %1169 = vmatprep.mubr.f32.mxu0 0.0
    %1170 = vmatmul.mubr.f32.gmra.mrb[0].mxu0 %v202
    %v1171 = vpop.f32.mrb[0].mxu0
    %v1172 = vadd.f32 %v323, %v1171
    %v1173 = vpop.f32.mrb[0].mxu0
    %1174 = vmatprep.mubr.f32.mxu0 0.0
    %1175 = vmatmul.mubr.f32.gmra.mrb[0].mxu0 %v203
    %v1176 = vpop.f32.mrb[0].mxu0
    %v1177 = vadd.f32 %v323, %v1176
    %v1178 = vpop.f32.mrb[0].mxu0
    %1179 = vmatprep.mubr.f32.mxu0 0.0
    %1180 = vmatmul.mubr.f32.gmra.mrb[0].mxu0 %v204
    %v1181 = vpop.f32.mrb[0].mxu0
    %v1182 = vadd.f32 %v323, %v1181
    %v1183 = vpop.f32.mrb[0].mxu0
    %1184 = vmatprep.mubr.f32.mxu0 0.0
    %1185 = vmatmul.mubr.f32.gmra.mrb[0].mxu0 %v205
    %v1186 = vpop.f32.mrb[0].mxu0
    %v1187 = vadd.f32 %v323, %v1186
    %v1188 = vpop.f32.mrb[0].mxu0
    %1189 = vmatprep.mubr.f32.mxu0 0.0
    %1190 = vmatmul.mubr.f32.gmra.mrb[0].mxu0 %v206
    %v1191 = vpop.f32.mrb[0].mxu0
    %v1192 = vadd.f32 %v323, %v1191
    %v1193 = vpop.f32.mrb[0].mxu0
    %1194 = vmatprep.mubr.f32.mxu0 0.0
    %1195 = vmatmul.mubr.f32.gmra.mrb[0].mxu0 %v207
    %v1196 = vpop.f32.mrb[0].mxu0
    %v1197 = vadd.f32 %v323, %v1196
    %v1198 = vpop.f32.mrb[0].mxu0
    %1199 = vmatprep.mubr.f32.mxu0 0.0
    %1200 = vmatmul.mubr.f32.gmra.mrb[0].mxu0 %v208
    %v1201 = vpop.f32.mrb[0].mxu0
    %v1202 = vadd.f32 %v323, %v1201
    %v1203 = vpop.f32.mrb[0].mxu0
    %1204 = vmatprep.mubr.f32.mxu0 0.0
    %1205 = vmatmul.mubr.f32.gmra.mrb[0].mxu0 %v209
    %v1206 = vpop.f32.mrb[0].mxu0
    %v1207 = vadd.f32 %v323, %v1206
    %v1208 = vpop.f32.mrb[0].mxu0
    %1209 = vmatprep.mubr.f32.mxu0 0.0
    %1210 = vmatmul.mubr.f32.gmra.mrb[0].mxu0 %v210
    %v1211 = vpop.f32.mrb[0].mxu0
    %v1212 = vadd.f32 %v323, %v1211
    %v1213 = vpop.f32.mrb[0].mxu0
    %1214 = vmatprep.mubr.f32.mxu0 0.0
    %1215 = vmatmul.mubr.f32.gmra.mrb[0].mxu0 %v211
    %v1216 = vpop.f32.mrb[0].mxu0
    %v1217 = vadd.f32 %v323, %v1216
    %v1218 = vpop.f32.mrb[0].mxu0
    %1219 = vmatprep.mubr.f32.mxu0 0.0
    %1220 = vmatmul.mubr.f32.gmra.mrb[0].mxu0 %v212
    %v1221 = vpop.f32.mrb[0].mxu0
    %v1222 = vadd.f32 %v323, %v1221
    %v1223 = vpop.f32.mrb[0].mxu0
    %1224 = vmatprep.mubr.f32.mxu0 0.0
    %1225 = vmatmul.mubr.f32.gmra.mrb[0].mxu0 %v213
    %v1226 = vpop.f32.mrb[0].mxu0
    %v1227 = vadd.f32 %v323, %v1226
    %v1228 = vpop.f32.mrb[0].mxu0
    %1229 = vmatprep.mubr.f32.mxu0 0.0
    %1230 = vmatmul.mubr.f32.gmra.mrb[0].mxu0 %v214
    %v1231 = vpop.f32.mrb[0].mxu0
    %v1232 = vadd.f32 %v323, %v1231
    %v1233 = vpop.f32.mrb[0].mxu0
    %1234 = vmatprep.mubr.f32.mxu0 0.0
    %1235 = vmatmul.mubr.f32.gmra.mrb[0].mxu0 %v215
    %v1236 = vpop.f32.mrb[0].mxu0
    %v1237 = vadd.f32 %v323, %v1236
    %v1238 = vpop.f32.mrb[0].mxu0
    %1239 = vmatprep.mubr.f32.mxu0 0.0
    %1240 = vmatmul.mubr.f32.gmra.mrb[0].mxu0 %v216
    %v1241 = vpop.f32.mrb[0].mxu0
    %v1242 = vadd.f32 %v323, %v1241
    %v1243 = vpop.f32.mrb[0].mxu0
    %1244 = vmatprep.mubr.f32.mxu0 0.0
    %1245 = vmatmul.mubr.f32.gmra.mrb[0].mxu0 %v217
    %v1246 = vpop.f32.mrb[0].mxu0
    %v1247 = vadd.f32 %v323, %v1246
    %v1248 = vpop.f32.mrb[0].mxu0
    %1249 = vmatprep.mubr.f32.mxu0 0.0
    %1250 = vmatmul.mubr.f32.gmra.mrb[0].mxu0 %v218
    %v1251 = vpop.f32.mrb[0].mxu0
    %v1252 = vadd.f32 %v323, %v1251
    %v1253 = vpop.f32.mrb[0].mxu0
    %1254 = vmatprep.mubr.f32.mxu0 0.0
    %1255 = vmatmul.mubr.f32.gmra.mrb[0].mxu0 %v219
    %v1256 = vpop.f32.mrb[0].mxu0
    %v1257 = vadd.f32 %v323, %v1256
    %v1258 = vpop.f32.mrb[0].mxu0
    %1259 = vmatprep.mubr.f32.mxu0 0.0
    %1260 = vmatmul.mubr.f32.gmra.mrb[0].mxu0 %v220
    %v1261 = vpop.f32.mrb[0].mxu0
    %v1262 = vadd.f32 %v323, %v1261
    %v1263 = vpop.f32.mrb[0].mxu0
    %1264 = vmatprep.mubr.f32.mxu0 0.0
    %1265 = vmatmul.mubr.f32.gmra.mrb[0].mxu0 %v221
    %v1266 = vpop.f32.mrb[0].mxu0
    %v1267 = vadd.f32 %v323, %v1266
    %v1268 = vpop.f32.mrb[0].mxu0
    %1269 = vmatprep.mubr.f32.mxu0 0.0
    %1270 = vmatmul.mubr.f32.gmra.mrb[0].mxu0 %v222
    %v1271 = vpop.f32.mrb[0].mxu0
    %v1272 = vadd.f32 %v323, %v1271
    %v1273 = vpop.f32.mrb[0].mxu0
    %1274 = vmatprep.mubr.f32.mxu0 0.0
    %1275 = vmatmul.mubr.f32.gmra.mrb[0].mxu0 %v223
    %v1276 = vpop.f32.mrb[0].mxu0
    %v1277 = vadd.f32 %v323, %v1276
    %v1278 = vpop.f32.mrb[0].mxu0
    %1279 = vmatprep.mubr.f32.mxu0 0.0
    %1280 = vmatmul.mubr.f32.gmra.mrb[0].mxu0 %v224
    %v1281 = vpop.f32.mrb[0].mxu0
    %v1282 = vadd.f32 %v323, %v1281
    %v1283 = vpop.f32.mrb[0].mxu0
    %1284 = vmatprep.mubr.f32.mxu0 0.0
    %1285 = vmatmul.mubr.f32.gmra.mrb[0].mxu0 %v225
    %v1286 = vpop.f32.mrb[0].mxu0
    %v1287 = vadd.f32 %v323, %v1286
    %v1288 = vpop.f32.mrb[0].mxu0
    %1289 = vmatprep.mubr.f32.mxu0 0.0
    %1290 = vmatmul.mubr.f32.gmra.mrb[0].mxu0 %v226
    %v1291 = vpop.f32.mrb[0].mxu0
    %v1292 = vadd.f32 %v323, %v1291
    %v1293 = vpop.f32.mrb[0].mxu0
    %1294 = vmatprep.mubr.f32.mxu0 0.0
    %1295 = vmatmul.mubr.f32.gmra.mrb[0].mxu0 %v227
    %v1296 = vpop.f32.mrb[0].mxu0
    %v1297 = vadd.f32 %v323, %v1296
    %v1298 = vpop.f32.mrb[0].mxu0
    %1299 = vmatprep.mubr.f32.mxu0 0.0
    %1300 = vmatmul.mubr.f32.gmra.mrb[0].mxu0 %v228
    %v1301 = vpop.f32.mrb[0].mxu0
    %v1302 = vadd.f32 %v323, %v1301
    %v1303 = vpop.f32.mrb[0].mxu0
    %1304 = vmatprep.mubr.f32.mxu0 0.0
    %1305 = vmatmul.mubr.f32.gmra.mrb[0].mxu0 %v229
    %v1306 = vpop.f32.mrb[0].mxu0
    %v1307 = vadd.f32 %v323, %v1306
    %v1308 = vpop.f32.mrb[0].mxu0
    %1309 = vmatprep.mubr.f32.mxu0 0.0
    %1310 = vmatmul.mubr.f32.gmra.mrb[0].mxu0 %v230
    %v1311 = vpop.f32.mrb[0].mxu0
    %v1312 = vadd.f32 %v323, %v1311
    %v1313 = vpop.f32.mrb[0].mxu0
    %1314 = vmatprep.mubr.f32.mxu0 0.0
    %1315 = vmatmul.mubr.f32.gmra.mrb[0].mxu0 %v231
    %v1316 = vpop.f32.mrb[0].mxu0
    %v1317 = vadd.f32 %v323, %v1316
    %v1318 = vpop.f32.mrb[0].mxu0
    %1319 = vmatprep.mubr.f32.mxu0 0.0
    %1320 = vmatmul.mubr.f32.gmra.mrb[0].mxu0 %v232
    %v1321 = vpop.f32.mrb[0].mxu0
    %v1322 = vadd.f32 %v323, %v1321
    %v1323 = vpop.f32.mrb[0].mxu0
    %1324 = vmatprep.mubr.f32.mxu0 0.0
    %1325 = vmatmul.mubr.f32.gmra.mrb[0].mxu0 %v233
    %v1326 = vpop.f32.mrb[0].mxu0
    %v1327 = vadd.f32 %v323, %v1326
    %v1328 = vpop.f32.mrb[0].mxu0
    %1329 = vmatprep.mubr.f32.mxu0 0.0
    %1330 = vmatmul.mubr.f32.gmra.mrb[0].mxu0 %v234
    %v1331 = vpop.f32.mrb[0].mxu0
    %v1332 = vadd.f32 %v323, %v1331
    %v1333 = vpop.f32.mrb[0].mxu0
    %1334 = vmatprep.mubr.f32.mxu0 0.0
    %1335 = vmatmul.mubr.f32.gmra.mrb[0].mxu0 %v235
    %v1336 = vpop.f32.mrb[0].mxu0
    %v1337 = vadd.f32 %v323, %v1336
    %v1338 = vpop.f32.mrb[0].mxu0
    %1339 = vmatprep.mubr.f32.mxu0 0.0
    %1340 = vmatmul.mubr.f32.gmra.mrb[0].mxu0 %v236
    %v1341 = vpop.f32.mrb[0].mxu0
    %v1342 = vadd.f32 %v323, %v1341
    %v1343 = vpop.f32.mrb[0].mxu0
    %1344 = vmatprep.mubr.f32.mxu0 0.0
    %1345 = vmatmul.mubr.f32.gmra.mrb[0].mxu0 %v237
    %v1346 = vpop.f32.mrb[0].mxu0
    %v1347 = vadd.f32 %v323, %v1346
    %v1348 = vpop.f32.mrb[0].mxu0
    %1349 = vmatprep.mubr.f32.mxu0 0.0
    %1350 = vmatmul.mubr.f32.gmra.mrb[0].mxu0 %v238
    %v1351 = vpop.f32.mrb[0].mxu0
    %v1352 = vadd.f32 %v323, %v1351
    %v1353 = vpop.f32.mrb[0].mxu0
    %1354 = vmatprep.mubr.f32.mxu0 0.0
    %1355 = vmatmul.mubr.f32.gmra.mrb[0].mxu0 %v239
    %v1356 = vpop.f32.mrb[0].mxu0
    %v1357 = vadd.f32 %v323, %v1356
    %v1358 = vpop.f32.mrb[0].mxu0
    %1359 = vmatprep.mubr.f32.mxu0 0.0
    %1360 = vmatmul.mubr.f32.gmra.mrb[0].mxu0 %v240
    %v1361 = vpop.f32.mrb[0].mxu0
    %v1362 = vadd.f32 %v323, %v1361
    %v1363 = vpop.f32.mrb[0].mxu0
    %1364 = vmatprep.mubr.f32.mxu0 0.0
    %1365 = vmatmul.mubr.f32.gmra.mrb[0].mxu0 %v241
    %v1366 = vpop.f32.mrb[0].mxu0
    %v1367 = vadd.f32 %v323, %v1366
    %v1368 = vpop.f32.mrb[0].mxu0
    %1369 = vmatprep.mubr.f32.mxu0 0.0
    %1370 = vmatmul.mubr.f32.gmra.mrb[0].mxu0 %v242
    %v1371 = vpop.f32.mrb[0].mxu0
    %v1372 = vadd.f32 %v323, %v1371
    %v1373 = vpop.f32.mrb[0].mxu0
    %1374 = vmatprep.mubr.f32.mxu0 0.0
    %1375 = vmatmul.mubr.f32.gmra.mrb[0].mxu0 %v243
    %v1376 = vpop.f32.mrb[0].mxu0
    %v1377 = vadd.f32 %v323, %v1376
    %v1378 = vpop.f32.mrb[0].mxu0
    %1379 = vmatprep.mubr.f32.mxu0 0.0
    %1380 = vmatmul.mubr.f32.gmra.mrb[0].mxu0 %v244
    %v1381 = vpop.f32.mrb[0].mxu0
    %v1382 = vadd.f32 %v323, %v1381
    %v1383 = vpop.f32.mrb[0].mxu0
    %1384 = vmatprep.mubr.f32.mxu0 0.0
    %1385 = vmatmul.mubr.f32.gmra.mrb[0].mxu0 %v245
    %v1386 = vpop.f32.mrb[0].mxu0
    %v1387 = vadd.f32 %v323, %v1386
    %v1388 = vpop.f32.mrb[0].mxu0
    %1389 = vmatprep.mubr.f32.mxu0 0.0
    %1390 = vmatmul.mubr.f32.gmra.mrb[0].mxu0 %v246
    %v1391 = vpop.f32.mrb[0].mxu0
    %v1392 = vadd.f32 %v323, %v1391
    %v1393 = vpop.f32.mrb[0].mxu0
    %1394 = vmatprep.mubr.f32.mxu0 0.0
    %1395 = vmatmul.mubr.f32.gmra.mrb[0].mxu0 %v247
    %v1396 = vpop.f32.mrb[0].mxu0
    %v1397 = vadd.f32 %v323, %v1396
    %v1398 = vpop.f32.mrb[0].mxu0
    %1399 = vmatprep.mubr.f32.mxu0 0.0
    %1400 = vmatmul.mubr.f32.gmra.mrb[0].mxu0 %v248
    %v1401 = vpop.f32.mrb[0].mxu0
    %v1402 = vadd.f32 %v323, %v1401
    %v1403 = vpop.f32.mrb[0].mxu0
    %1404 = vmatprep.mubr.f32.mxu0 0.0
    %1405 = vmatmul.mubr.f32.gmra.mrb[0].mxu0 %v249
    %v1406 = vpop.f32.mrb[0].mxu0
    %v1407 = vadd.f32 %v323, %v1406
    %v1408 = vpop.f32.mrb[0].mxu0
    %1409 = vmatprep.mubr.f32.mxu0 0.0
    %1410 = vmatmul.mubr.f32.gmra.mrb[0].mxu0 %v250
    %v1411 = vpop.f32.mrb[0].mxu0
    %v1412 = vadd.f32 %v323, %v1411
    %v1413 = vpop.f32.mrb[0].mxu0
    %1414 = vmatprep.mubr.f32.mxu0 0.0
    %1415 = vmatmul.mubr.f32.gmra.mrb[0].mxu0 %v251
    %v1416 = vpop.f32.mrb[0].mxu0
    %v1417 = vadd.f32 %v323, %v1416
    %v1418 = vpop.f32.mrb[0].mxu0
    %1419 = vmatprep.mubr.f32.mxu0 0.0
    %1420 = vmatmul.mubr.f32.gmra.mrb[0].mxu0 %v252
    %v1421 = vpop.f32.mrb[0].mxu0
    %v1422 = vadd.f32 %v323, %v1421
    %v1423 = vpop.f32.mrb[0].mxu0
    %1424 = vmatprep.mubr.f32.mxu0 0.0
    %1425 = vmatmul.mubr.f32.gmra.mrb[0].mxu0 %v253
    %v1426 = vpop.f32.mrb[0].mxu0
    %v1427 = vadd.f32 %v323, %v1426
    %v1428 = vpop.f32.mrb[0].mxu0
    %1429 = vmatprep.mubr.f32.mxu0 0.0
    %1430 = vmatmul.mubr.f32.gmra.mrb[0].mxu0 %v254
    %v1431 = vpop.f32.mrb[0].mxu0
    %v1432 = vadd.f32 %v323, %v1431
    %v1433 = vpop.f32.mrb[0].mxu0
    %1434 = vmatprep.mubr.f32.mxu0 0.0
    %1435 = vmatmul.mubr.f32.gmra.mrb[0].mxu0 %v255
    %v1436 = vpop.f32.mrb[0].mxu0
    %v1437 = vadd.f32 %v323, %v1436
    %v1438 = vpop.f32.mrb[0].mxu0
    %1439 = vmatprep.mubr.f32.mxu0 0.0
    %1440 = vmatmul.mubr.f32.gmra.mrb[0].mxu0 %v256
    %v1441 = vpop.f32.mrb[0].mxu0
    %v1442 = vadd.f32 %v323, %v1441
    %v1443 = vpop.f32.mrb[0].mxu0
    %1444 = vmatprep.mubr.f32.mxu0 0.0
    %1445 = vmatmul.mubr.f32.gmra.mrb[0].mxu0 %v257
    %v1446 = vpop.f32.mrb[0].mxu0
    %v1447 = vadd.f32 %v323, %v1446
    %v1448 = vpop.f32.mrb[0].mxu0
    %1449 = vmatprep.mubr.f32.mxu0 0.0
    %1450 = vmatmul.mubr.f32.gmra.mrb[0].mxu0 %v258
    %v1451 = vpop.f32.mrb[0].mxu0
    %v1452 = vadd.f32 %v323, %v1451
    %v1453 = vpop.f32.mrb[0].mxu0
    %1454 = vmatprep.mubr.f32.mxu0 0.0
    %1455 = vmatmul.mubr.f32.gmra.mrb[0].mxu0 %v259
    %v1456 = vpop.f32.mrb[0].mxu0
    %v1457 = vadd.f32 %v323, %v1456
    %v1458 = vpop.f32.mrb[0].mxu0
    %1459 = vmatprep.mubr.f32.mxu0 0.0
    %1460 = vmatmul.mubr.f32.gmra.mrb[0].mxu0 %v260
    %v1461 = vpop.f32.mrb[0].mxu0
    %v1462 = vadd.f32 %v323, %v1461
    %v1463 = vpop.f32.mrb[0].mxu0
    %1464 = vmatprep.mubr.f32.mxu0 0.0
    %1465 = vmatmul.mubr.f32.gmra.mrb[0].mxu0 %v261
    %v1466 = vpop.f32.mrb[0].mxu0
    %v1467 = vadd.f32 %v323, %v1466
    %v1468 = vpop.f32.mrb[0].mxu0
    %1469 = vmatprep.mubr.f32.mxu0 0.0
    %1470 = vmatmul.mubr.f32.gmra.mrb[0].mxu0 %v262
    %v1471 = vpop.f32.mrb[0].mxu0
    %v1472 = vadd.f32 %v323, %v1471
    %v1473 = vpop.f32.mrb[0].mxu0
    %1474 = vmatprep.mubr.f32.mxu0 0.0
    %1475 = vmatmul.mubr.f32.gmra.mrb[0].mxu0 %v263
    %v1476 = vpop.f32.mrb[0].mxu0
    %v1477 = vadd.f32 %v323, %v1476
    %v1478 = vpop.f32.mrb[0].mxu0
    %1479 = vmatprep.mubr.f32.mxu0 0.0
    %1480 = vmatmul.mubr.f32.gmra.mrb[0].mxu0 %v264
    %v1481 = vpop.f32.mrb[0].mxu0
    %v1482 = vadd.f32 %v323, %v1481
    %v1483 = vpop.f32.mrb[0].mxu0
    %1484 = vmatprep.mubr.f32.mxu0 0.0
    %1485 = vmatmul.mubr.f32.gmra.mrb[0].mxu0 %v265
    %v1486 = vpop.f32.mrb[0].mxu0
    %v1487 = vadd.f32 %v323, %v1486
    %v1488 = vpop.f32.mrb[0].mxu0
    %1489 = vmatprep.mubr.f32.mxu0 0.0
    %1490 = vmatmul.mubr.f32.gmra.mrb[0].mxu0 %v266
    %v1491 = vpop.f32.mrb[0].mxu0
    %v1492 = vadd.f32 %v323, %v1491
    %v1493 = vpop.f32.mrb[0].mxu0
    %1494 = vmatprep.mubr.f32.mxu0 0.0
    %1495 = vmatmul.mubr.f32.gmra.mrb[0].mxu0 %v267
    %v1496 = vpop.f32.mrb[0].mxu0
    %v1497 = vadd.f32 %v323, %v1496
    %v1498 = vpop.f32.mrb[0].mxu0
    %1499 = vmatprep.mubr.f32.mxu0 0.0
    %1500 = vmatmul.mubr.f32.gmra.mrb[0].mxu0 %v268
    %v1501 = vpop.f32.mrb[0].mxu0
    %v1502 = vadd.f32 %v323, %v1501
    %v1503 = vpop.f32.mrb[0].mxu0
    %1504 = vmatprep.mubr.f32.mxu0 0.0
    %1505 = vmatmul.mubr.f32.gmra.mrb[0].mxu0 %v269
    %v1506 = vpop.f32.mrb[0].mxu0
    %v1507 = vadd.f32 %v323, %v1506
    %v1508 = vpop.f32.mrb[0].mxu0
    %1509 = vmatprep.mubr.f32.mxu0 0.0
    %1510 = vmatmul.mubr.f32.gmra.mrb[0].mxu0 %v270
    %v1511 = vpop.f32.mrb[0].mxu0
    %v1512 = vadd.f32 %v323, %v1511
    %v1513 = vpop.f32.mrb[0].mxu0
    %1514 = vmatprep.mubr.f32.mxu0 0.0
    %1515 = vmatmul.mubr.f32.gmra.mrb[0].mxu0 %v271
    %v1516 = vpop.f32.mrb[0].mxu0
    %v1517 = vadd.f32 %v323, %v1516
    %v1518 = vpop.f32.mrb[0].mxu0
    %1519 = vmatprep.mubr.f32.mxu0 0.0
    %1520 = vmatmul.mubr.f32.gmra.mrb[0].mxu0 %v272
    %v1521 = vpop.f32.mrb[0].mxu0
    %v1522 = vadd.f32 %v323, %v1521
    %v1523 = vpop.f32.mrb[0].mxu0
    %1524 = vmatprep.mubr.f32.mxu0 0.0
    %1525 = vmatmul.mubr.f32.gmra.mrb[0].mxu0 %v273
    %v1526 = vpop.f32.mrb[0].mxu0
    %v1527 = vadd.f32 %v323, %v1526
    %v1528 = vpop.f32.mrb[0].mxu0
    %1529 = vmatprep.mubr.f32.mxu0 0.0
    %1530 = vmatmul.mubr.f32.gmra.mrb[0].mxu0 %v274
    %v1531 = vpop.f32.mrb[0].mxu0
    %v1532 = vadd.f32 %v323, %v1531
    %v1533 = vpop.f32.mrb[0].mxu0
    %1534 = vmatprep.mubr.f32.mxu0 0.0
    %1535 = vmatmul.mubr.f32.gmra.mrb[0].mxu0 %v275
    %v1536 = vpop.f32.mrb[0].mxu0
    %v1537 = vadd.f32 %v323, %v1536
    %v1538 = vpop.f32.mrb[0].mxu0
    %1539 = vmatprep.mubr.f32.mxu0 0.0
    %1540 = vmatmul.mubr.f32.gmra.mrb[0].mxu0 %v276
    %v1541 = vpop.f32.mrb[0].mxu0
    %v1542 = vadd.f32 %v323, %v1541
    %v1543 = vpop.f32.mrb[0].mxu0
    %1544 = vmatprep.mubr.f32.mxu0 0.0
    %1545 = vmatmul.mubr.f32.gmra.mrb[0].mxu0 %v277
    %v1546 = vpop.f32.mrb[0].mxu0
    %v1547 = vadd.f32 %v323, %v1546
    %v1548 = vpop.f32.mrb[0].mxu0
    %1549 = vmatprep.mubr.f32.mxu0 0.0
    %1550 = vmatmul.mubr.f32.gmra.mrb[0].mxu0 %v278
    %v1551 = vpop.f32.mrb[0].mxu0
    %v1552 = vadd.f32 %v323, %v1551
    %v1553 = vpop.f32.mrb[0].mxu0
    %1554 = vmatprep.mubr.f32.mxu0 0.0
    %1555 = vmatmul.mubr.f32.gmra.mrb[0].mxu0 %v279
    %v1556 = vpop.f32.mrb[0].mxu0
    %v1557 = vadd.f32 %v323, %v1556
    %v1558 = vpop.f32.mrb[0].mxu0
    %1559 = vmatprep.mubr.f32.mxu0 0.0
    %1560 = vmatmul.mubr.f32.gmra.mrb[0].mxu0 %v280
    %v1561 = vpop.f32.mrb[0].mxu0
    %v1562 = vadd.f32 %v323, %v1561
    %v1563 = vpop.f32.mrb[0].mxu0
    %1564 = vmatprep.mubr.f32.mxu0 0.0
    %1565 = vmatmul.mubr.f32.gmra.mrb[0].mxu0 %v281
    %v1566 = vpop.f32.mrb[0].mxu0
    %v1567 = vadd.f32 %v323, %v1566
    %v1568 = vpop.f32.mrb[0].mxu0
    %1569 = vmatprep.mubr.f32.mxu0 0.0
    %1570 = vmatmul.mubr.f32.gmra.mrb[0].mxu0 %v282
    %v1571 = vpop.f32.mrb[0].mxu0
    %v1572 = vadd.f32 %v323, %v1571
    %v1573 = vpop.f32.mrb[0].mxu0
    %1574 = vmatprep.mubr.f32.mxu0 0.0
    %1575 = vmatmul.mubr.f32.gmra.mrb[0].mxu0 %v283
    %v1576 = vpop.f32.mrb[0].mxu0
    %v1577 = vadd.f32 %v323, %v1576
    %v1578 = vpop.f32.mrb[0].mxu0
    %1579 = vmatprep.mubr.f32.mxu0 0.0
    %1580 = vmatmul.mubr.f32.gmra.mrb[0].mxu0 %v284
    %v1581 = vpop.f32.mrb[0].mxu0
    %v1582 = vadd.f32 %v323, %v1581
    %v1583 = vpop.f32.mrb[0].mxu0
    %1584 = vmatprep.mubr.f32.mxu0 0.0
    %1585 = vmatmul.mubr.f32.gmra.mrb[0].mxu0 %v285
    %v1586 = vpop.f32.mrb[0].mxu0
    %v1587 = vadd.f32 %v323, %v1586
    %v1588 = vpop.f32.mrb[0].mxu0
    %1589 = vmatprep.mubr.f32.mxu0 0.0
    %1590 = vmatmul.mubr.f32.gmra.mrb[0].mxu0 %v286
    %v1591 = vpop.f32.mrb[0].mxu0
    %v1592 = vadd.f32 %v323, %v1591
    %v1593 = vpop.f32.mrb[0].mxu0
    %1594 = vmatprep.mubr.f32.mxu0 0.0
    %1595 = vmatmul.mubr.f32.gmra.mrb[0].mxu0 %v287
    %v1596 = vpop.f32.mrb[0].mxu0
    %v1597 = vadd.f32 %v323, %v1596
    %v1598 = vpop.f32.mrb[0].mxu0
    %1599 = vmatprep.mubr.f32.mxu0 0.0
    %1600 = vmatmul.mubr.f32.gmra.mrb[0].mxu0 %v288
    %v1601 = vpop.f32.mrb[0].mxu0
    %v1602 = vadd.f32 %v323, %v1601
    %v1603 = vpop.f32.mrb[0].mxu0
    %1604 = vmatprep.mubr.f32.mxu0 0.0
    %1605 = vmatmul.mubr.f32.gmra.mrb[0].mxu0 %v289
    %v1606 = vpop.f32.mrb[0].mxu0
    %v1607 = vadd.f32 %v323, %v1606
    %v1608 = vpop.f32.mrb[0].mxu0
    %1609 = vmatprep.mubr.f32.mxu0 0.0
    %1610 = vmatmul.mubr.f32.gmra.mrb[0].mxu0 %v290
    %v1611 = vpop.f32.mrb[0].mxu0
    %v1612 = vadd.f32 %v323, %v1611
    %v1613 = vpop.f32.mrb[0].mxu0
    %1614 = vmatprep.mubr.f32.mxu0 0.0
    %1615 = vmatmul.mubr.f32.gmra.mrb[0].mxu0 %v291
    %v1616 = vpop.f32.mrb[0].mxu0
    %v1617 = vadd.f32 %v323, %v1616
    %v1618 = vpop.f32.mrb[0].mxu0
    %1619 = vmatprep.mubr.f32.mxu0 0.0
    %1620 = vmatmul.mubr.f32.gmra.mrb[0].mxu0 %v292
    %v1621 = vpop.f32.mrb[0].mxu0
    %v1622 = vadd.f32 %v323, %v1621
    %v1623 = vpop.f32.mrb[0].mxu0
    %1624 = vmatprep.mubr.f32.mxu0 0.0
    %1625 = vmatmul.mubr.f32.gmra.mrb[0].mxu0 %v293
    %v1626 = vpop.f32.mrb[0].mxu0
    %v1627 = vadd.f32 %v323, %v1626
    %v1628 = vpop.f32.mrb[0].mxu0
    %1629 = vmatprep.mubr.f32.mxu0 0.0
    %1630 = vmatmul.mubr.f32.gmra.mrb[0].mxu0 %v294
    %v1631 = vpop.f32.mrb[0].mxu0
    %v1632 = vadd.f32 %v323, %v1631
    %v1633 = vpop.f32.mrb[0].mxu0
    %1634 = vmatprep.mubr.f32.mxu0 0.0
    %1635 = vmatmul.mubr.f32.gmra.mrb[0].mxu0 %v295
    %v1636 = vpop.f32.mrb[0].mxu0
    %v1637 = vadd.f32 %v323, %v1636
    %v1638 = vpop.f32.mrb[0].mxu0
    %1639 = vmatprep.mubr.f32.mxu0 0.0
    %1640 = vmatmul.mubr.f32.gmra.mrb[0].mxu0 %v296
    %v1641 = vpop.f32.mrb[0].mxu0
    %v1642 = vadd.f32 %v323, %v1641
    %v1643 = vpop.f32.mrb[0].mxu0
    %1644 = vmatprep.mubr.f32.mxu0 0.0
    %1645 = vmatmul.mubr.f32.gmra.mrb[0].mxu0 %v297
    %v1646 = vpop.f32.mrb[0].mxu0
    %v1647 = vadd.f32 %v323, %v1646
    %v1648 = vpop.f32.mrb[0].mxu0
    %1649 = vmatprep.mubr.f32.mxu0 0.0
    %1650 = vmatmul.mubr.f32.gmra.mrb[0].mxu0 %v298
    %v1651 = vpop.f32.mrb[0].mxu0
    %v1652 = vadd.f32 %v323, %v1651
    %v1653 = vpop.f32.mrb[0].mxu0
    %1654 = vmatprep.mubr.f32.mxu0 0.0
    %1655 = vmatmul.mubr.f32.gmra.mrb[0].mxu0 %v299
    %v1656 = vpop.f32.mrb[0].mxu0
    %v1657 = vadd.f32 %v323, %v1656
    %v1658 = vpop.f32.mrb[0].mxu0
    %1659 = vmatprep.mubr.f32.mxu0 0.0
    %1660 = vmatmul.mubr.f32.gmra.mrb[0].mxu0 %v300
    %v1661 = vpop.f32.mrb[0].mxu0
    %v1662 = vadd.f32 %v323, %v1661
    %v1663 = vpop.f32.mrb[0].mxu0
    %1664 = vmatprep.mubr.f32.mxu0 0.0
    %1665 = vmatmul.mubr.f32.gmra.mrb[0].mxu0 %v301
    %v1666 = vpop.f32.mrb[0].mxu0
    %v1667 = vadd.f32 %v323, %v1666
    %v1668 = vpop.f32.mrb[0].mxu0
    %1669 = vdwg.mxu0
    %v1670 = vtanh.pop %v392
    %v1671 = vtanh.pop %v397
    %v1672 = vtanh.pop %v402
    %v1673 = vtanh.pop %v407
    %v1674 = vtanh.pop %v412
    %v1675 = vtanh.pop %v417
    %v1676 = vtanh.pop %v422
    %v1677 = vtanh.pop %v427
    %v1678 = vtanh.pop %v432
    %v1679 = vtanh.pop %v437
    %v1680 = vtanh.pop %v442
    %v1681 = vtanh.pop %v447
    %v1682 = vtanh.pop %v452
    %v1683 = vtanh.pop %v457
    %v1684 = vtanh.pop %v462
    %v1685 = vtanh.pop %v467
    %v1686 = vtanh.pop %v472
    %v1687 = vtanh.pop %v477
    %v1688 = vtanh.pop %v482
    %v1689 = vtanh.pop %v487
    %v1690 = vtanh.pop %v492
    %v1691 = vtanh.pop %v497
    %v1692 = vtanh.pop %v502
    %v1693 = vtanh.pop %v507
    %v1694 = vtanh.pop %v512
    %v1695 = vtanh.pop %v517
    %v1696 = vtanh.pop %v522
    %v1697 = vtanh.pop %v527
    %v1698 = vtanh.pop %v532
    %v1699 = vtanh.pop %v537
    %v1700 = vtanh.pop %v542
    %v1701 = vtanh.pop %v547
    %v1702 = vtanh.pop %v552
    %v1703 = vtanh.pop %v557
    %v1704 = vtanh.pop %v562
    %v1705 = vtanh.pop %v567
    %v1706 = vtanh.pop %v572
    %v1707 = vtanh.pop %v577
    %v1708 = vtanh.pop %v582
    %v1709 = vtanh.pop %v587
    %v1710 = vtanh.pop %v592
    %v1711 = vtanh.pop %v597
    %v1712 = vtanh.pop %v602
    %v1713 = vtanh.pop %v607
    %v1714 = vtanh.pop %v612
    %v1715 = vtanh.pop %v617
    %v1716 = vtanh.pop %v622
    %v1717 = vtanh.pop %v627
    %v1718 = vtanh.pop %v632
    %v1719 = vtanh.pop %v637
    %v1720 = vtanh.pop %v642
    %v1721 = vtanh.pop %v647
    %v1722 = vtanh.pop %v652
    %v1723 = vtanh.pop %v657
    %v1724 = vtanh.pop %v662
    %v1725 = vtanh.pop %v667
    %v1726 = vtanh.pop %v672
    %v1727 = vtanh.pop %v677
    %v1728 = vtanh.pop %v682
    %v1729 = vtanh.pop %v687
    %v1730 = vtanh.pop %v692
    %v1731 = vtanh.pop %v697
    %v1732 = vtanh.pop %v702
    %v1733 = vtanh.pop %v707
    %v1734 = vtanh.pop %v712
    %v1735 = vtanh.pop %v717
    %v1736 = vtanh.pop %v722
    %v1737 = vtanh.pop %v727
    %v1738 = vtanh.pop %v732
    %v1739 = vtanh.pop %v737
    %v1740 = vtanh.pop %v742
    %v1741 = vtanh.pop %v747
    %v1742 = vtanh.pop %v752
    %v1743 = vtanh.pop %v757
    %v1744 = vtanh.pop %v762
    %v1745 = vtanh.pop %v767
    %v1746 = vtanh.pop %v772
    %v1747 = vtanh.pop %v777
    %v1748 = vtanh.pop %v782
    %v1749 = vtanh.pop %v787
    %v1750 = vtanh.pop %v792
    %v1751 = vtanh.pop %v797
    %v1752 = vtanh.pop %v802
    %v1753 = vtanh.pop %v807
    %v1754 = vtanh.pop %v812
    %v1755 = vtanh.pop %v817
    %v1756 = vtanh.pop %v822
    %v1757 = vtanh.pop %v827
    %v1758 = vtanh.pop %v832
    %v1759 = vtanh.pop %v837
    %v1760 = vtanh.pop %v842
    %v1761 = vtanh.pop %v847
    %v1762 = vtanh.pop %v852
    %v1763 = vtanh.pop %v857
    %v1764 = vtanh.pop %v862
    %v1765 = vtanh.pop %v867
    %v1766 = vtanh.pop %v872
    %v1767 = vtanh.pop %v877
    %v1768 = vtanh.pop %v882
    %v1769 = vtanh.pop %v887
    %v1770 = vtanh.pop %v892
    %v1771 = vtanh.pop %v897
    %v1772 = vtanh.pop %v902
    %v1773 = vtanh.pop %v907
    %v1774 = vtanh.pop %v912
    %v1775 = vtanh.pop %v917
    %v1776 = vtanh.pop %v922
    %v1777 = vtanh.pop %v927
    %v1778 = vtanh.pop %v932
    %v1779 = vtanh.pop %v937
    %v1780 = vtanh.pop %v942
    %v1781 = vtanh.pop %v947
    %v1782 = vtanh.pop %v952
    %v1783 = vtanh.pop %v957
    %v1784 = vtanh.pop %v962
    %v1785 = vtanh.pop %v967
    %v1786 = vtanh.pop %v972
    %v1787 = vtanh.pop %v977
    %v1788 = vtanh.pop %v982
    %v1789 = vtanh.pop %v987
    %v1790 = vtanh.pop %v992
    %v1791 = vtanh.pop %v997
    %v1792 = vtanh.pop %v1002
    %v1793 = vtanh.pop %v1007
    %v1794 = vtanh.pop %v1012
    %v1795 = vtanh.pop %v1017
    %v1796 = vtanh.pop %v1022
    %v1797 = vtanh.pop %v1027
    %v1798 = vtanh.pop %v1032
    %v1799 = vtanh.pop %v1037
    %v1800 = vtanh.pop %v1042
    %v1801 = vtanh.pop %v1047
    %v1802 = vtanh.pop %v1052
    %v1803 = vtanh.pop %v1057
    %v1804 = vtanh.pop %v1062
    %v1805 = vtanh.pop %v1067
    %v1806 = vtanh.pop %v1072
    %v1807 = vtanh.pop %v1077
    %v1808 = vtanh.pop %v1082
    %v1809 = vtanh.pop %v1087
    %v1810 = vtanh.pop %v1092
    %v1811 = vtanh.pop %v1097
    %v1812 = vtanh.pop %v1102
    %v1813 = vtanh.pop %v1107
    %v1814 = vtanh.pop %v1112
    %v1815 = vtanh.pop %v1117
    %v1816 = vtanh.pop %v1122
    %v1817 = vtanh.pop %v1127
    %v1818 = vtanh.pop %v1132
    %v1819 = vtanh.pop %v1137
    %v1820 = vtanh.pop %v1142
    %v1821 = vtanh.pop %v1147
    %v1822 = vtanh.pop %v1152
    %v1823 = vtanh.pop %v1157
    %v1824 = vtanh.pop %v1162
    %v1825 = vtanh.pop %v1167
    %v1826 = vtanh.pop %v1172
    %v1827 = vtanh.pop %v1177
    %v1828 = vtanh.pop %v1182
    %v1829 = vtanh.pop %v1187
    %v1830 = vtanh.pop %v1192
    %v1831 = vtanh.pop %v1197
    %v1832 = vtanh.pop %v1202
    %v1833 = vtanh.pop %v1207
    %v1834 = vtanh.pop %v1212
    %v1835 = vtanh.pop %v1217
    %v1836 = vtanh.pop %v1222
    %v1837 = vtanh.pop %v1227
    %v1838 = vtanh.pop %v1232
    %v1839 = vtanh.pop %v1237
    %v1840 = vtanh.pop %v1242
    %v1841 = vtanh.pop %v1247
    %v1842 = vtanh.pop %v1252
    %v1843 = vtanh.pop %v1257
    %v1844 = vtanh.pop %v1262
    %v1845 = vtanh.pop %v1267
    %v1846 = vtanh.pop %v1272
    %v1847 = vtanh.pop %v1277
    %v1848 = vtanh.pop %v1282
    %v1849 = vtanh.pop %v1287
    %v1850 = vtanh.pop %v1292
    %v1851 = vtanh.pop %v1297
    %v1852 = vtanh.pop %v1302
    %v1853 = vtanh.pop %v1307
    %v1854 = vtanh.pop %v1312
    %v1855 = vtanh.pop %v1317
    %v1856 = vtanh.pop %v1322
    %v1857 = vtanh.pop %v1327
    %v1858 = vtanh.pop %v1332
    %v1859 = vtanh.pop %v1337
    %v1860 = vtanh.pop %v1342
    %v1861 = vtanh.pop %v1347
    %v1862 = vtanh.pop %v1352
    %v1863 = vtanh.pop %v1357
    %v1864 = vtanh.pop %v1362
    %v1865 = vtanh.pop %v1367
    %v1866 = vtanh.pop %v1372
    %v1867 = vtanh.pop %v1377
    %v1868 = vtanh.pop %v1382
    %v1869 = vtanh.pop %v1387
    %v1870 = vtanh.pop %v1392
    %v1871 = vtanh.pop %v1397
    %v1872 = vtanh.pop %v1402
    %v1873 = vtanh.pop %v1407
    %v1874 = vtanh.pop %v1412
    %v1875 = vtanh.pop %v1417
    %v1876 = vtanh.pop %v1422
    %v1877 = vtanh.pop %v1427
    %v1878 = vtanh.pop %v1432
    %v1879 = vtanh.pop %v1437
    %v1880 = vtanh.pop %v1442
    %v1881 = vtanh.pop %v1447
    %v1882 = vtanh.pop %v1452
    %v1883 = vtanh.pop %v1457
    %v1884 = vtanh.pop %v1462
    %v1885 = vtanh.pop %v1467
    %v1886 = vtanh.pop %v1472
    %v1887 = vtanh.pop %v1477
    %v1888 = vtanh.pop %v1482
    %v1889 = vtanh.pop %v1487
    %v1890 = vtanh.pop %v1492
    %v1891 = vtanh.pop %v1497
    %v1892 = vtanh.pop %v1502
    %v1893 = vtanh.pop %v1507
    %v1894 = vtanh.pop %v1512
    %v1895 = vtanh.pop %v1517
    %v1896 = vtanh.pop %v1522
    %v1897 = vtanh.pop %v1527
    %v1898 = vtanh.pop %v1532
    %v1899 = vtanh.pop %v1537
    %v1900 = vtanh.pop %v1542
    %v1901 = vtanh.pop %v1547
    %v1902 = vtanh.pop %v1552
    %v1903 = vtanh.pop %v1557
    %v1904 = vtanh.pop %v1562
    %v1905 = vtanh.pop %v1567
    %v1906 = vtanh.pop %v1572
    %v1907 = vtanh.pop %v1577
    %v1908 = vtanh.pop %v1582
    %v1909 = vtanh.pop %v1587
    %v1910 = vtanh.pop %v1592
    %v1911 = vtanh.pop %v1597
    %v1912 = vtanh.pop %v1602
    %v1913 = vtanh.pop %v1607
    %v1914 = vtanh.pop %v1612
    %v1915 = vtanh.pop %v1617
    %v1916 = vtanh.pop %v1622
    %v1917 = vtanh.pop %v1627
    %v1918 = vtanh.pop %v1632
    %v1919 = vtanh.pop %v1637
    %v1920 = vtanh.pop %v1642
    %v1921 = vtanh.pop %v1647
    %v1922 = vtanh.pop %v1652
    %v1923 = vtanh.pop %v1657
    %v1924 = vtanh.pop %v1662
    %v1925 = vtanh.pop %v1667
    %v1926 = vld [vmem:[%s3] sm:$0x1]
    %v1928 = vlaneseq
    %v1929 = vshrl.u32 %v1928, 7
    %v1930 = vsub.s32 0, %v1929
    %v1931 = vrot.slane %v1926, %v1930
    %v1933 = vmul.f32 %v1670, %v1931
    %v1934 = vmul.f32 %v1671, %v1931
    %v1935 = vmul.f32 %v1672, %v1931
    %v1936 = vmul.f32 %v1673, %v1931
    %v1937 = vmul.f32 %v1674, %v1931
    %v1938 = vmul.f32 %v1675, %v1931
    %v1939 = vmul.f32 %v1676, %v1931
    %v1940 = vmul.f32 %v1677, %v1931
    %v1941 = vmul.f32 %v1678, %v1931
    %v1942 = vmul.f32 %v1679, %v1931
    %v1943 = vmul.f32 %v1680, %v1931
    %v1944 = vmul.f32 %v1681, %v1931
    %v1945 = vmul.f32 %v1682, %v1931
    %v1946 = vmul.f32 %v1683, %v1931
    %v1947 = vmul.f32 %v1684, %v1931
    %v1948 = vmul.f32 %v1685, %v1931
    %v1949 = vmul.f32 %v1686, %v1931
    %v1950 = vmul.f32 %v1687, %v1931
    %v1951 = vmul.f32 %v1688, %v1931
    %v1952 = vmul.f32 %v1689, %v1931
    %v1953 = vmul.f32 %v1690, %v1931
    %v1954 = vmul.f32 %v1691, %v1931
    %v1955 = vmul.f32 %v1692, %v1931
    %v1956 = vmul.f32 %v1693, %v1931
    %v1957 = vmul.f32 %v1694, %v1931
    %v1958 = vmul.f32 %v1695, %v1931
    %v1959 = vmul.f32 %v1696, %v1931
    %v1960 = vmul.f32 %v1697, %v1931
    %v1961 = vmul.f32 %v1698, %v1931
    %v1962 = vmul.f32 %v1699, %v1931
    %v1963 = vmul.f32 %v1700, %v1931
    %v1964 = vmul.f32 %v1701, %v1931
    %v1965 = vmul.f32 %v1702, %v1931
    %v1966 = vmul.f32 %v1703, %v1931
    %v1967 = vmul.f32 %v1704, %v1931
    %v1968 = vmul.f32 %v1705, %v1931
    %v1969 = vmul.f32 %v1706, %v1931
    %v1970 = vmul.f32 %v1707, %v1931
    %v1971 = vmul.f32 %v1708, %v1931
    %v1972 = vmul.f32 %v1709, %v1931
    %v1973 = vmul.f32 %v1710, %v1931
    %v1974 = vmul.f32 %v1711, %v1931
    %v1975 = vmul.f32 %v1712, %v1931
    %v1976 = vmul.f32 %v1713, %v1931
    %v1977 = vmul.f32 %v1714, %v1931
    %v1978 = vmul.f32 %v1715, %v1931
    %v1979 = vmul.f32 %v1716, %v1931
    %v1980 = vmul.f32 %v1717, %v1931
    %v1981 = vmul.f32 %v1718, %v1931
    %v1982 = vmul.f32 %v1719, %v1931
    %v1983 = vmul.f32 %v1720, %v1931
    %v1984 = vmul.f32 %v1721, %v1931
    %v1985 = vmul.f32 %v1722, %v1931
    %v1986 = vmul.f32 %v1723, %v1931
    %v1987 = vmul.f32 %v1724, %v1931
    %v1988 = vmul.f32 %v1725, %v1931
    %v1989 = vmul.f32 %v1726, %v1931
    %v1990 = vmul.f32 %v1727, %v1931
    %v1991 = vmul.f32 %v1728, %v1931
    %v1992 = vmul.f32 %v1729, %v1931
    %v1993 = vmul.f32 %v1730, %v1931
    %v1994 = vmul.f32 %v1731, %v1931
    %v1995 = vmul.f32 %v1732, %v1931
    %v1996 = vmul.f32 %v1733, %v1931
    %v1997 = vmul.f32 %v1734, %v1931
    %v1998 = vmul.f32 %v1735, %v1931
    %v1999 = vmul.f32 %v1736, %v1931
    %v2000 = vmul.f32 %v1737, %v1931
    %v2001 = vmul.f32 %v1738, %v1931
    %v2002 = vmul.f32 %v1739, %v1931
    %v2003 = vmul.f32 %v1740, %v1931
    %v2004 = vmul.f32 %v1741, %v1931
    %v2005 = vmul.f32 %v1742, %v1931
    %v2006 = vmul.f32 %v1743, %v1931
    %v2007 = vmul.f32 %v1744, %v1931
    %v2008 = vmul.f32 %v1745, %v1931
    %v2009 = vmul.f32 %v1746, %v1931
    %v2010 = vmul.f32 %v1747, %v1931
    %v2011 = vmul.f32 %v1748, %v1931
    %v2012 = vmul.f32 %v1749, %v1931
    %v2013 = vmul.f32 %v1750, %v1931
    %v2014 = vmul.f32 %v1751, %v1931
    %v2015 = vmul.f32 %v1752, %v1931
    %v2016 = vmul.f32 %v1753, %v1931
    %v2017 = vmul.f32 %v1754, %v1931
    %v2018 = vmul.f32 %v1755, %v1931
    %v2019 = vmul.f32 %v1756, %v1931
    %v2020 = vmul.f32 %v1757, %v1931
    %v2021 = vmul.f32 %v1758, %v1931
    %v2022 = vmul.f32 %v1759, %v1931
    %v2023 = vmul.f32 %v1760, %v1931
    %v2024 = vmul.f32 %v1761, %v1931
    %v2025 = vmul.f32 %v1762, %v1931
    %v2026 = vmul.f32 %v1763, %v1931
    %v2027 = vmul.f32 %v1764, %v1931
    %v2028 = vmul.f32 %v1765, %v1931
    %v2029 = vmul.f32 %v1766, %v1931
    %v2030 = vmul.f32 %v1767, %v1931
    %v2031 = vmul.f32 %v1768, %v1931
    %v2032 = vmul.f32 %v1769, %v1931
    %v2033 = vmul.f32 %v1770, %v1931
    %v2034 = vmul.f32 %v1771, %v1931
    %v2035 = vmul.f32 %v1772, %v1931
    %v2036 = vmul.f32 %v1773, %v1931
    %v2037 = vmul.f32 %v1774, %v1931
    %v2038 = vmul.f32 %v1775, %v1931
    %v2039 = vmul.f32 %v1776, %v1931
    %v2040 = vmul.f32 %v1777, %v1931
    %v2041 = vmul.f32 %v1778, %v1931
    %v2042 = vmul.f32 %v1779, %v1931
    %v2043 = vmul.f32 %v1780, %v1931
    %v2044 = vmul.f32 %v1781, %v1931
    %v2045 = vmul.f32 %v1782, %v1931
    %v2046 = vmul.f32 %v1783, %v1931
    %v2047 = vmul.f32 %v1784, %v1931
    %v2048 = vmul.f32 %v1785, %v1931
    %v2049 = vmul.f32 %v1786, %v1931
    %v2050 = vmul.f32 %v1787, %v1931
    %v2051 = vmul.f32 %v1788, %v1931
    %v2052 = vmul.f32 %v1789, %v1931
    %v2053 = vmul.f32 %v1790, %v1931
    %v2054 = vmul.f32 %v1791, %v1931
    %v2055 = vmul.f32 %v1792, %v1931
    %v2056 = vmul.f32 %v1793, %v1931
    %v2057 = vmul.f32 %v1794, %v1931
    %v2058 = vmul.f32 %v1795, %v1931
    %v2059 = vmul.f32 %v1796, %v1931
    %v2060 = vmul.f32 %v1797, %v1931
    %v2061 = vmul.f32 %v1798, %v1931
    %v2062 = vmul.f32 %v1799, %v1931
    %v2063 = vmul.f32 %v1800, %v1931
    %v2064 = vmul.f32 %v1801, %v1931
    %v2065 = vmul.f32 %v1802, %v1931
    %v2066 = vmul.f32 %v1803, %v1931
    %v2067 = vmul.f32 %v1804, %v1931
    %v2068 = vmul.f32 %v1805, %v1931
    %v2069 = vmul.f32 %v1806, %v1931
    %v2070 = vmul.f32 %v1807, %v1931
    %v2071 = vmul.f32 %v1808, %v1931
    %v2072 = vmul.f32 %v1809, %v1931
    %v2073 = vmul.f32 %v1810, %v1931
    %v2074 = vmul.f32 %v1811, %v1931
    %v2075 = vmul.f32 %v1812, %v1931
    %v2076 = vmul.f32 %v1813, %v1931
    %v2077 = vmul.f32 %v1814, %v1931
    %v2078 = vmul.f32 %v1815, %v1931
    %v2079 = vmul.f32 %v1816, %v1931
    %v2080 = vmul.f32 %v1817, %v1931
    %v2081 = vmul.f32 %v1818, %v1931
    %v2082 = vmul.f32 %v1819, %v1931
    %v2083 = vmul.f32 %v1820, %v1931
    %v2084 = vmul.f32 %v1821, %v1931
    %v2085 = vmul.f32 %v1822, %v1931
    %v2086 = vmul.f32 %v1823, %v1931
    %v2087 = vmul.f32 %v1824, %v1931
    %v2088 = vmul.f32 %v1825, %v1931
    %v2089 = vmul.f32 %v1826, %v1931
    %v2090 = vmul.f32 %v1827, %v1931
    %v2091 = vmul.f32 %v1828, %v1931
    %v2092 = vmul.f32 %v1829, %v1931
    %v2093 = vmul.f32 %v1830, %v1931
    %v2094 = vmul.f32 %v1831, %v1931
    %v2095 = vmul.f32 %v1832, %v1931
    %v2096 = vmul.f32 %v1833, %v1931
    %v2097 = vmul.f32 %v1834, %v1931
    %v2098 = vmul.f32 %v1835, %v1931
    %v2099 = vmul.f32 %v1836, %v1931
    %v2100 = vmul.f32 %v1837, %v1931
    %v2101 = vmul.f32 %v1838, %v1931
    %v2102 = vmul.f32 %v1839, %v1931
    %v2103 = vmul.f32 %v1840, %v1931
    %v2104 = vmul.f32 %v1841, %v1931
    %v2105 = vmul.f32 %v1842, %v1931
    %v2106 = vmul.f32 %v1843, %v1931
    %v2107 = vmul.f32 %v1844, %v1931
    %v2108 = vmul.f32 %v1845, %v1931
    %v2109 = vmul.f32 %v1846, %v1931
    %v2110 = vmul.f32 %v1847, %v1931
    %v2111 = vmul.f32 %v1848, %v1931
    %v2112 = vmul.f32 %v1849, %v1931
    %v2113 = vmul.f32 %v1850, %v1931
    %v2114 = vmul.f32 %v1851, %v1931
    %v2115 = vmul.f32 %v1852, %v1931
    %v2116 = vmul.f32 %v1853, %v1931
    %v2117 = vmul.f32 %v1854, %v1931
    %v2118 = vmul.f32 %v1855, %v1931
    %v2119 = vmul.f32 %v1856, %v1931
    %v2120 = vmul.f32 %v1857, %v1931
    %v2121 = vmul.f32 %v1858, %v1931
    %v2122 = vmul.f32 %v1859, %v1931
    %v2123 = vmul.f32 %v1860, %v1931
    %v2124 = vmul.f32 %v1861, %v1931
    %v2125 = vmul.f32 %v1862, %v1931
    %v2126 = vmul.f32 %v1863, %v1931
    %v2127 = vmul.f32 %v1864, %v1931
    %v2128 = vmul.f32 %v1865, %v1931
    %v2129 = vmul.f32 %v1866, %v1931
    %v2130 = vmul.f32 %v1867, %v1931
    %v2131 = vmul.f32 %v1868, %v1931
    %v2132 = vmul.f32 %v1869, %v1931
    %v2133 = vmul.f32 %v1870, %v1931
    %v2134 = vmul.f32 %v1871, %v1931
    %v2135 = vmul.f32 %v1872, %v1931
    %v2136 = vmul.f32 %v1873, %v1931
    %v2137 = vmul.f32 %v1874, %v1931
    %v2138 = vmul.f32 %v1875, %v1931
    %v2139 = vmul.f32 %v1876, %v1931
    %v2140 = vmul.f32 %v1877, %v1931
    %v2141 = vmul.f32 %v1878, %v1931
    %v2142 = vmul.f32 %v1879, %v1931
    %v2143 = vmul.f32 %v1880, %v1931
    %v2144 = vmul.f32 %v1881, %v1931
    %v2145 = vmul.f32 %v1882, %v1931
    %v2146 = vmul.f32 %v1883, %v1931
    %v2147 = vmul.f32 %v1884, %v1931
    %v2148 = vmul.f32 %v1885, %v1931
    %v2149 = vmul.f32 %v1886, %v1931
    %v2150 = vmul.f32 %v1887, %v1931
    %v2151 = vmul.f32 %v1888, %v1931
    %v2152 = vmul.f32 %v1889, %v1931
    %v2153 = vmul.f32 %v1890, %v1931
    %v2154 = vmul.f32 %v1891, %v1931
    %v2155 = vmul.f32 %v1892, %v1931
    %v2156 = vmul.f32 %v1893, %v1931
    %v2157 = vmul.f32 %v1894, %v1931
    %v2158 = vmul.f32 %v1895, %v1931
    %v2159 = vmul.f32 %v1896, %v1931
    %v2160 = vmul.f32 %v1897, %v1931
    %v2161 = vmul.f32 %v1898, %v1931
    %v2162 = vmul.f32 %v1899, %v1931
    %v2163 = vmul.f32 %v1900, %v1931
    %v2164 = vmul.f32 %v1901, %v1931
    %v2165 = vmul.f32 %v1902, %v1931
    %v2166 = vmul.f32 %v1903, %v1931
    %v2167 = vmul.f32 %v1904, %v1931
    %v2168 = vmul.f32 %v1905, %v1931
    %v2169 = vmul.f32 %v1906, %v1931
    %v2170 = vmul.f32 %v1907, %v1931
    %v2171 = vmul.f32 %v1908, %v1931
    %v2172 = vmul.f32 %v1909, %v1931
    %v2173 = vmul.f32 %v1910, %v1931
    %v2174 = vmul.f32 %v1911, %v1931
    %v2175 = vmul.f32 %v1912, %v1931
    %v2176 = vmul.f32 %v1913, %v1931
    %v2177 = vmul.f32 %v1914, %v1931
    %v2178 = vmul.f32 %v1915, %v1931
    %v2179 = vmul.f32 %v1916, %v1931
    %v2180 = vmul.f32 %v1917, %v1931
    %v2181 = vmul.f32 %v1918, %v1931
    %v2182 = vmul.f32 %v1919, %v1931
    %v2183 = vmul.f32 %v1920, %v1931
    %v2184 = vmul.f32 %v1921, %v1931
    %v2185 = vmul.f32 %v1922, %v1931
    %v2186 = vmul.f32 %v1923, %v1931
    %v2187 = vmul.f32 %v1924, %v1931
    %v2188 = vmul.f32 %v1925, %v1931
    %v2189 = vadd.f32 %v1933, %v1934
    %v2190 = vadd.f32 %v2189, %v1935
    %v2191 = vadd.f32 %v2190, %v1936
    %v2192 = vadd.f32 %v2191, %v1937
    %v2193 = vadd.f32 %v2192, %v1938
    %v2194 = vadd.f32 %v2193, %v1939
    %v2195 = vadd.f32 %v2194, %v1940
    %v2196 = vadd.f32 %v2195, %v1941
    %v2197 = vadd.f32 %v2196, %v1942
    %v2198 = vadd.f32 %v2197, %v1943
    %v2199 = vadd.f32 %v2198, %v1944
    %v2200 = vadd.f32 %v2199, %v1945
    %v2201 = vadd.f32 %v2200, %v1946
    %v2202 = vadd.f32 %v2201, %v1947
    %v2203 = vadd.f32 %v2202, %v1948
    %v2204 = vadd.f32 %v2203, %v1949
    %v2205 = vadd.f32 %v2204, %v1950
    %v2206 = vadd.f32 %v2205, %v1951
    %v2207 = vadd.f32 %v2206, %v1952
    %v2208 = vadd.f32 %v2207, %v1953
    %v2209 = vadd.f32 %v2208, %v1954
    %v2210 = vadd.f32 %v2209, %v1955
    %v2211 = vadd.f32 %v2210, %v1956
    %v2212 = vadd.f32 %v2211, %v1957
    %v2213 = vadd.f32 %v2212, %v1958
    %v2214 = vadd.f32 %v2213, %v1959
    %v2215 = vadd.f32 %v2214, %v1960
    %v2216 = vadd.f32 %v2215, %v1961
    %v2217 = vadd.f32 %v2216, %v1962
    %v2218 = vadd.f32 %v2217, %v1963
    %v2219 = vadd.f32 %v2218, %v1964
    %v2220 = vadd.f32 %v2219, %v1965
    %v2221 = vadd.f32 %v2220, %v1966
    %v2222 = vadd.f32 %v2221, %v1967
    %v2223 = vadd.f32 %v2222, %v1968
    %v2224 = vadd.f32 %v2223, %v1969
    %v2225 = vadd.f32 %v2224, %v1970
    %v2226 = vadd.f32 %v2225, %v1971
    %v2227 = vadd.f32 %v2226, %v1972
    %v2228 = vadd.f32 %v2227, %v1973
    %v2229 = vadd.f32 %v2228, %v1974
    %v2230 = vadd.f32 %v2229, %v1975
    %v2231 = vadd.f32 %v2230, %v1976
    %v2232 = vadd.f32 %v2231, %v1977
    %v2233 = vadd.f32 %v2232, %v1978
    %v2234 = vadd.f32 %v2233, %v1979
    %v2235 = vadd.f32 %v2234, %v1980
    %v2236 = vadd.f32 %v2235, %v1981
    %v2237 = vadd.f32 %v2236, %v1982
    %v2238 = vadd.f32 %v2237, %v1983
    %v2239 = vadd.f32 %v2238, %v1984
    %v2240 = vadd.f32 %v2239, %v1985
    %v2241 = vadd.f32 %v2240, %v1986
    %v2242 = vadd.f32 %v2241, %v1987
    %v2243 = vadd.f32 %v2242, %v1988
    %v2244 = vadd.f32 %v2243, %v1989
    %v2245 = vadd.f32 %v2244, %v1990
    %v2246 = vadd.f32 %v2245, %v1991
    %v2247 = vadd.f32 %v2246, %v1992
    %v2248 = vadd.f32 %v2247, %v1993
    %v2249 = vadd.f32 %v2248, %v1994
    %v2250 = vadd.f32 %v2249, %v1995
    %v2251 = vadd.f32 %v2250, %v1996
    %v2252 = vadd.f32 %v2251, %v1997
    %v2253 = vadd.f32 %v2252, %v1998
    %v2254 = vadd.f32 %v2253, %v1999
    %v2255 = vadd.f32 %v2254, %v2000
    %v2256 = vadd.f32 %v2255, %v2001
    %v2257 = vadd.f32 %v2256, %v2002
    %v2258 = vadd.f32 %v2257, %v2003
    %v2259 = vadd.f32 %v2258, %v2004
    %v2260 = vadd.f32 %v2259, %v2005
    %v2261 = vadd.f32 %v2260, %v2006
    %v2262 = vadd.f32 %v2261, %v2007
    %v2263 = vadd.f32 %v2262, %v2008
    %v2264 = vadd.f32 %v2263, %v2009
    %v2265 = vadd.f32 %v2264, %v2010
    %v2266 = vadd.f32 %v2265, %v2011
    %v2267 = vadd.f32 %v2266, %v2012
    %v2268 = vadd.f32 %v2267, %v2013
    %v2269 = vadd.f32 %v2268, %v2014
    %v2270 = vadd.f32 %v2269, %v2015
    %v2271 = vadd.f32 %v2270, %v2016
    %v2272 = vadd.f32 %v2271, %v2017
    %v2273 = vadd.f32 %v2272, %v2018
    %v2274 = vadd.f32 %v2273, %v2019
    %v2275 = vadd.f32 %v2274, %v2020
    %v2276 = vadd.f32 %v2275, %v2021
    %v2277 = vadd.f32 %v2276, %v2022
    %v2278 = vadd.f32 %v2277, %v2023
    %v2279 = vadd.f32 %v2278, %v2024
    %v2280 = vadd.f32 %v2279, %v2025
    %v2281 = vadd.f32 %v2280, %v2026
    %v2282 = vadd.f32 %v2281, %v2027
    %v2283 = vadd.f32 %v2282, %v2028
    %v2284 = vadd.f32 %v2283, %v2029
    %v2285 = vadd.f32 %v2284, %v2030
    %v2286 = vadd.f32 %v2285, %v2031
    %v2287 = vadd.f32 %v2286, %v2032
    %v2288 = vadd.f32 %v2287, %v2033
    %v2289 = vadd.f32 %v2288, %v2034
    %v2290 = vadd.f32 %v2289, %v2035
    %v2291 = vadd.f32 %v2290, %v2036
    %v2292 = vadd.f32 %v2291, %v2037
    %v2293 = vadd.f32 %v2292, %v2038
    %v2294 = vadd.f32 %v2293, %v2039
    %v2295 = vadd.f32 %v2294, %v2040
    %v2296 = vadd.f32 %v2295, %v2041
    %v2297 = vadd.f32 %v2296, %v2042
    %v2298 = vadd.f32 %v2297, %v2043
    %v2299 = vadd.f32 %v2298, %v2044
    %v2300 = vadd.f32 %v2299, %v2045
    %v2301 = vadd.f32 %v2300, %v2046
    %v2302 = vadd.f32 %v2301, %v2047
    %v2303 = vadd.f32 %v2302, %v2048
    %v2304 = vadd.f32 %v2303, %v2049
    %v2305 = vadd.f32 %v2304, %v2050
    %v2306 = vadd.f32 %v2305, %v2051
    %v2307 = vadd.f32 %v2306, %v2052
    %v2308 = vadd.f32 %v2307, %v2053
    %v2309 = vadd.f32 %v2308, %v2054
    %v2310 = vadd.f32 %v2309, %v2055
    %v2311 = vadd.f32 %v2310, %v2056
    %v2312 = vadd.f32 %v2311, %v2057
    %v2313 = vadd.f32 %v2312, %v2058
    %v2314 = vadd.f32 %v2313, %v2059
    %v2315 = vadd.f32 %v2314, %v2060
    %v2316 = vadd.f32 %v2315, %v2061
    %v2317 = vadd.f32 %v2316, %v2062
    %v2318 = vadd.f32 %v2317, %v2063
    %v2319 = vadd.f32 %v2318, %v2064
    %v2320 = vadd.f32 %v2319, %v2065
    %v2321 = vadd.f32 %v2320, %v2066
    %v2322 = vadd.f32 %v2321, %v2067
    %v2323 = vadd.f32 %v2322, %v2068
    %v2324 = vadd.f32 %v2323, %v2069
    %v2325 = vadd.f32 %v2324, %v2070
    %v2326 = vadd.f32 %v2325, %v2071
    %v2327 = vadd.f32 %v2326, %v2072
    %v2328 = vadd.f32 %v2327, %v2073
    %v2329 = vadd.f32 %v2328, %v2074
    %v2330 = vadd.f32 %v2329, %v2075
    %v2331 = vadd.f32 %v2330, %v2076
    %v2332 = vadd.f32 %v2331, %v2077
    %v2333 = vadd.f32 %v2332, %v2078
    %v2334 = vadd.f32 %v2333, %v2079
    %v2335 = vadd.f32 %v2334, %v2080
    %v2336 = vadd.f32 %v2335, %v2081
    %v2337 = vadd.f32 %v2336, %v2082
    %v2338 = vadd.f32 %v2337, %v2083
    %v2339 = vadd.f32 %v2338, %v2084
    %v2340 = vadd.f32 %v2339, %v2085
    %v2341 = vadd.f32 %v2340, %v2086
    %v2342 = vadd.f32 %v2341, %v2087
    %v2343 = vadd.f32 %v2342, %v2088
    %v2344 = vadd.f32 %v2343, %v2089
    %v2345 = vadd.f32 %v2344, %v2090
    %v2346 = vadd.f32 %v2345, %v2091
    %v2347 = vadd.f32 %v2346, %v2092
    %v2348 = vadd.f32 %v2347, %v2093
    %v2349 = vadd.f32 %v2348, %v2094
    %v2350 = vadd.f32 %v2349, %v2095
    %v2351 = vadd.f32 %v2350, %v2096
    %v2352 = vadd.f32 %v2351, %v2097
    %v2353 = vadd.f32 %v2352, %v2098
    %v2354 = vadd.f32 %v2353, %v2099
    %v2355 = vadd.f32 %v2354, %v2100
    %v2356 = vadd.f32 %v2355, %v2101
    %v2357 = vadd.f32 %v2356, %v2102
    %v2358 = vadd.f32 %v2357, %v2103
    %v2359 = vadd.f32 %v2358, %v2104
    %v2360 = vadd.f32 %v2359, %v2105
    %v2361 = vadd.f32 %v2360, %v2106
    %v2362 = vadd.f32 %v2361, %v2107
    %v2363 = vadd.f32 %v2362, %v2108
    %v2364 = vadd.f32 %v2363, %v2109
    %v2365 = vadd.f32 %v2364, %v2110
    %v2366 = vadd.f32 %v2365, %v2111
    %v2367 = vadd.f32 %v2366, %v2112
    %v2368 = vadd.f32 %v2367, %v2113
    %v2369 = vadd.f32 %v2368, %v2114
    %v2370 = vadd.f32 %v2369, %v2115
    %v2371 = vadd.f32 %v2370, %v2116
    %v2372 = vadd.f32 %v2371, %v2117
    %v2373 = vadd.f32 %v2372, %v2118
    %v2374 = vadd.f32 %v2373, %v2119
    %v2375 = vadd.f32 %v2374, %v2120
    %v2376 = vadd.f32 %v2375, %v2121
    %v2377 = vadd.f32 %v2376, %v2122
    %v2378 = vadd.f32 %v2377, %v2123
    %v2379 = vadd.f32 %v2378, %v2124
    %v2380 = vadd.f32 %v2379, %v2125
    %v2381 = vadd.f32 %v2380, %v2126
    %v2382 = vadd.f32 %v2381, %v2127
    %v2383 = vadd.f32 %v2382, %v2128
    %v2384 = vadd.f32 %v2383, %v2129
    %v2385 = vadd.f32 %v2384, %v2130
    %v2386 = vadd.f32 %v2385, %v2131
    %v2387 = vadd.f32 %v2386, %v2132
    %v2388 = vadd.f32 %v2387, %v2133
    %v2389 = vadd.f32 %v2388, %v2134
    %v2390 = vadd.f32 %v2389, %v2135
    %v2391 = vadd.f32 %v2390, %v2136
    %v2392 = vadd.f32 %v2391, %v2137
    %v2393 = vadd.f32 %v2392, %v2138
    %v2394 = vadd.f32 %v2393, %v2139
    %v2395 = vadd.f32 %v2394, %v2140
    %v2396 = vadd.f32 %v2395, %v2141
    %v2397 = vadd.f32 %v2396, %v2142
    %v2398 = vadd.f32 %v2397, %v2143
    %v2399 = vadd.f32 %v2398, %v2144
    %v2400 = vadd.f32 %v2399, %v2145
    %v2401 = vadd.f32 %v2400, %v2146
    %v2402 = vadd.f32 %v2401, %v2147
    %v2403 = vadd.f32 %v2402, %v2148
    %v2404 = vadd.f32 %v2403, %v2149
    %v2405 = vadd.f32 %v2404, %v2150
    %v2406 = vadd.f32 %v2405, %v2151
    %v2407 = vadd.f32 %v2406, %v2152
    %v2408 = vadd.f32 %v2407, %v2153
    %v2409 = vadd.f32 %v2408, %v2154
    %v2410 = vadd.f32 %v2409, %v2155
    %v2411 = vadd.f32 %v2410, %v2156
    %v2412 = vadd.f32 %v2411, %v2157
    %v2413 = vadd.f32 %v2412, %v2158
    %v2414 = vadd.f32 %v2413, %v2159
    %v2415 = vadd.f32 %v2414, %v2160
    %v2416 = vadd.f32 %v2415, %v2161
    %v2417 = vadd.f32 %v2416, %v2162
    %v2418 = vadd.f32 %v2417, %v2163
    %v2419 = vadd.f32 %v2418, %v2164
    %v2420 = vadd.f32 %v2419, %v2165
    %v2421 = vadd.f32 %v2420, %v2166
    %v2422 = vadd.f32 %v2421, %v2167
    %v2423 = vadd.f32 %v2422, %v2168
    %v2424 = vadd.f32 %v2423, %v2169
    %v2425 = vadd.f32 %v2424, %v2170
    %v2426 = vadd.f32 %v2425, %v2171
    %v2427 = vadd.f32 %v2426, %v2172
    %v2428 = vadd.f32 %v2427, %v2173
    %v2429 = vadd.f32 %v2428, %v2174
    %v2430 = vadd.f32 %v2429, %v2175
    %v2431 = vadd.f32 %v2430, %v2176
    %v2432 = vadd.f32 %v2431, %v2177
    %v2433 = vadd.f32 %v2432, %v2178
    %v2434 = vadd.f32 %v2433, %v2179
    %v2435 = vadd.f32 %v2434, %v2180
    %v2436 = vadd.f32 %v2435, %v2181
    %v2437 = vadd.f32 %v2436, %v2182
    %v2438 = vadd.f32 %v2437, %v2183
    %v2439 = vadd.f32 %v2438, %v2184
    %v2440 = vadd.f32 %v2439, %v2185
    %v2441 = vadd.f32 %v2440, %v2186
    %v2442 = vadd.f32 %v2441, %v2187
    %v2443 = vadd.f32 %v2442, %v2188
    %2444 = vadd.xlane.f32.xlu0 %v2443
    %v2445 = vpop.xlane.xlu0 %2444
    %v2446 = vmul.f32 %v2445, 0.00390625
    %v2447 = vrot.slane %v2446, 4
    %v2448 = vmax.f32 %v2446, %v2447
    %v2449 = vrot.slane %v2448, 2
    %v2450 = vmax.f32 %v2448, %v2449
    %v2451 = vrot.slane %v2450, 1
    %v2452 = vmax.f32 %v2450, %v2451
    %v2453 = vsub.f32 %v2446, %v2452
    %v2454 = vmul.f32 %v2453, 1.442695
    %v2455 = vpow.pop %v2454
    %v2456 = vrot.slane %v2455, 4
    %v2457 = vadd.f32 %v2455, %v2456
    %v2458 = vrot.slane %v2457, 2
    %v2459 = vadd.f32 %v2457, %v2458
    %v2460 = vrot.slane %v2459, 1
    %v2461 = vadd.f32 %v2459, %v2460
    %v2462 = vrcp.pop %v2461
    %v2463 = vmul.f32 %v2455, %v2462
    %v2464 = vmul.f32 %v46, %v2463
    %v2465 = vmul.f32 %v47, %v2463
    %v2466 = vmul.f32 %v48, %v2463
    %v2467 = vmul.f32 %v49, %v2463
    %v2468 = vmul.f32 %v50, %v2463
    %v2469 = vmul.f32 %v51, %v2463
    %v2470 = vmul.f32 %v52, %v2463
    %v2471 = vmul.f32 %v53, %v2463
    %v2472 = vmul.f32 %v54, %v2463
    %v2473 = vmul.f32 %v55, %v2463
    %v2474 = vmul.f32 %v56, %v2463
    %v2475 = vmul.f32 %v57, %v2463
    %v2476 = vmul.f32 %v58, %v2463
    %v2477 = vmul.f32 %v59, %v2463
    %v2478 = vmul.f32 %v60, %v2463
    %v2479 = vmul.f32 %v61, %v2463
    %v2480 = vmul.f32 %v62, %v2463
    %v2481 = vmul.f32 %v63, %v2463
    %v2482 = vmul.f32 %v64, %v2463
    %v2483 = vmul.f32 %v65, %v2463
    %v2484 = vmul.f32 %v66, %v2463
    %v2485 = vmul.f32 %v67, %v2463
    %v2486 = vmul.f32 %v68, %v2463
    %v2487 = vmul.f32 %v69, %v2463
    %v2488 = vmul.f32 %v70, %v2463
    %v2489 = vmul.f32 %v71, %v2463
    %v2490 = vmul.f32 %v72, %v2463
    %v2491 = vmul.f32 %v73, %v2463
    %v2492 = vmul.f32 %v74, %v2463
    %v2493 = vmul.f32 %v75, %v2463
    %v2494 = vmul.f32 %v76, %v2463
    %v2495 = vmul.f32 %v77, %v2463
    %v2496 = vmul.f32 %v78, %v2463
    %v2497 = vmul.f32 %v79, %v2463
    %v2498 = vmul.f32 %v80, %v2463
    %v2499 = vmul.f32 %v81, %v2463
    %v2500 = vmul.f32 %v82, %v2463
    %v2501 = vmul.f32 %v83, %v2463
    %v2502 = vmul.f32 %v84, %v2463
    %v2503 = vmul.f32 %v85, %v2463
    %v2504 = vmul.f32 %v86, %v2463
    %v2505 = vmul.f32 %v87, %v2463
    %v2506 = vmul.f32 %v88, %v2463
    %v2507 = vmul.f32 %v89, %v2463
    %v2508 = vmul.f32 %v90, %v2463
    %v2509 = vmul.f32 %v91, %v2463
    %v2510 = vmul.f32 %v92, %v2463
    %v2511 = vmul.f32 %v93, %v2463
    %v2512 = vmul.f32 %v94, %v2463
    %v2513 = vmul.f32 %v95, %v2463
    %v2514 = vmul.f32 %v96, %v2463
    %v2515 = vmul.f32 %v97, %v2463
    %v2516 = vmul.f32 %v98, %v2463
    %v2517 = vmul.f32 %v99, %v2463
    %v2518 = vmul.f32 %v100, %v2463
    %v2519 = vmul.f32 %v101, %v2463
    %v2520 = vmul.f32 %v102, %v2463
    %v2521 = vmul.f32 %v103, %v2463
    %v2522 = vmul.f32 %v104, %v2463
    %v2523 = vmul.f32 %v105, %v2463
    %v2524 = vmul.f32 %v106, %v2463
    %v2525 = vmul.f32 %v107, %v2463
    %v2526 = vmul.f32 %v108, %v2463
    %v2527 = vmul.f32 %v109, %v2463
    %v2528 = vmul.f32 %v110, %v2463
    %v2529 = vmul.f32 %v111, %v2463
    %v2530 = vmul.f32 %v112, %v2463
    %v2531 = vmul.f32 %v113, %v2463
    %v2532 = vmul.f32 %v114, %v2463
    %v2533 = vmul.f32 %v115, %v2463
    %v2534 = vmul.f32 %v116, %v2463
    %v2535 = vmul.f32 %v117, %v2463
    %v2536 = vmul.f32 %v118, %v2463
    %v2537 = vmul.f32 %v119, %v2463
    %v2538 = vmul.f32 %v120, %v2463
    %v2539 = vmul.f32 %v121, %v2463
    %v2540 = vmul.f32 %v122, %v2463
    %v2541 = vmul.f32 %v123, %v2463
    %v2542 = vmul.f32 %v124, %v2463
    %v2543 = vmul.f32 %v125, %v2463
    %v2544 = vmul.f32 %v126, %v2463
    %v2545 = vmul.f32 %v127, %v2463
    %v2546 = vmul.f32 %v128, %v2463
    %v2547 = vmul.f32 %v129, %v2463
    %v2548 = vmul.f32 %v130, %v2463
    %v2549 = vmul.f32 %v131, %v2463
    %v2550 = vmul.f32 %v132, %v2463
    %v2551 = vmul.f32 %v133, %v2463
    %v2552 = vmul.f32 %v134, %v2463
    %v2553 = vmul.f32 %v135, %v2463
    %v2554 = vmul.f32 %v136, %v2463
    %v2555 = vmul.f32 %v137, %v2463
    %v2556 = vmul.f32 %v138, %v2463
    %v2557 = vmul.f32 %v139, %v2463
    %v2558 = vmul.f32 %v140, %v2463
    %v2559 = vmul.f32 %v141, %v2463
    %v2560 = vmul.f32 %v142, %v2463
    %v2561 = vmul.f32 %v143, %v2463
    %v2562 = vmul.f32 %v144, %v2463
    %v2563 = vmul.f32 %v145, %v2463
    %v2564 = vmul.f32 %v146, %v2463
    %v2565 = vmul.f32 %v147, %v2463
    %v2566 = vmul.f32 %v148, %v2463
    %v2567 = vmul.f32 %v149, %v2463
    %v2568 = vmul.f32 %v150, %v2463
    %v2569 = vmul.f32 %v151, %v2463
    %v2570 = vmul.f32 %v152, %v2463
    %v2571 = vmul.f32 %v153, %v2463
    %v2572 = vmul.f32 %v154, %v2463
    %v2573 = vmul.f32 %v155, %v2463
    %v2574 = vmul.f32 %v156, %v2463
    %v2575 = vmul.f32 %v157, %v2463
    %v2576 = vmul.f32 %v158, %v2463
    %v2577 = vmul.f32 %v159, %v2463
    %v2578 = vmul.f32 %v160, %v2463
    %v2579 = vmul.f32 %v161, %v2463
    %v2580 = vmul.f32 %v162, %v2463
    %v2581 = vmul.f32 %v163, %v2463
    %v2582 = vmul.f32 %v164, %v2463
    %v2583 = vmul.f32 %v165, %v2463
    %v2584 = vmul.f32 %v166, %v2463
    %v2585 = vmul.f32 %v167, %v2463
    %v2586 = vmul.f32 %v168, %v2463
    %v2587 = vmul.f32 %v169, %v2463
    %v2588 = vmul.f32 %v170, %v2463
    %v2589 = vmul.f32 %v171, %v2463
    %v2590 = vmul.f32 %v172, %v2463
    %v2591 = vmul.f32 %v173, %v2463
    %v2592 = vmul.f32 %v174, %v2463
    %v2593 = vmul.f32 %v175, %v2463
    %v2594 = vmul.f32 %v176, %v2463
    %v2595 = vmul.f32 %v177, %v2463
    %v2596 = vmul.f32 %v178, %v2463
    %v2597 = vmul.f32 %v179, %v2463
    %v2598 = vmul.f32 %v180, %v2463
    %v2599 = vmul.f32 %v181, %v2463
    %v2600 = vmul.f32 %v182, %v2463
    %v2601 = vmul.f32 %v183, %v2463
    %v2602 = vmul.f32 %v184, %v2463
    %v2603 = vmul.f32 %v185, %v2463
    %v2604 = vmul.f32 %v186, %v2463
    %v2605 = vmul.f32 %v187, %v2463
    %v2606 = vmul.f32 %v188, %v2463
    %v2607 = vmul.f32 %v189, %v2463
    %v2608 = vmul.f32 %v190, %v2463
    %v2609 = vmul.f32 %v191, %v2463
    %v2610 = vmul.f32 %v192, %v2463
    %v2611 = vmul.f32 %v193, %v2463
    %v2612 = vmul.f32 %v194, %v2463
    %v2613 = vmul.f32 %v195, %v2463
    %v2614 = vmul.f32 %v196, %v2463
    %v2615 = vmul.f32 %v197, %v2463
    %v2616 = vmul.f32 %v198, %v2463
    %v2617 = vmul.f32 %v199, %v2463
    %v2618 = vmul.f32 %v200, %v2463
    %v2619 = vmul.f32 %v201, %v2463
    %v2620 = vmul.f32 %v202, %v2463
    %v2621 = vmul.f32 %v203, %v2463
    %v2622 = vmul.f32 %v204, %v2463
    %v2623 = vmul.f32 %v205, %v2463
    %v2624 = vmul.f32 %v206, %v2463
    %v2625 = vmul.f32 %v207, %v2463
    %v2626 = vmul.f32 %v208, %v2463
    %v2627 = vmul.f32 %v209, %v2463
    %v2628 = vmul.f32 %v210, %v2463
    %v2629 = vmul.f32 %v211, %v2463
    %v2630 = vmul.f32 %v212, %v2463
    %v2631 = vmul.f32 %v213, %v2463
    %v2632 = vmul.f32 %v214, %v2463
    %v2633 = vmul.f32 %v215, %v2463
    %v2634 = vmul.f32 %v216, %v2463
    %v2635 = vmul.f32 %v217, %v2463
    %v2636 = vmul.f32 %v218, %v2463
    %v2637 = vmul.f32 %v219, %v2463
    %v2638 = vmul.f32 %v220, %v2463
    %v2639 = vmul.f32 %v221, %v2463
    %v2640 = vmul.f32 %v222, %v2463
    %v2641 = vmul.f32 %v223, %v2463
    %v2642 = vmul.f32 %v224, %v2463
    %v2643 = vmul.f32 %v225, %v2463
    %v2644 = vmul.f32 %v226, %v2463
    %v2645 = vmul.f32 %v227, %v2463
    %v2646 = vmul.f32 %v228, %v2463
    %v2647 = vmul.f32 %v229, %v2463
    %v2648 = vmul.f32 %v230, %v2463
    %v2649 = vmul.f32 %v231, %v2463
    %v2650 = vmul.f32 %v232, %v2463
    %v2651 = vmul.f32 %v233, %v2463
    %v2652 = vmul.f32 %v234, %v2463
    %v2653 = vmul.f32 %v235, %v2463
    %v2654 = vmul.f32 %v236, %v2463
    %v2655 = vmul.f32 %v237, %v2463
    %v2656 = vmul.f32 %v238, %v2463
    %v2657 = vmul.f32 %v239, %v2463
    %v2658 = vmul.f32 %v240, %v2463
    %v2659 = vmul.f32 %v241, %v2463
    %v2660 = vmul.f32 %v242, %v2463
    %v2661 = vmul.f32 %v243, %v2463
    %v2662 = vmul.f32 %v244, %v2463
    %v2663 = vmul.f32 %v245, %v2463
    %v2664 = vmul.f32 %v246, %v2463
    %v2665 = vmul.f32 %v247, %v2463
    %v2666 = vmul.f32 %v248, %v2463
    %v2667 = vmul.f32 %v249, %v2463
    %v2668 = vmul.f32 %v250, %v2463
    %v2669 = vmul.f32 %v251, %v2463
    %v2670 = vmul.f32 %v252, %v2463
    %v2671 = vmul.f32 %v253, %v2463
    %v2672 = vmul.f32 %v254, %v2463
    %v2673 = vmul.f32 %v255, %v2463
    %v2674 = vmul.f32 %v256, %v2463
    %v2675 = vmul.f32 %v257, %v2463
    %v2676 = vmul.f32 %v258, %v2463
    %v2677 = vmul.f32 %v259, %v2463
    %v2678 = vmul.f32 %v260, %v2463
    %v2679 = vmul.f32 %v261, %v2463
    %v2680 = vmul.f32 %v262, %v2463
    %v2681 = vmul.f32 %v263, %v2463
    %v2682 = vmul.f32 %v264, %v2463
    %v2683 = vmul.f32 %v265, %v2463
    %v2684 = vmul.f32 %v266, %v2463
    %v2685 = vmul.f32 %v267, %v2463
    %v2686 = vmul.f32 %v268, %v2463
    %v2687 = vmul.f32 %v269, %v2463
    %v2688 = vmul.f32 %v270, %v2463
    %v2689 = vmul.f32 %v271, %v2463
    %v2690 = vmul.f32 %v272, %v2463
    %v2691 = vmul.f32 %v273, %v2463
    %v2692 = vmul.f32 %v274, %v2463
    %v2693 = vmul.f32 %v275, %v2463
    %v2694 = vmul.f32 %v276, %v2463
    %v2695 = vmul.f32 %v277, %v2463
    %v2696 = vmul.f32 %v278, %v2463
    %v2697 = vmul.f32 %v279, %v2463
    %v2698 = vmul.f32 %v280, %v2463
    %v2699 = vmul.f32 %v281, %v2463
    %v2700 = vmul.f32 %v282, %v2463
    %v2701 = vmul.f32 %v283, %v2463
    %v2702 = vmul.f32 %v284, %v2463
    %v2703 = vmul.f32 %v285, %v2463
    %v2704 = vmul.f32 %v286, %v2463
    %v2705 = vmul.f32 %v287, %v2463
    %v2706 = vmul.f32 %v288, %v2463
    %v2707 = vmul.f32 %v289, %v2463
    %v2708 = vmul.f32 %v290, %v2463
    %v2709 = vmul.f32 %v291, %v2463
    %v2710 = vmul.f32 %v292, %v2463
    %v2711 = vmul.f32 %v293, %v2463
    %v2712 = vmul.f32 %v294, %v2463
    %v2713 = vmul.f32 %v295, %v2463
    %v2714 = vmul.f32 %v296, %v2463
    %v2715 = vmul.f32 %v297, %v2463
    %v2716 = vmul.f32 %v298, %v2463
    %v2717 = vmul.f32 %v299, %v2463
    %v2718 = vmul.f32 %v300, %v2463
    %v2719 = vmul.f32 %v301, %v2463
    %v2720 = vrot.slane %v2464, 4
    %v2721 = vadd.f32 %v2464, %v2720
    %v2722 = vrot.slane %v2721, 2
    %v2723 = vadd.f32 %v2721, %v2722
    %v2724 = vrot.slane %v2723, 1
    %v2725 = vadd.f32 %v2723, %v2724
    %v2726 = vrot.slane %v2465, 4
    %v2727 = vadd.f32 %v2465, %v2726
    %v2728 = vrot.slane %v2727, 2
    %v2729 = vadd.f32 %v2727, %v2728
    %v2730 = vrot.slane %v2729, 1
    %v2731 = vadd.f32 %v2729, %v2730
    %v2732 = vrot.slane %v2466, 4
    %v2733 = vadd.f32 %v2466, %v2732
    %v2734 = vrot.slane %v2733, 2
    %v2735 = vadd.f32 %v2733, %v2734
    %v2736 = vrot.slane %v2735, 1
    %v2737 = vadd.f32 %v2735, %v2736
    %v2738 = vrot.slane %v2467, 4
    %v2739 = vadd.f32 %v2467, %v2738
    %v2740 = vrot.slane %v2739, 2
    %v2741 = vadd.f32 %v2739, %v2740
    %v2742 = vrot.slane %v2741, 1
    %v2743 = vadd.f32 %v2741, %v2742
    %v2744 = vrot.slane %v2468, 4
    %v2745 = vadd.f32 %v2468, %v2744
    %v2746 = vrot.slane %v2745, 2
    %v2747 = vadd.f32 %v2745, %v2746
    %v2748 = vrot.slane %v2747, 1
    %v2749 = vadd.f32 %v2747, %v2748
    %v2750 = vrot.slane %v2469, 4
    %v2751 = vadd.f32 %v2469, %v2750
    %v2752 = vrot.slane %v2751, 2
    %v2753 = vadd.f32 %v2751, %v2752
    %v2754 = vrot.slane %v2753, 1
    %v2755 = vadd.f32 %v2753, %v2754
    %v2756 = vrot.slane %v2470, 4
    %v2757 = vadd.f32 %v2470, %v2756
    %v2758 = vrot.slane %v2757, 2
    %v2759 = vadd.f32 %v2757, %v2758
    %v2760 = vrot.slane %v2759, 1
    %v2761 = vadd.f32 %v2759, %v2760
    %v2762 = vrot.slane %v2471, 4
    %v2763 = vadd.f32 %v2471, %v2762
    %v2764 = vrot.slane %v2763, 2
    %v2765 = vadd.f32 %v2763, %v2764
    %v2766 = vrot.slane %v2765, 1
    %v2767 = vadd.f32 %v2765, %v2766
    %v2768 = vrot.slane %v2472, 4
    %v2769 = vadd.f32 %v2472, %v2768
    %v2770 = vrot.slane %v2769, 2
    %v2771 = vadd.f32 %v2769, %v2770
    %v2772 = vrot.slane %v2771, 1
    %v2773 = vadd.f32 %v2771, %v2772
    %v2774 = vrot.slane %v2473, 4
    %v2775 = vadd.f32 %v2473, %v2774
    %v2776 = vrot.slane %v2775, 2
    %v2777 = vadd.f32 %v2775, %v2776
    %v2778 = vrot.slane %v2777, 1
    %v2779 = vadd.f32 %v2777, %v2778
    %v2780 = vrot.slane %v2474, 4
    %v2781 = vadd.f32 %v2474, %v2780
    %v2782 = vrot.slane %v2781, 2
    %v2783 = vadd.f32 %v2781, %v2782
    %v2784 = vrot.slane %v2783, 1
    %v2785 = vadd.f32 %v2783, %v2784
    %v2786 = vrot.slane %v2475, 4
    %v2787 = vadd.f32 %v2475, %v2786
    %v2788 = vrot.slane %v2787, 2
    %v2789 = vadd.f32 %v2787, %v2788
    %v2790 = vrot.slane %v2789, 1
    %v2791 = vadd.f32 %v2789, %v2790
    %v2792 = vrot.slane %v2476, 4
    %v2793 = vadd.f32 %v2476, %v2792
    %v2794 = vrot.slane %v2793, 2
    %v2795 = vadd.f32 %v2793, %v2794
    %v2796 = vrot.slane %v2795, 1
    %v2797 = vadd.f32 %v2795, %v2796
    %v2798 = vrot.slane %v2477, 4
    %v2799 = vadd.f32 %v2477, %v2798
    %v2800 = vrot.slane %v2799, 2
    %v2801 = vadd.f32 %v2799, %v2800
    %v2802 = vrot.slane %v2801, 1
    %v2803 = vadd.f32 %v2801, %v2802
    %v2804 = vrot.slane %v2478, 4
    %v2805 = vadd.f32 %v2478, %v2804
    %v2806 = vrot.slane %v2805, 2
    %v2807 = vadd.f32 %v2805, %v2806
    %v2808 = vrot.slane %v2807, 1
    %v2809 = vadd.f32 %v2807, %v2808
    %v2810 = vrot.slane %v2479, 4
    %v2811 = vadd.f32 %v2479, %v2810
    %v2812 = vrot.slane %v2811, 2
    %v2813 = vadd.f32 %v2811, %v2812
    %v2814 = vrot.slane %v2813, 1
    %v2815 = vadd.f32 %v2813, %v2814
    %v2816 = vrot.slane %v2480, 4
    %v2817 = vadd.f32 %v2480, %v2816
    %v2818 = vrot.slane %v2817, 2
    %v2819 = vadd.f32 %v2817, %v2818
    %v2820 = vrot.slane %v2819, 1
    %v2821 = vadd.f32 %v2819, %v2820
    %v2822 = vrot.slane %v2481, 4
    %v2823 = vadd.f32 %v2481, %v2822
    %v2824 = vrot.slane %v2823, 2
    %v2825 = vadd.f32 %v2823, %v2824
    %v2826 = vrot.slane %v2825, 1
    %v2827 = vadd.f32 %v2825, %v2826
    %v2828 = vrot.slane %v2482, 4
    %v2829 = vadd.f32 %v2482, %v2828
    %v2830 = vrot.slane %v2829, 2
    %v2831 = vadd.f32 %v2829, %v2830
    %v2832 = vrot.slane %v2831, 1
    %v2833 = vadd.f32 %v2831, %v2832
    %v2834 = vrot.slane %v2483, 4
    %v2835 = vadd.f32 %v2483, %v2834
    %v2836 = vrot.slane %v2835, 2
    %v2837 = vadd.f32 %v2835, %v2836
    %v2838 = vrot.slane %v2837, 1
    %v2839 = vadd.f32 %v2837, %v2838
    %v2840 = vrot.slane %v2484, 4
    %v2841 = vadd.f32 %v2484, %v2840
    %v2842 = vrot.slane %v2841, 2
    %v2843 = vadd.f32 %v2841, %v2842
    %v2844 = vrot.slane %v2843, 1
    %v2845 = vadd.f32 %v2843, %v2844
    %v2846 = vrot.slane %v2485, 4
    %v2847 = vadd.f32 %v2485, %v2846
    %v2848 = vrot.slane %v2847, 2
    %v2849 = vadd.f32 %v2847, %v2848
    %v2850 = vrot.slane %v2849, 1
    %v2851 = vadd.f32 %v2849, %v2850
    %v2852 = vrot.slane %v2486, 4
    %v2853 = vadd.f32 %v2486, %v2852
    %v2854 = vrot.slane %v2853, 2
    %v2855 = vadd.f32 %v2853, %v2854
    %v2856 = vrot.slane %v2855, 1
    %v2857 = vadd.f32 %v2855, %v2856
    %v2858 = vrot.slane %v2487, 4
    %v2859 = vadd.f32 %v2487, %v2858
    %v2860 = vrot.slane %v2859, 2
    %v2861 = vadd.f32 %v2859, %v2860
    %v2862 = vrot.slane %v2861, 1
    %v2863 = vadd.f32 %v2861, %v2862
    %v2864 = vrot.slane %v2488, 4
    %v2865 = vadd.f32 %v2488, %v2864
    %v2866 = vrot.slane %v2865, 2
    %v2867 = vadd.f32 %v2865, %v2866
    %v2868 = vrot.slane %v2867, 1
    %v2869 = vadd.f32 %v2867, %v2868
    %v2870 = vrot.slane %v2489, 4
    %v2871 = vadd.f32 %v2489, %v2870
    %v2872 = vrot.slane %v2871, 2
    %v2873 = vadd.f32 %v2871, %v2872
    %v2874 = vrot.slane %v2873, 1
    %v2875 = vadd.f32 %v2873, %v2874
    %v2876 = vrot.slane %v2490, 4
    %v2877 = vadd.f32 %v2490, %v2876
    %v2878 = vrot.slane %v2877, 2
    %v2879 = vadd.f32 %v2877, %v2878
    %v2880 = vrot.slane %v2879, 1
    %v2881 = vadd.f32 %v2879, %v2880
    %v2882 = vrot.slane %v2491, 4
    %v2883 = vadd.f32 %v2491, %v2882
    %v2884 = vrot.slane %v2883, 2
    %v2885 = vadd.f32 %v2883, %v2884
    %v2886 = vrot.slane %v2885, 1
    %v2887 = vadd.f32 %v2885, %v2886
    %v2888 = vrot.slane %v2492, 4
    %v2889 = vadd.f32 %v2492, %v2888
    %v2890 = vrot.slane %v2889, 2
    %v2891 = vadd.f32 %v2889, %v2890
    %v2892 = vrot.slane %v2891, 1
    %v2893 = vadd.f32 %v2891, %v2892
    %v2894 = vrot.slane %v2493, 4
    %v2895 = vadd.f32 %v2493, %v2894
    %v2896 = vrot.slane %v2895, 2
    %v2897 = vadd.f32 %v2895, %v2896
    %v2898 = vrot.slane %v2897, 1
    %v2899 = vadd.f32 %v2897, %v2898
    %v2900 = vrot.slane %v2494, 4
    %v2901 = vadd.f32 %v2494, %v2900
    %v2902 = vrot.slane %v2901, 2
    %v2903 = vadd.f32 %v2901, %v2902
    %v2904 = vrot.slane %v2903, 1
    %v2905 = vadd.f32 %v2903, %v2904
    %v2906 = vrot.slane %v2495, 4
    %v2907 = vadd.f32 %v2495, %v2906
    %v2908 = vrot.slane %v2907, 2
    %v2909 = vadd.f32 %v2907, %v2908
    %v2910 = vrot.slane %v2909, 1
    %v2911 = vadd.f32 %v2909, %v2910
    %v2912 = vrot.slane %v2496, 4
    %v2913 = vadd.f32 %v2496, %v2912
    %v2914 = vrot.slane %v2913, 2
    %v2915 = vadd.f32 %v2913, %v2914
    %v2916 = vrot.slane %v2915, 1
    %v2917 = vadd.f32 %v2915, %v2916
    %v2918 = vrot.slane %v2497, 4
    %v2919 = vadd.f32 %v2497, %v2918
    %v2920 = vrot.slane %v2919, 2
    %v2921 = vadd.f32 %v2919, %v2920
    %v2922 = vrot.slane %v2921, 1
    %v2923 = vadd.f32 %v2921, %v2922
    %v2924 = vrot.slane %v2498, 4
    %v2925 = vadd.f32 %v2498, %v2924
    %v2926 = vrot.slane %v2925, 2
    %v2927 = vadd.f32 %v2925, %v2926
    %v2928 = vrot.slane %v2927, 1
    %v2929 = vadd.f32 %v2927, %v2928
    %v2930 = vrot.slane %v2499, 4
    %v2931 = vadd.f32 %v2499, %v2930
    %v2932 = vrot.slane %v2931, 2
    %v2933 = vadd.f32 %v2931, %v2932
    %v2934 = vrot.slane %v2933, 1
    %v2935 = vadd.f32 %v2933, %v2934
    %v2936 = vrot.slane %v2500, 4
    %v2937 = vadd.f32 %v2500, %v2936
    %v2938 = vrot.slane %v2937, 2
    %v2939 = vadd.f32 %v2937, %v2938
    %v2940 = vrot.slane %v2939, 1
    %v2941 = vadd.f32 %v2939, %v2940
    %v2942 = vrot.slane %v2501, 4
    %v2943 = vadd.f32 %v2501, %v2942
    %v2944 = vrot.slane %v2943, 2
    %v2945 = vadd.f32 %v2943, %v2944
    %v2946 = vrot.slane %v2945, 1
    %v2947 = vadd.f32 %v2945, %v2946
    %v2948 = vrot.slane %v2502, 4
    %v2949 = vadd.f32 %v2502, %v2948
    %v2950 = vrot.slane %v2949, 2
    %v2951 = vadd.f32 %v2949, %v2950
    %v2952 = vrot.slane %v2951, 1
    %v2953 = vadd.f32 %v2951, %v2952
    %v2954 = vrot.slane %v2503, 4
    %v2955 = vadd.f32 %v2503, %v2954
    %v2956 = vrot.slane %v2955, 2
    %v2957 = vadd.f32 %v2955, %v2956
    %v2958 = vrot.slane %v2957, 1
    %v2959 = vadd.f32 %v2957, %v2958
    %v2960 = vrot.slane %v2504, 4
    %v2961 = vadd.f32 %v2504, %v2960
    %v2962 = vrot.slane %v2961, 2
    %v2963 = vadd.f32 %v2961, %v2962
    %v2964 = vrot.slane %v2963, 1
    %v2965 = vadd.f32 %v2963, %v2964
    %v2966 = vrot.slane %v2505, 4
    %v2967 = vadd.f32 %v2505, %v2966
    %v2968 = vrot.slane %v2967, 2
    %v2969 = vadd.f32 %v2967, %v2968
    %v2970 = vrot.slane %v2969, 1
    %v2971 = vadd.f32 %v2969, %v2970
    %v2972 = vrot.slane %v2506, 4
    %v2973 = vadd.f32 %v2506, %v2972
    %v2974 = vrot.slane %v2973, 2
    %v2975 = vadd.f32 %v2973, %v2974
    %v2976 = vrot.slane %v2975, 1
    %v2977 = vadd.f32 %v2975, %v2976
    %v2978 = vrot.slane %v2507, 4
    %v2979 = vadd.f32 %v2507, %v2978
    %v2980 = vrot.slane %v2979, 2
    %v2981 = vadd.f32 %v2979, %v2980
    %v2982 = vrot.slane %v2981, 1
    %v2983 = vadd.f32 %v2981, %v2982
    %v2984 = vrot.slane %v2508, 4
    %v2985 = vadd.f32 %v2508, %v2984
    %v2986 = vrot.slane %v2985, 2
    %v2987 = vadd.f32 %v2985, %v2986
    %v2988 = vrot.slane %v2987, 1
    %v2989 = vadd.f32 %v2987, %v2988
    %v2990 = vrot.slane %v2509, 4
    %v2991 = vadd.f32 %v2509, %v2990
    %v2992 = vrot.slane %v2991, 2
    %v2993 = vadd.f32 %v2991, %v2992
    %v2994 = vrot.slane %v2993, 1
    %v2995 = vadd.f32 %v2993, %v2994
    %v2996 = vrot.slane %v2510, 4
    %v2997 = vadd.f32 %v2510, %v2996
    %v2998 = vrot.slane %v2997, 2
    %v2999 = vadd.f32 %v2997, %v2998
    %v3000 = vrot.slane %v2999, 1
    %v3001 = vadd.f32 %v2999, %v3000
    %v3002 = vrot.slane %v2511, 4
    %v3003 = vadd.f32 %v2511, %v3002
    %v3004 = vrot.slane %v3003, 2
    %v3005 = vadd.f32 %v3003, %v3004
    %v3006 = vrot.slane %v3005, 1
    %v3007 = vadd.f32 %v3005, %v3006
    %v3008 = vrot.slane %v2512, 4
    %v3009 = vadd.f32 %v2512, %v3008
    %v3010 = vrot.slane %v3009, 2
    %v3011 = vadd.f32 %v3009, %v3010
    %v3012 = vrot.slane %v3011, 1
    %v3013 = vadd.f32 %v3011, %v3012
    %v3014 = vrot.slane %v2513, 4
    %v3015 = vadd.f32 %v2513, %v3014
    %v3016 = vrot.slane %v3015, 2
    %v3017 = vadd.f32 %v3015, %v3016
    %v3018 = vrot.slane %v3017, 1
    %v3019 = vadd.f32 %v3017, %v3018
    %v3020 = vrot.slane %v2514, 4
    %v3021 = vadd.f32 %v2514, %v3020
    %v3022 = vrot.slane %v3021, 2
    %v3023 = vadd.f32 %v3021, %v3022
    %v3024 = vrot.slane %v3023, 1
    %v3025 = vadd.f32 %v3023, %v3024
    %v3026 = vrot.slane %v2515, 4
    %v3027 = vadd.f32 %v2515, %v3026
    %v3028 = vrot.slane %v3027, 2
    %v3029 = vadd.f32 %v3027, %v3028
    %v3030 = vrot.slane %v3029, 1
    %v3031 = vadd.f32 %v3029, %v3030
    %v3032 = vrot.slane %v2516, 4
    %v3033 = vadd.f32 %v2516, %v3032
    %v3034 = vrot.slane %v3033, 2
    %v3035 = vadd.f32 %v3033, %v3034
    %v3036 = vrot.slane %v3035, 1
    %v3037 = vadd.f32 %v3035, %v3036
    %v3038 = vrot.slane %v2517, 4
    %v3039 = vadd.f32 %v2517, %v3038
    %v3040 = vrot.slane %v3039, 2
    %v3041 = vadd.f32 %v3039, %v3040
    %v3042 = vrot.slane %v3041, 1
    %v3043 = vadd.f32 %v3041, %v3042
    %v3044 = vrot.slane %v2518, 4
    %v3045 = vadd.f32 %v2518, %v3044
    %v3046 = vrot.slane %v3045, 2
    %v3047 = vadd.f32 %v3045, %v3046
    %v3048 = vrot.slane %v3047, 1
    %v3049 = vadd.f32 %v3047, %v3048
    %v3050 = vrot.slane %v2519, 4
    %v3051 = vadd.f32 %v2519, %v3050
    %v3052 = vrot.slane %v3051, 2
    %v3053 = vadd.f32 %v3051, %v3052
    %v3054 = vrot.slane %v3053, 1
    %v3055 = vadd.f32 %v3053, %v3054
    %v3056 = vrot.slane %v2520, 4
    %v3057 = vadd.f32 %v2520, %v3056
    %v3058 = vrot.slane %v3057, 2
    %v3059 = vadd.f32 %v3057, %v3058
    %v3060 = vrot.slane %v3059, 1
    %v3061 = vadd.f32 %v3059, %v3060
    %v3062 = vrot.slane %v2521, 4
    %v3063 = vadd.f32 %v2521, %v3062
    %v3064 = vrot.slane %v3063, 2
    %v3065 = vadd.f32 %v3063, %v3064
    %v3066 = vrot.slane %v3065, 1
    %v3067 = vadd.f32 %v3065, %v3066
    %v3068 = vrot.slane %v2522, 4
    %v3069 = vadd.f32 %v2522, %v3068
    %v3070 = vrot.slane %v3069, 2
    %v3071 = vadd.f32 %v3069, %v3070
    %v3072 = vrot.slane %v3071, 1
    %v3073 = vadd.f32 %v3071, %v3072
    %v3074 = vrot.slane %v2523, 4
    %v3075 = vadd.f32 %v2523, %v3074
    %v3076 = vrot.slane %v3075, 2
    %v3077 = vadd.f32 %v3075, %v3076
    %v3078 = vrot.slane %v3077, 1
    %v3079 = vadd.f32 %v3077, %v3078
    %v3080 = vrot.slane %v2524, 4
    %v3081 = vadd.f32 %v2524, %v3080
    %v3082 = vrot.slane %v3081, 2
    %v3083 = vadd.f32 %v3081, %v3082
    %v3084 = vrot.slane %v3083, 1
    %v3085 = vadd.f32 %v3083, %v3084
    %v3086 = vrot.slane %v2525, 4
    %v3087 = vadd.f32 %v2525, %v3086
    %v3088 = vrot.slane %v3087, 2
    %v3089 = vadd.f32 %v3087, %v3088
    %v3090 = vrot.slane %v3089, 1
    %v3091 = vadd.f32 %v3089, %v3090
    %v3092 = vrot.slane %v2526, 4
    %v3093 = vadd.f32 %v2526, %v3092
    %v3094 = vrot.slane %v3093, 2
    %v3095 = vadd.f32 %v3093, %v3094
    %v3096 = vrot.slane %v3095, 1
    %v3097 = vadd.f32 %v3095, %v3096
    %v3098 = vrot.slane %v2527, 4
    %v3099 = vadd.f32 %v2527, %v3098
    %v3100 = vrot.slane %v3099, 2
    %v3101 = vadd.f32 %v3099, %v3100
    %v3102 = vrot.slane %v3101, 1
    %v3103 = vadd.f32 %v3101, %v3102
    %v3104 = vrot.slane %v2528, 4
    %v3105 = vadd.f32 %v2528, %v3104
    %v3106 = vrot.slane %v3105, 2
    %v3107 = vadd.f32 %v3105, %v3106
    %v3108 = vrot.slane %v3107, 1
    %v3109 = vadd.f32 %v3107, %v3108
    %v3110 = vrot.slane %v2529, 4
    %v3111 = vadd.f32 %v2529, %v3110
    %v3112 = vrot.slane %v3111, 2
    %v3113 = vadd.f32 %v3111, %v3112
    %v3114 = vrot.slane %v3113, 1
    %v3115 = vadd.f32 %v3113, %v3114
    %v3116 = vrot.slane %v2530, 4
    %v3117 = vadd.f32 %v2530, %v3116
    %v3118 = vrot.slane %v3117, 2
    %v3119 = vadd.f32 %v3117, %v3118
    %v3120 = vrot.slane %v3119, 1
    %v3121 = vadd.f32 %v3119, %v3120
    %v3122 = vrot.slane %v2531, 4
    %v3123 = vadd.f32 %v2531, %v3122
    %v3124 = vrot.slane %v3123, 2
    %v3125 = vadd.f32 %v3123, %v3124
    %v3126 = vrot.slane %v3125, 1
    %v3127 = vadd.f32 %v3125, %v3126
    %v3128 = vrot.slane %v2532, 4
    %v3129 = vadd.f32 %v2532, %v3128
    %v3130 = vrot.slane %v3129, 2
    %v3131 = vadd.f32 %v3129, %v3130
    %v3132 = vrot.slane %v3131, 1
    %v3133 = vadd.f32 %v3131, %v3132
    %v3134 = vrot.slane %v2533, 4
    %v3135 = vadd.f32 %v2533, %v3134
    %v3136 = vrot.slane %v3135, 2
    %v3137 = vadd.f32 %v3135, %v3136
    %v3138 = vrot.slane %v3137, 1
    %v3139 = vadd.f32 %v3137, %v3138
    %v3140 = vrot.slane %v2534, 4
    %v3141 = vadd.f32 %v2534, %v3140
    %v3142 = vrot.slane %v3141, 2
    %v3143 = vadd.f32 %v3141, %v3142
    %v3144 = vrot.slane %v3143, 1
    %v3145 = vadd.f32 %v3143, %v3144
    %v3146 = vrot.slane %v2535, 4
    %v3147 = vadd.f32 %v2535, %v3146
    %v3148 = vrot.slane %v3147, 2
    %v3149 = vadd.f32 %v3147, %v3148
    %v3150 = vrot.slane %v3149, 1
    %v3151 = vadd.f32 %v3149, %v3150
    %v3152 = vrot.slane %v2536, 4
    %v3153 = vadd.f32 %v2536, %v3152
    %v3154 = vrot.slane %v3153, 2
    %v3155 = vadd.f32 %v3153, %v3154
    %v3156 = vrot.slane %v3155, 1
    %v3157 = vadd.f32 %v3155, %v3156
    %v3158 = vrot.slane %v2537, 4
    %v3159 = vadd.f32 %v2537, %v3158
    %v3160 = vrot.slane %v3159, 2
    %v3161 = vadd.f32 %v3159, %v3160
    %v3162 = vrot.slane %v3161, 1
    %v3163 = vadd.f32 %v3161, %v3162
    %v3164 = vrot.slane %v2538, 4
    %v3165 = vadd.f32 %v2538, %v3164
    %v3166 = vrot.slane %v3165, 2
    %v3167 = vadd.f32 %v3165, %v3166
    %v3168 = vrot.slane %v3167, 1
    %v3169 = vadd.f32 %v3167, %v3168
    %v3170 = vrot.slane %v2539, 4
    %v3171 = vadd.f32 %v2539, %v3170
    %v3172 = vrot.slane %v3171, 2
    %v3173 = vadd.f32 %v3171, %v3172
    %v3174 = vrot.slane %v3173, 1
    %v3175 = vadd.f32 %v3173, %v3174
    %v3176 = vrot.slane %v2540, 4
    %v3177 = vadd.f32 %v2540, %v3176
    %v3178 = vrot.slane %v3177, 2
    %v3179 = vadd.f32 %v3177, %v3178
    %v3180 = vrot.slane %v3179, 1
    %v3181 = vadd.f32 %v3179, %v3180
    %v3182 = vrot.slane %v2541, 4
    %v3183 = vadd.f32 %v2541, %v3182
    %v3184 = vrot.slane %v3183, 2
    %v3185 = vadd.f32 %v3183, %v3184
    %v3186 = vrot.slane %v3185, 1
    %v3187 = vadd.f32 %v3185, %v3186
    %v3188 = vrot.slane %v2542, 4
    %v3189 = vadd.f32 %v2542, %v3188
    %v3190 = vrot.slane %v3189, 2
    %v3191 = vadd.f32 %v3189, %v3190
    %v3192 = vrot.slane %v3191, 1
    %v3193 = vadd.f32 %v3191, %v3192
    %v3194 = vrot.slane %v2543, 4
    %v3195 = vadd.f32 %v2543, %v3194
    %v3196 = vrot.slane %v3195, 2
    %v3197 = vadd.f32 %v3195, %v3196
    %v3198 = vrot.slane %v3197, 1
    %v3199 = vadd.f32 %v3197, %v3198
    %v3200 = vrot.slane %v2544, 4
    %v3201 = vadd.f32 %v2544, %v3200
    %v3202 = vrot.slane %v3201, 2
    %v3203 = vadd.f32 %v3201, %v3202
    %v3204 = vrot.slane %v3203, 1
    %v3205 = vadd.f32 %v3203, %v3204
    %v3206 = vrot.slane %v2545, 4
    %v3207 = vadd.f32 %v2545, %v3206
    %v3208 = vrot.slane %v3207, 2
    %v3209 = vadd.f32 %v3207, %v3208
    %v3210 = vrot.slane %v3209, 1
    %v3211 = vadd.f32 %v3209, %v3210
    %v3212 = vrot.slane %v2546, 4
    %v3213 = vadd.f32 %v2546, %v3212
    %v3214 = vrot.slane %v3213, 2
    %v3215 = vadd.f32 %v3213, %v3214
    %v3216 = vrot.slane %v3215, 1
    %v3217 = vadd.f32 %v3215, %v3216
    %v3218 = vrot.slane %v2547, 4
    %v3219 = vadd.f32 %v2547, %v3218
    %v3220 = vrot.slane %v3219, 2
    %v3221 = vadd.f32 %v3219, %v3220
    %v3222 = vrot.slane %v3221, 1
    %v3223 = vadd.f32 %v3221, %v3222
    %v3224 = vrot.slane %v2548, 4
    %v3225 = vadd.f32 %v2548, %v3224
    %v3226 = vrot.slane %v3225, 2
    %v3227 = vadd.f32 %v3225, %v3226
    %v3228 = vrot.slane %v3227, 1
    %v3229 = vadd.f32 %v3227, %v3228
    %v3230 = vrot.slane %v2549, 4
    %v3231 = vadd.f32 %v2549, %v3230
    %v3232 = vrot.slane %v3231, 2
    %v3233 = vadd.f32 %v3231, %v3232
    %v3234 = vrot.slane %v3233, 1
    %v3235 = vadd.f32 %v3233, %v3234
    %v3236 = vrot.slane %v2550, 4
    %v3237 = vadd.f32 %v2550, %v3236
    %v3238 = vrot.slane %v3237, 2
    %v3239 = vadd.f32 %v3237, %v3238
    %v3240 = vrot.slane %v3239, 1
    %v3241 = vadd.f32 %v3239, %v3240
    %v3242 = vrot.slane %v2551, 4
    %v3243 = vadd.f32 %v2551, %v3242
    %v3244 = vrot.slane %v3243, 2
    %v3245 = vadd.f32 %v3243, %v3244
    %v3246 = vrot.slane %v3245, 1
    %v3247 = vadd.f32 %v3245, %v3246
    %v3248 = vrot.slane %v2552, 4
    %v3249 = vadd.f32 %v2552, %v3248
    %v3250 = vrot.slane %v3249, 2
    %v3251 = vadd.f32 %v3249, %v3250
    %v3252 = vrot.slane %v3251, 1
    %v3253 = vadd.f32 %v3251, %v3252
    %v3254 = vrot.slane %v2553, 4
    %v3255 = vadd.f32 %v2553, %v3254
    %v3256 = vrot.slane %v3255, 2
    %v3257 = vadd.f32 %v3255, %v3256
    %v3258 = vrot.slane %v3257, 1
    %v3259 = vadd.f32 %v3257, %v3258
    %v3260 = vrot.slane %v2554, 4
    %v3261 = vadd.f32 %v2554, %v3260
    %v3262 = vrot.slane %v3261, 2
    %v3263 = vadd.f32 %v3261, %v3262
    %v3264 = vrot.slane %v3263, 1
    %v3265 = vadd.f32 %v3263, %v3264
    %v3266 = vrot.slane %v2555, 4
    %v3267 = vadd.f32 %v2555, %v3266
    %v3268 = vrot.slane %v3267, 2
    %v3269 = vadd.f32 %v3267, %v3268
    %v3270 = vrot.slane %v3269, 1
    %v3271 = vadd.f32 %v3269, %v3270
    %v3272 = vrot.slane %v2556, 4
    %v3273 = vadd.f32 %v2556, %v3272
    %v3274 = vrot.slane %v3273, 2
    %v3275 = vadd.f32 %v3273, %v3274
    %v3276 = vrot.slane %v3275, 1
    %v3277 = vadd.f32 %v3275, %v3276
    %v3278 = vrot.slane %v2557, 4
    %v3279 = vadd.f32 %v2557, %v3278
    %v3280 = vrot.slane %v3279, 2
    %v3281 = vadd.f32 %v3279, %v3280
    %v3282 = vrot.slane %v3281, 1
    %v3283 = vadd.f32 %v3281, %v3282
    %v3284 = vrot.slane %v2558, 4
    %v3285 = vadd.f32 %v2558, %v3284
    %v3286 = vrot.slane %v3285, 2
    %v3287 = vadd.f32 %v3285, %v3286
    %v3288 = vrot.slane %v3287, 1
    %v3289 = vadd.f32 %v3287, %v3288
    %v3290 = vrot.slane %v2559, 4
    %v3291 = vadd.f32 %v2559, %v3290
    %v3292 = vrot.slane %v3291, 2
    %v3293 = vadd.f32 %v3291, %v3292
    %v3294 = vrot.slane %v3293, 1
    %v3295 = vadd.f32 %v3293, %v3294
    %v3296 = vrot.slane %v2560, 4
    %v3297 = vadd.f32 %v2560, %v3296
    %v3298 = vrot.slane %v3297, 2
    %v3299 = vadd.f32 %v3297, %v3298
    %v3300 = vrot.slane %v3299, 1
    %v3301 = vadd.f32 %v3299, %v3300
    %v3302 = vrot.slane %v2561, 4
    %v3303 = vadd.f32 %v2561, %v3302
    %v3304 = vrot.slane %v3303, 2
    %v3305 = vadd.f32 %v3303, %v3304
    %v3306 = vrot.slane %v3305, 1
    %v3307 = vadd.f32 %v3305, %v3306
    %v3308 = vrot.slane %v2562, 4
    %v3309 = vadd.f32 %v2562, %v3308
    %v3310 = vrot.slane %v3309, 2
    %v3311 = vadd.f32 %v3309, %v3310
    %v3312 = vrot.slane %v3311, 1
    %v3313 = vadd.f32 %v3311, %v3312
    %v3314 = vrot.slane %v2563, 4
    %v3315 = vadd.f32 %v2563, %v3314
    %v3316 = vrot.slane %v3315, 2
    %v3317 = vadd.f32 %v3315, %v3316
    %v3318 = vrot.slane %v3317, 1
    %v3319 = vadd.f32 %v3317, %v3318
    %v3320 = vrot.slane %v2564, 4
    %v3321 = vadd.f32 %v2564, %v3320
    %v3322 = vrot.slane %v3321, 2
    %v3323 = vadd.f32 %v3321, %v3322
    %v3324 = vrot.slane %v3323, 1
    %v3325 = vadd.f32 %v3323, %v3324
    %v3326 = vrot.slane %v2565, 4
    %v3327 = vadd.f32 %v2565, %v3326
    %v3328 = vrot.slane %v3327, 2
    %v3329 = vadd.f32 %v3327, %v3328
    %v3330 = vrot.slane %v3329, 1
    %v3331 = vadd.f32 %v3329, %v3330
    %v3332 = vrot.slane %v2566, 4
    %v3333 = vadd.f32 %v2566, %v3332
    %v3334 = vrot.slane %v3333, 2
    %v3335 = vadd.f32 %v3333, %v3334
    %v3336 = vrot.slane %v3335, 1
    %v3337 = vadd.f32 %v3335, %v3336
    %v3338 = vrot.slane %v2567, 4
    %v3339 = vadd.f32 %v2567, %v3338
    %v3340 = vrot.slane %v3339, 2
    %v3341 = vadd.f32 %v3339, %v3340
    %v3342 = vrot.slane %v3341, 1
    %v3343 = vadd.f32 %v3341, %v3342
    %v3344 = vrot.slane %v2568, 4
    %v3345 = vadd.f32 %v2568, %v3344
    %v3346 = vrot.slane %v3345, 2
    %v3347 = vadd.f32 %v3345, %v3346
    %v3348 = vrot.slane %v3347, 1
    %v3349 = vadd.f32 %v3347, %v3348
    %v3350 = vrot.slane %v2569, 4
    %v3351 = vadd.f32 %v2569, %v3350
    %v3352 = vrot.slane %v3351, 2
    %v3353 = vadd.f32 %v3351, %v3352
    %v3354 = vrot.slane %v3353, 1
    %v3355 = vadd.f32 %v3353, %v3354
    %v3356 = vrot.slane %v2570, 4
    %v3357 = vadd.f32 %v2570, %v3356
    %v3358 = vrot.slane %v3357, 2
    %v3359 = vadd.f32 %v3357, %v3358
    %v3360 = vrot.slane %v3359, 1
    %v3361 = vadd.f32 %v3359, %v3360
    %v3362 = vrot.slane %v2571, 4
    %v3363 = vadd.f32 %v2571, %v3362
    %v3364 = vrot.slane %v3363, 2
    %v3365 = vadd.f32 %v3363, %v3364
    %v3366 = vrot.slane %v3365, 1
    %v3367 = vadd.f32 %v3365, %v3366
    %v3368 = vrot.slane %v2572, 4
    %v3369 = vadd.f32 %v2572, %v3368
    %v3370 = vrot.slane %v3369, 2
    %v3371 = vadd.f32 %v3369, %v3370
    %v3372 = vrot.slane %v3371, 1
    %v3373 = vadd.f32 %v3371, %v3372
    %v3374 = vrot.slane %v2573, 4
    %v3375 = vadd.f32 %v2573, %v3374
    %v3376 = vrot.slane %v3375, 2
    %v3377 = vadd.f32 %v3375, %v3376
    %v3378 = vrot.slane %v3377, 1
    %v3379 = vadd.f32 %v3377, %v3378
    %v3380 = vrot.slane %v2574, 4
    %v3381 = vadd.f32 %v2574, %v3380
    %v3382 = vrot.slane %v3381, 2
    %v3383 = vadd.f32 %v3381, %v3382
    %v3384 = vrot.slane %v3383, 1
    %v3385 = vadd.f32 %v3383, %v3384
    %v3386 = vrot.slane %v2575, 4
    %v3387 = vadd.f32 %v2575, %v3386
    %v3388 = vrot.slane %v3387, 2
    %v3389 = vadd.f32 %v3387, %v3388
    %v3390 = vrot.slane %v3389, 1
    %v3391 = vadd.f32 %v3389, %v3390
    %v3392 = vrot.slane %v2576, 4
    %v3393 = vadd.f32 %v2576, %v3392
    %v3394 = vrot.slane %v3393, 2
    %v3395 = vadd.f32 %v3393, %v3394
    %v3396 = vrot.slane %v3395, 1
    %v3397 = vadd.f32 %v3395, %v3396
    %v3398 = vrot.slane %v2577, 4
    %v3399 = vadd.f32 %v2577, %v3398
    %v3400 = vrot.slane %v3399, 2
    %v3401 = vadd.f32 %v3399, %v3400
    %v3402 = vrot.slane %v3401, 1
    %v3403 = vadd.f32 %v3401, %v3402
    %v3404 = vrot.slane %v2578, 4
    %v3405 = vadd.f32 %v2578, %v3404
    %v3406 = vrot.slane %v3405, 2
    %v3407 = vadd.f32 %v3405, %v3406
    %v3408 = vrot.slane %v3407, 1
    %v3409 = vadd.f32 %v3407, %v3408
    %v3410 = vrot.slane %v2579, 4
    %v3411 = vadd.f32 %v2579, %v3410
    %v3412 = vrot.slane %v3411, 2
    %v3413 = vadd.f32 %v3411, %v3412
    %v3414 = vrot.slane %v3413, 1
    %v3415 = vadd.f32 %v3413, %v3414
    %v3416 = vrot.slane %v2580, 4
    %v3417 = vadd.f32 %v2580, %v3416
    %v3418 = vrot.slane %v3417, 2
    %v3419 = vadd.f32 %v3417, %v3418
    %v3420 = vrot.slane %v3419, 1
    %v3421 = vadd.f32 %v3419, %v3420
    %v3422 = vrot.slane %v2581, 4
    %v3423 = vadd.f32 %v2581, %v3422
    %v3424 = vrot.slane %v3423, 2
    %v3425 = vadd.f32 %v3423, %v3424
    %v3426 = vrot.slane %v3425, 1
    %v3427 = vadd.f32 %v3425, %v3426
    %v3428 = vrot.slane %v2582, 4
    %v3429 = vadd.f32 %v2582, %v3428
    %v3430 = vrot.slane %v3429, 2
    %v3431 = vadd.f32 %v3429, %v3430
    %v3432 = vrot.slane %v3431, 1
    %v3433 = vadd.f32 %v3431, %v3432
    %v3434 = vrot.slane %v2583, 4
    %v3435 = vadd.f32 %v2583, %v3434
    %v3436 = vrot.slane %v3435, 2
    %v3437 = vadd.f32 %v3435, %v3436
    %v3438 = vrot.slane %v3437, 1
    %v3439 = vadd.f32 %v3437, %v3438
    %v3440 = vrot.slane %v2584, 4
    %v3441 = vadd.f32 %v2584, %v3440
    %v3442 = vrot.slane %v3441, 2
    %v3443 = vadd.f32 %v3441, %v3442
    %v3444 = vrot.slane %v3443, 1
    %v3445 = vadd.f32 %v3443, %v3444
    %v3446 = vrot.slane %v2585, 4
    %v3447 = vadd.f32 %v2585, %v3446
    %v3448 = vrot.slane %v3447, 2
    %v3449 = vadd.f32 %v3447, %v3448
    %v3450 = vrot.slane %v3449, 1
    %v3451 = vadd.f32 %v3449, %v3450
    %v3452 = vrot.slane %v2586, 4
    %v3453 = vadd.f32 %v2586, %v3452
    %v3454 = vrot.slane %v3453, 2
    %v3455 = vadd.f32 %v3453, %v3454
    %v3456 = vrot.slane %v3455, 1
    %v3457 = vadd.f32 %v3455, %v3456
    %v3458 = vrot.slane %v2587, 4
    %v3459 = vadd.f32 %v2587, %v3458
    %v3460 = vrot.slane %v3459, 2
    %v3461 = vadd.f32 %v3459, %v3460
    %v3462 = vrot.slane %v3461, 1
    %v3463 = vadd.f32 %v3461, %v3462
    %v3464 = vrot.slane %v2588, 4
    %v3465 = vadd.f32 %v2588, %v3464
    %v3466 = vrot.slane %v3465, 2
    %v3467 = vadd.f32 %v3465, %v3466
    %v3468 = vrot.slane %v3467, 1
    %v3469 = vadd.f32 %v3467, %v3468
    %v3470 = vrot.slane %v2589, 4
    %v3471 = vadd.f32 %v2589, %v3470
    %v3472 = vrot.slane %v3471, 2
    %v3473 = vadd.f32 %v3471, %v3472
    %v3474 = vrot.slane %v3473, 1
    %v3475 = vadd.f32 %v3473, %v3474
    %v3476 = vrot.slane %v2590, 4
    %v3477 = vadd.f32 %v2590, %v3476
    %v3478 = vrot.slane %v3477, 2
    %v3479 = vadd.f32 %v3477, %v3478
    %v3480 = vrot.slane %v3479, 1
    %v3481 = vadd.f32 %v3479, %v3480
    %v3482 = vrot.slane %v2591, 4
    %v3483 = vadd.f32 %v2591, %v3482
    %v3484 = vrot.slane %v3483, 2
    %v3485 = vadd.f32 %v3483, %v3484
    %v3486 = vrot.slane %v3485, 1
    %v3487 = vadd.f32 %v3485, %v3486
    %v3488 = vrot.slane %v2592, 4
    %v3489 = vadd.f32 %v2592, %v3488
    %v3490 = vrot.slane %v3489, 2
    %v3491 = vadd.f32 %v3489, %v3490
    %v3492 = vrot.slane %v3491, 1
    %v3493 = vadd.f32 %v3491, %v3492
    %v3494 = vrot.slane %v2593, 4
    %v3495 = vadd.f32 %v2593, %v3494
    %v3496 = vrot.slane %v3495, 2
    %v3497 = vadd.f32 %v3495, %v3496
    %v3498 = vrot.slane %v3497, 1
    %v3499 = vadd.f32 %v3497, %v3498
    %v3500 = vrot.slane %v2594, 4
    %v3501 = vadd.f32 %v2594, %v3500
    %v3502 = vrot.slane %v3501, 2
    %v3503 = vadd.f32 %v3501, %v3502
    %v3504 = vrot.slane %v3503, 1
    %v3505 = vadd.f32 %v3503, %v3504
    %v3506 = vrot.slane %v2595, 4
    %v3507 = vadd.f32 %v2595, %v3506
    %v3508 = vrot.slane %v3507, 2
    %v3509 = vadd.f32 %v3507, %v3508
    %v3510 = vrot.slane %v3509, 1
    %v3511 = vadd.f32 %v3509, %v3510
    %v3512 = vrot.slane %v2596, 4
    %v3513 = vadd.f32 %v2596, %v3512
    %v3514 = vrot.slane %v3513, 2
    %v3515 = vadd.f32 %v3513, %v3514
    %v3516 = vrot.slane %v3515, 1
    %v3517 = vadd.f32 %v3515, %v3516
    %v3518 = vrot.slane %v2597, 4
    %v3519 = vadd.f32 %v2597, %v3518
    %v3520 = vrot.slane %v3519, 2
    %v3521 = vadd.f32 %v3519, %v3520
    %v3522 = vrot.slane %v3521, 1
    %v3523 = vadd.f32 %v3521, %v3522
    %v3524 = vrot.slane %v2598, 4
    %v3525 = vadd.f32 %v2598, %v3524
    %v3526 = vrot.slane %v3525, 2
    %v3527 = vadd.f32 %v3525, %v3526
    %v3528 = vrot.slane %v3527, 1
    %v3529 = vadd.f32 %v3527, %v3528
    %v3530 = vrot.slane %v2599, 4
    %v3531 = vadd.f32 %v2599, %v3530
    %v3532 = vrot.slane %v3531, 2
    %v3533 = vadd.f32 %v3531, %v3532
    %v3534 = vrot.slane %v3533, 1
    %v3535 = vadd.f32 %v3533, %v3534
    %v3536 = vrot.slane %v2600, 4
    %v3537 = vadd.f32 %v2600, %v3536
    %v3538 = vrot.slane %v3537, 2
    %v3539 = vadd.f32 %v3537, %v3538
    %v3540 = vrot.slane %v3539, 1
    %v3541 = vadd.f32 %v3539, %v3540
    %v3542 = vrot.slane %v2601, 4
    %v3543 = vadd.f32 %v2601, %v3542
    %v3544 = vrot.slane %v3543, 2
    %v3545 = vadd.f32 %v3543, %v3544
    %v3546 = vrot.slane %v3545, 1
    %v3547 = vadd.f32 %v3545, %v3546
    %v3548 = vrot.slane %v2602, 4
    %v3549 = vadd.f32 %v2602, %v3548
    %v3550 = vrot.slane %v3549, 2
    %v3551 = vadd.f32 %v3549, %v3550
    %v3552 = vrot.slane %v3551, 1
    %v3553 = vadd.f32 %v3551, %v3552
    %v3554 = vrot.slane %v2603, 4
    %v3555 = vadd.f32 %v2603, %v3554
    %v3556 = vrot.slane %v3555, 2
    %v3557 = vadd.f32 %v3555, %v3556
    %v3558 = vrot.slane %v3557, 1
    %v3559 = vadd.f32 %v3557, %v3558
    %v3560 = vrot.slane %v2604, 4
    %v3561 = vadd.f32 %v2604, %v3560
    %v3562 = vrot.slane %v3561, 2
    %v3563 = vadd.f32 %v3561, %v3562
    %v3564 = vrot.slane %v3563, 1
    %v3565 = vadd.f32 %v3563, %v3564
    %v3566 = vrot.slane %v2605, 4
    %v3567 = vadd.f32 %v2605, %v3566
    %v3568 = vrot.slane %v3567, 2
    %v3569 = vadd.f32 %v3567, %v3568
    %v3570 = vrot.slane %v3569, 1
    %v3571 = vadd.f32 %v3569, %v3570
    %v3572 = vrot.slane %v2606, 4
    %v3573 = vadd.f32 %v2606, %v3572
    %v3574 = vrot.slane %v3573, 2
    %v3575 = vadd.f32 %v3573, %v3574
    %v3576 = vrot.slane %v3575, 1
    %v3577 = vadd.f32 %v3575, %v3576
    %v3578 = vrot.slane %v2607, 4
    %v3579 = vadd.f32 %v2607, %v3578
    %v3580 = vrot.slane %v3579, 2
    %v3581 = vadd.f32 %v3579, %v3580
    %v3582 = vrot.slane %v3581, 1
    %v3583 = vadd.f32 %v3581, %v3582
    %v3584 = vrot.slane %v2608, 4
    %v3585 = vadd.f32 %v2608, %v3584
    %v3586 = vrot.slane %v3585, 2
    %v3587 = vadd.f32 %v3585, %v3586
    %v3588 = vrot.slane %v3587, 1
    %v3589 = vadd.f32 %v3587, %v3588
    %v3590 = vrot.slane %v2609, 4
    %v3591 = vadd.f32 %v2609, %v3590
    %v3592 = vrot.slane %v3591, 2
    %v3593 = vadd.f32 %v3591, %v3592
    %v3594 = vrot.slane %v3593, 1
    %v3595 = vadd.f32 %v3593, %v3594
    %v3596 = vrot.slane %v2610, 4
    %v3597 = vadd.f32 %v2610, %v3596
    %v3598 = vrot.slane %v3597, 2
    %v3599 = vadd.f32 %v3597, %v3598
    %v3600 = vrot.slane %v3599, 1
    %v3601 = vadd.f32 %v3599, %v3600
    %v3602 = vrot.slane %v2611, 4
    %v3603 = vadd.f32 %v2611, %v3602
    %v3604 = vrot.slane %v3603, 2
    %v3605 = vadd.f32 %v3603, %v3604
    %v3606 = vrot.slane %v3605, 1
    %v3607 = vadd.f32 %v3605, %v3606
    %v3608 = vrot.slane %v2612, 4
    %v3609 = vadd.f32 %v2612, %v3608
    %v3610 = vrot.slane %v3609, 2
    %v3611 = vadd.f32 %v3609, %v3610
    %v3612 = vrot.slane %v3611, 1
    %v3613 = vadd.f32 %v3611, %v3612
    %v3614 = vrot.slane %v2613, 4
    %v3615 = vadd.f32 %v2613, %v3614
    %v3616 = vrot.slane %v3615, 2
    %v3617 = vadd.f32 %v3615, %v3616
    %v3618 = vrot.slane %v3617, 1
    %v3619 = vadd.f32 %v3617, %v3618
    %v3620 = vrot.slane %v2614, 4
    %v3621 = vadd.f32 %v2614, %v3620
    %v3622 = vrot.slane %v3621, 2
    %v3623 = vadd.f32 %v3621, %v3622
    %v3624 = vrot.slane %v3623, 1
    %v3625 = vadd.f32 %v3623, %v3624
    %v3626 = vrot.slane %v2615, 4
    %v3627 = vadd.f32 %v2615, %v3626
    %v3628 = vrot.slane %v3627, 2
    %v3629 = vadd.f32 %v3627, %v3628
    %v3630 = vrot.slane %v3629, 1
    %v3631 = vadd.f32 %v3629, %v3630
    %v3632 = vrot.slane %v2616, 4
    %v3633 = vadd.f32 %v2616, %v3632
    %v3634 = vrot.slane %v3633, 2
    %v3635 = vadd.f32 %v3633, %v3634
    %v3636 = vrot.slane %v3635, 1
    %v3637 = vadd.f32 %v3635, %v3636
    %v3638 = vrot.slane %v2617, 4
    %v3639 = vadd.f32 %v2617, %v3638
    %v3640 = vrot.slane %v3639, 2
    %v3641 = vadd.f32 %v3639, %v3640
    %v3642 = vrot.slane %v3641, 1
    %v3643 = vadd.f32 %v3641, %v3642
    %v3644 = vrot.slane %v2618, 4
    %v3645 = vadd.f32 %v2618, %v3644
    %v3646 = vrot.slane %v3645, 2
    %v3647 = vadd.f32 %v3645, %v3646
    %v3648 = vrot.slane %v3647, 1
    %v3649 = vadd.f32 %v3647, %v3648
    %v3650 = vrot.slane %v2619, 4
    %v3651 = vadd.f32 %v2619, %v3650
    %v3652 = vrot.slane %v3651, 2
    %v3653 = vadd.f32 %v3651, %v3652
    %v3654 = vrot.slane %v3653, 1
    %v3655 = vadd.f32 %v3653, %v3654
    %v3656 = vrot.slane %v2620, 4
    %v3657 = vadd.f32 %v2620, %v3656
    %v3658 = vrot.slane %v3657, 2
    %v3659 = vadd.f32 %v3657, %v3658
    %v3660 = vrot.slane %v3659, 1
    %v3661 = vadd.f32 %v3659, %v3660
    %v3662 = vrot.slane %v2621, 4
    %v3663 = vadd.f32 %v2621, %v3662
    %v3664 = vrot.slane %v3663, 2
    %v3665 = vadd.f32 %v3663, %v3664
    %v3666 = vrot.slane %v3665, 1
    %v3667 = vadd.f32 %v3665, %v3666
    %v3668 = vrot.slane %v2622, 4
    %v3669 = vadd.f32 %v2622, %v3668
    %v3670 = vrot.slane %v3669, 2
    %v3671 = vadd.f32 %v3669, %v3670
    %v3672 = vrot.slane %v3671, 1
    %v3673 = vadd.f32 %v3671, %v3672
    %v3674 = vrot.slane %v2623, 4
    %v3675 = vadd.f32 %v2623, %v3674
    %v3676 = vrot.slane %v3675, 2
    %v3677 = vadd.f32 %v3675, %v3676
    %v3678 = vrot.slane %v3677, 1
    %v3679 = vadd.f32 %v3677, %v3678
    %v3680 = vrot.slane %v2624, 4
    %v3681 = vadd.f32 %v2624, %v3680
    %v3682 = vrot.slane %v3681, 2
    %v3683 = vadd.f32 %v3681, %v3682
    %v3684 = vrot.slane %v3683, 1
    %v3685 = vadd.f32 %v3683, %v3684
    %v3686 = vrot.slane %v2625, 4
    %v3687 = vadd.f32 %v2625, %v3686
    %v3688 = vrot.slane %v3687, 2
    %v3689 = vadd.f32 %v3687, %v3688
    %v3690 = vrot.slane %v3689, 1
    %v3691 = vadd.f32 %v3689, %v3690
    %v3692 = vrot.slane %v2626, 4
    %v3693 = vadd.f32 %v2626, %v3692
    %v3694 = vrot.slane %v3693, 2
    %v3695 = vadd.f32 %v3693, %v3694
    %v3696 = vrot.slane %v3695, 1
    %v3697 = vadd.f32 %v3695, %v3696
    %v3698 = vrot.slane %v2627, 4
    %v3699 = vadd.f32 %v2627, %v3698
    %v3700 = vrot.slane %v3699, 2
    %v3701 = vadd.f32 %v3699, %v3700
    %v3702 = vrot.slane %v3701, 1
    %v3703 = vadd.f32 %v3701, %v3702
    %v3704 = vrot.slane %v2628, 4
    %v3705 = vadd.f32 %v2628, %v3704
    %v3706 = vrot.slane %v3705, 2
    %v3707 = vadd.f32 %v3705, %v3706
    %v3708 = vrot.slane %v3707, 1
    %v3709 = vadd.f32 %v3707, %v3708
    %v3710 = vrot.slane %v2629, 4
    %v3711 = vadd.f32 %v2629, %v3710
    %v3712 = vrot.slane %v3711, 2
    %v3713 = vadd.f32 %v3711, %v3712
    %v3714 = vrot.slane %v3713, 1
    %v3715 = vadd.f32 %v3713, %v3714
    %v3716 = vrot.slane %v2630, 4
    %v3717 = vadd.f32 %v2630, %v3716
    %v3718 = vrot.slane %v3717, 2
    %v3719 = vadd.f32 %v3717, %v3718
    %v3720 = vrot.slane %v3719, 1
    %v3721 = vadd.f32 %v3719, %v3720
    %v3722 = vrot.slane %v2631, 4
    %v3723 = vadd.f32 %v2631, %v3722
    %v3724 = vrot.slane %v3723, 2
    %v3725 = vadd.f32 %v3723, %v3724
    %v3726 = vrot.slane %v3725, 1
    %v3727 = vadd.f32 %v3725, %v3726
    %v3728 = vrot.slane %v2632, 4
    %v3729 = vadd.f32 %v2632, %v3728
    %v3730 = vrot.slane %v3729, 2
    %v3731 = vadd.f32 %v3729, %v3730
    %v3732 = vrot.slane %v3731, 1
    %v3733 = vadd.f32 %v3731, %v3732
    %v3734 = vrot.slane %v2633, 4
    %v3735 = vadd.f32 %v2633, %v3734
    %v3736 = vrot.slane %v3735, 2
    %v3737 = vadd.f32 %v3735, %v3736
    %v3738 = vrot.slane %v3737, 1
    %v3739 = vadd.f32 %v3737, %v3738
    %v3740 = vrot.slane %v2634, 4
    %v3741 = vadd.f32 %v2634, %v3740
    %v3742 = vrot.slane %v3741, 2
    %v3743 = vadd.f32 %v3741, %v3742
    %v3744 = vrot.slane %v3743, 1
    %v3745 = vadd.f32 %v3743, %v3744
    %v3746 = vrot.slane %v2635, 4
    %v3747 = vadd.f32 %v2635, %v3746
    %v3748 = vrot.slane %v3747, 2
    %v3749 = vadd.f32 %v3747, %v3748
    %v3750 = vrot.slane %v3749, 1
    %v3751 = vadd.f32 %v3749, %v3750
    %v3752 = vrot.slane %v2636, 4
    %v3753 = vadd.f32 %v2636, %v3752
    %v3754 = vrot.slane %v3753, 2
    %v3755 = vadd.f32 %v3753, %v3754
    %v3756 = vrot.slane %v3755, 1
    %v3757 = vadd.f32 %v3755, %v3756
    %v3758 = vrot.slane %v2637, 4
    %v3759 = vadd.f32 %v2637, %v3758
    %v3760 = vrot.slane %v3759, 2
    %v3761 = vadd.f32 %v3759, %v3760
    %v3762 = vrot.slane %v3761, 1
    %v3763 = vadd.f32 %v3761, %v3762
    %v3764 = vrot.slane %v2638, 4
    %v3765 = vadd.f32 %v2638, %v3764
    %v3766 = vrot.slane %v3765, 2
    %v3767 = vadd.f32 %v3765, %v3766
    %v3768 = vrot.slane %v3767, 1
    %v3769 = vadd.f32 %v3767, %v3768
    %v3770 = vrot.slane %v2639, 4
    %v3771 = vadd.f32 %v2639, %v3770
    %v3772 = vrot.slane %v3771, 2
    %v3773 = vadd.f32 %v3771, %v3772
    %v3774 = vrot.slane %v3773, 1
    %v3775 = vadd.f32 %v3773, %v3774
    %v3776 = vrot.slane %v2640, 4
    %v3777 = vadd.f32 %v2640, %v3776
    %v3778 = vrot.slane %v3777, 2
    %v3779 = vadd.f32 %v3777, %v3778
    %v3780 = vrot.slane %v3779, 1
    %v3781 = vadd.f32 %v3779, %v3780
    %v3782 = vrot.slane %v2641, 4
    %v3783 = vadd.f32 %v2641, %v3782
    %v3784 = vrot.slane %v3783, 2
    %v3785 = vadd.f32 %v3783, %v3784
    %v3786 = vrot.slane %v3785, 1
    %v3787 = vadd.f32 %v3785, %v3786
    %v3788 = vrot.slane %v2642, 4
    %v3789 = vadd.f32 %v2642, %v3788
    %v3790 = vrot.slane %v3789, 2
    %v3791 = vadd.f32 %v3789, %v3790
    %v3792 = vrot.slane %v3791, 1
    %v3793 = vadd.f32 %v3791, %v3792
    %v3794 = vrot.slane %v2643, 4
    %v3795 = vadd.f32 %v2643, %v3794
    %v3796 = vrot.slane %v3795, 2
    %v3797 = vadd.f32 %v3795, %v3796
    %v3798 = vrot.slane %v3797, 1
    %v3799 = vadd.f32 %v3797, %v3798
    %v3800 = vrot.slane %v2644, 4
    %v3801 = vadd.f32 %v2644, %v3800
    %v3802 = vrot.slane %v3801, 2
    %v3803 = vadd.f32 %v3801, %v3802
    %v3804 = vrot.slane %v3803, 1
    %v3805 = vadd.f32 %v3803, %v3804
    %v3806 = vrot.slane %v2645, 4
    %v3807 = vadd.f32 %v2645, %v3806
    %v3808 = vrot.slane %v3807, 2
    %v3809 = vadd.f32 %v3807, %v3808
    %v3810 = vrot.slane %v3809, 1
    %v3811 = vadd.f32 %v3809, %v3810
    %v3812 = vrot.slane %v2646, 4
    %v3813 = vadd.f32 %v2646, %v3812
    %v3814 = vrot.slane %v3813, 2
    %v3815 = vadd.f32 %v3813, %v3814
    %v3816 = vrot.slane %v3815, 1
    %v3817 = vadd.f32 %v3815, %v3816
    %v3818 = vrot.slane %v2647, 4
    %v3819 = vadd.f32 %v2647, %v3818
    %v3820 = vrot.slane %v3819, 2
    %v3821 = vadd.f32 %v3819, %v3820
    %v3822 = vrot.slane %v3821, 1
    %v3823 = vadd.f32 %v3821, %v3822
    %v3824 = vrot.slane %v2648, 4
    %v3825 = vadd.f32 %v2648, %v3824
    %v3826 = vrot.slane %v3825, 2
    %v3827 = vadd.f32 %v3825, %v3826
    %v3828 = vrot.slane %v3827, 1
    %v3829 = vadd.f32 %v3827, %v3828
    %v3830 = vrot.slane %v2649, 4
    %v3831 = vadd.f32 %v2649, %v3830
    %v3832 = vrot.slane %v3831, 2
    %v3833 = vadd.f32 %v3831, %v3832
    %v3834 = vrot.slane %v3833, 1
    %v3835 = vadd.f32 %v3833, %v3834
    %v3836 = vrot.slane %v2650, 4
    %v3837 = vadd.f32 %v2650, %v3836
    %v3838 = vrot.slane %v3837, 2
    %v3839 = vadd.f32 %v3837, %v3838
    %v3840 = vrot.slane %v3839, 1
    %v3841 = vadd.f32 %v3839, %v3840
    %v3842 = vrot.slane %v2651, 4
    %v3843 = vadd.f32 %v2651, %v3842
    %v3844 = vrot.slane %v3843, 2
    %v3845 = vadd.f32 %v3843, %v3844
    %v3846 = vrot.slane %v3845, 1
    %v3847 = vadd.f32 %v3845, %v3846
    %v3848 = vrot.slane %v2652, 4
    %v3849 = vadd.f32 %v2652, %v3848
    %v3850 = vrot.slane %v3849, 2
    %v3851 = vadd.f32 %v3849, %v3850
    %v3852 = vrot.slane %v3851, 1
    %v3853 = vadd.f32 %v3851, %v3852
    %v3854 = vrot.slane %v2653, 4
    %v3855 = vadd.f32 %v2653, %v3854
    %v3856 = vrot.slane %v3855, 2
    %v3857 = vadd.f32 %v3855, %v3856
    %v3858 = vrot.slane %v3857, 1
    %v3859 = vadd.f32 %v3857, %v3858
    %v3860 = vrot.slane %v2654, 4
    %v3861 = vadd.f32 %v2654, %v3860
    %v3862 = vrot.slane %v3861, 2
    %v3863 = vadd.f32 %v3861, %v3862
    %v3864 = vrot.slane %v3863, 1
    %v3865 = vadd.f32 %v3863, %v3864
    %v3866 = vrot.slane %v2655, 4
    %v3867 = vadd.f32 %v2655, %v3866
    %v3868 = vrot.slane %v3867, 2
    %v3869 = vadd.f32 %v3867, %v3868
    %v3870 = vrot.slane %v3869, 1
    %v3871 = vadd.f32 %v3869, %v3870
    %v3872 = vrot.slane %v2656, 4
    %v3873 = vadd.f32 %v2656, %v3872
    %v3874 = vrot.slane %v3873, 2
    %v3875 = vadd.f32 %v3873, %v3874
    %v3876 = vrot.slane %v3875, 1
    %v3877 = vadd.f32 %v3875, %v3876
    %v3878 = vrot.slane %v2657, 4
    %v3879 = vadd.f32 %v2657, %v3878
    %v3880 = vrot.slane %v3879, 2
    %v3881 = vadd.f32 %v3879, %v3880
    %v3882 = vrot.slane %v3881, 1
    %v3883 = vadd.f32 %v3881, %v3882
    %v3884 = vrot.slane %v2658, 4
    %v3885 = vadd.f32 %v2658, %v3884
    %v3886 = vrot.slane %v3885, 2
    %v3887 = vadd.f32 %v3885, %v3886
    %v3888 = vrot.slane %v3887, 1
    %v3889 = vadd.f32 %v3887, %v3888
    %v3890 = vrot.slane %v2659, 4
    %v3891 = vadd.f32 %v2659, %v3890
    %v3892 = vrot.slane %v3891, 2
    %v3893 = vadd.f32 %v3891, %v3892
    %v3894 = vrot.slane %v3893, 1
    %v3895 = vadd.f32 %v3893, %v3894
    %v3896 = vrot.slane %v2660, 4
    %v3897 = vadd.f32 %v2660, %v3896
    %v3898 = vrot.slane %v3897, 2
    %v3899 = vadd.f32 %v3897, %v3898
    %v3900 = vrot.slane %v3899, 1
    %v3901 = vadd.f32 %v3899, %v3900
    %v3902 = vrot.slane %v2661, 4
    %v3903 = vadd.f32 %v2661, %v3902
    %v3904 = vrot.slane %v3903, 2
    %v3905 = vadd.f32 %v3903, %v3904
    %v3906 = vrot.slane %v3905, 1
    %v3907 = vadd.f32 %v3905, %v3906
    %v3908 = vrot.slane %v2662, 4
    %v3909 = vadd.f32 %v2662, %v3908
    %v3910 = vrot.slane %v3909, 2
    %v3911 = vadd.f32 %v3909, %v3910
    %v3912 = vrot.slane %v3911, 1
    %v3913 = vadd.f32 %v3911, %v3912
    %v3914 = vrot.slane %v2663, 4
    %v3915 = vadd.f32 %v2663, %v3914
    %v3916 = vrot.slane %v3915, 2
    %v3917 = vadd.f32 %v3915, %v3916
    %v3918 = vrot.slane %v3917, 1
    %v3919 = vadd.f32 %v3917, %v3918
    %v3920 = vrot.slane %v2664, 4
    %v3921 = vadd.f32 %v2664, %v3920
    %v3922 = vrot.slane %v3921, 2
    %v3923 = vadd.f32 %v3921, %v3922
    %v3924 = vrot.slane %v3923, 1
    %v3925 = vadd.f32 %v3923, %v3924
    %v3926 = vrot.slane %v2665, 4
    %v3927 = vadd.f32 %v2665, %v3926
    %v3928 = vrot.slane %v3927, 2
    %v3929 = vadd.f32 %v3927, %v3928
    %v3930 = vrot.slane %v3929, 1
    %v3931 = vadd.f32 %v3929, %v3930
    %v3932 = vrot.slane %v2666, 4
    %v3933 = vadd.f32 %v2666, %v3932
    %v3934 = vrot.slane %v3933, 2
    %v3935 = vadd.f32 %v3933, %v3934
    %v3936 = vrot.slane %v3935, 1
    %v3937 = vadd.f32 %v3935, %v3936
    %v3938 = vrot.slane %v2667, 4
    %v3939 = vadd.f32 %v2667, %v3938
    %v3940 = vrot.slane %v3939, 2
    %v3941 = vadd.f32 %v3939, %v3940
    %v3942 = vrot.slane %v3941, 1
    %v3943 = vadd.f32 %v3941, %v3942
    %v3944 = vrot.slane %v2668, 4
    %v3945 = vadd.f32 %v2668, %v3944
    %v3946 = vrot.slane %v3945, 2
    %v3947 = vadd.f32 %v3945, %v3946
    %v3948 = vrot.slane %v3947, 1
    %v3949 = vadd.f32 %v3947, %v3948
    %v3950 = vrot.slane %v2669, 4
    %v3951 = vadd.f32 %v2669, %v3950
    %v3952 = vrot.slane %v3951, 2
    %v3953 = vadd.f32 %v3951, %v3952
    %v3954 = vrot.slane %v3953, 1
    %v3955 = vadd.f32 %v3953, %v3954
    %v3956 = vrot.slane %v2670, 4
    %v3957 = vadd.f32 %v2670, %v3956
    %v3958 = vrot.slane %v3957, 2
    %v3959 = vadd.f32 %v3957, %v3958
    %v3960 = vrot.slane %v3959, 1
    %v3961 = vadd.f32 %v3959, %v3960
    %v3962 = vrot.slane %v2671, 4
    %v3963 = vadd.f32 %v2671, %v3962
    %v3964 = vrot.slane %v3963, 2
    %v3965 = vadd.f32 %v3963, %v3964
    %v3966 = vrot.slane %v3965, 1
    %v3967 = vadd.f32 %v3965, %v3966
    %v3968 = vrot.slane %v2672, 4
    %v3969 = vadd.f32 %v2672, %v3968
    %v3970 = vrot.slane %v3969, 2
    %v3971 = vadd.f32 %v3969, %v3970
    %v3972 = vrot.slane %v3971, 1
    %v3973 = vadd.f32 %v3971, %v3972
    %v3974 = vrot.slane %v2673, 4
    %v3975 = vadd.f32 %v2673, %v3974
    %v3976 = vrot.slane %v3975, 2
    %v3977 = vadd.f32 %v3975, %v3976
    %v3978 = vrot.slane %v3977, 1
    %v3979 = vadd.f32 %v3977, %v3978
    %v3980 = vrot.slane %v2674, 4
    %v3981 = vadd.f32 %v2674, %v3980
    %v3982 = vrot.slane %v3981, 2
    %v3983 = vadd.f32 %v3981, %v3982
    %v3984 = vrot.slane %v3983, 1
    %v3985 = vadd.f32 %v3983, %v3984
    %v3986 = vrot.slane %v2675, 4
    %v3987 = vadd.f32 %v2675, %v3986
    %v3988 = vrot.slane %v3987, 2
    %v3989 = vadd.f32 %v3987, %v3988
    %v3990 = vrot.slane %v3989, 1
    %v3991 = vadd.f32 %v3989, %v3990
    %v3992 = vrot.slane %v2676, 4
    %v3993 = vadd.f32 %v2676, %v3992
    %v3994 = vrot.slane %v3993, 2
    %v3995 = vadd.f32 %v3993, %v3994
    %v3996 = vrot.slane %v3995, 1
    %v3997 = vadd.f32 %v3995, %v3996
    %v3998 = vrot.slane %v2677, 4
    %v3999 = vadd.f32 %v2677, %v3998
    %v4000 = vrot.slane %v3999, 2
    %v4001 = vadd.f32 %v3999, %v4000
    %v4002 = vrot.slane %v4001, 1
    %v4003 = vadd.f32 %v4001, %v4002
    %v4004 = vrot.slane %v2678, 4
    %v4005 = vadd.f32 %v2678, %v4004
    %v4006 = vrot.slane %v4005, 2
    %v4007 = vadd.f32 %v4005, %v4006
    %v4008 = vrot.slane %v4007, 1
    %v4009 = vadd.f32 %v4007, %v4008
    %v4010 = vrot.slane %v2679, 4
    %v4011 = vadd.f32 %v2679, %v4010
    %v4012 = vrot.slane %v4011, 2
    %v4013 = vadd.f32 %v4011, %v4012
    %v4014 = vrot.slane %v4013, 1
    %v4015 = vadd.f32 %v4013, %v4014
    %v4016 = vrot.slane %v2680, 4
    %v4017 = vadd.f32 %v2680, %v4016
    %v4018 = vrot.slane %v4017, 2
    %v4019 = vadd.f32 %v4017, %v4018
    %v4020 = vrot.slane %v4019, 1
    %v4021 = vadd.f32 %v4019, %v4020
    %v4022 = vrot.slane %v2681, 4
    %v4023 = vadd.f32 %v2681, %v4022
    %v4024 = vrot.slane %v4023, 2
    %v4025 = vadd.f32 %v4023, %v4024
    %v4026 = vrot.slane %v4025, 1
    %v4027 = vadd.f32 %v4025, %v4026
    %v4028 = vrot.slane %v2682, 4
    %v4029 = vadd.f32 %v2682, %v4028
    %v4030 = vrot.slane %v4029, 2
    %v4031 = vadd.f32 %v4029, %v4030
    %v4032 = vrot.slane %v4031, 1
    %v4033 = vadd.f32 %v4031, %v4032
    %v4034 = vrot.slane %v2683, 4
    %v4035 = vadd.f32 %v2683, %v4034
    %v4036 = vrot.slane %v4035, 2
    %v4037 = vadd.f32 %v4035, %v4036
    %v4038 = vrot.slane %v4037, 1
    %v4039 = vadd.f32 %v4037, %v4038
    %v4040 = vrot.slane %v2684, 4
    %v4041 = vadd.f32 %v2684, %v4040
    %v4042 = vrot.slane %v4041, 2
    %v4043 = vadd.f32 %v4041, %v4042
    %v4044 = vrot.slane %v4043, 1
    %v4045 = vadd.f32 %v4043, %v4044
    %v4046 = vrot.slane %v2685, 4
    %v4047 = vadd.f32 %v2685, %v4046
    %v4048 = vrot.slane %v4047, 2
    %v4049 = vadd.f32 %v4047, %v4048
    %v4050 = vrot.slane %v4049, 1
    %v4051 = vadd.f32 %v4049, %v4050
    %v4052 = vrot.slane %v2686, 4
    %v4053 = vadd.f32 %v2686, %v4052
    %v4054 = vrot.slane %v4053, 2
    %v4055 = vadd.f32 %v4053, %v4054
    %v4056 = vrot.slane %v4055, 1
    %v4057 = vadd.f32 %v4055, %v4056
    %v4058 = vrot.slane %v2687, 4
    %v4059 = vadd.f32 %v2687, %v4058
    %v4060 = vrot.slane %v4059, 2
    %v4061 = vadd.f32 %v4059, %v4060
    %v4062 = vrot.slane %v4061, 1
    %v4063 = vadd.f32 %v4061, %v4062
    %v4064 = vrot.slane %v2688, 4
    %v4065 = vadd.f32 %v2688, %v4064
    %v4066 = vrot.slane %v4065, 2
    %v4067 = vadd.f32 %v4065, %v4066
    %v4068 = vrot.slane %v4067, 1
    %v4069 = vadd.f32 %v4067, %v4068
    %v4070 = vrot.slane %v2689, 4
    %v4071 = vadd.f32 %v2689, %v4070
    %v4072 = vrot.slane %v4071, 2
    %v4073 = vadd.f32 %v4071, %v4072
    %v4074 = vrot.slane %v4073, 1
    %v4075 = vadd.f32 %v4073, %v4074
    %v4076 = vrot.slane %v2690, 4
    %v4077 = vadd.f32 %v2690, %v4076
    %v4078 = vrot.slane %v4077, 2
    %v4079 = vadd.f32 %v4077, %v4078
    %v4080 = vrot.slane %v4079, 1
    %v4081 = vadd.f32 %v4079, %v4080
    %v4082 = vrot.slane %v2691, 4
    %v4083 = vadd.f32 %v2691, %v4082
    %v4084 = vrot.slane %v4083, 2
    %v4085 = vadd.f32 %v4083, %v4084
    %v4086 = vrot.slane %v4085, 1
    %v4087 = vadd.f32 %v4085, %v4086
    %v4088 = vrot.slane %v2692, 4
    %v4089 = vadd.f32 %v2692, %v4088
    %v4090 = vrot.slane %v4089, 2
    %v4091 = vadd.f32 %v4089, %v4090
    %v4092 = vrot.slane %v4091, 1
    %v4093 = vadd.f32 %v4091, %v4092
    %v4094 = vrot.slane %v2693, 4
    %v4095 = vadd.f32 %v2693, %v4094
    %v4096 = vrot.slane %v4095, 2
    %v4097 = vadd.f32 %v4095, %v4096
    %v4098 = vrot.slane %v4097, 1
    %v4099 = vadd.f32 %v4097, %v4098
    %v4100 = vrot.slane %v2694, 4
    %v4101 = vadd.f32 %v2694, %v4100
    %v4102 = vrot.slane %v4101, 2
    %v4103 = vadd.f32 %v4101, %v4102
    %v4104 = vrot.slane %v4103, 1
    %v4105 = vadd.f32 %v4103, %v4104
    %v4106 = vrot.slane %v2695, 4
    %v4107 = vadd.f32 %v2695, %v4106
    %v4108 = vrot.slane %v4107, 2
    %v4109 = vadd.f32 %v4107, %v4108
    %v4110 = vrot.slane %v4109, 1
    %v4111 = vadd.f32 %v4109, %v4110
    %v4112 = vrot.slane %v2696, 4
    %v4113 = vadd.f32 %v2696, %v4112
    %v4114 = vrot.slane %v4113, 2
    %v4115 = vadd.f32 %v4113, %v4114
    %v4116 = vrot.slane %v4115, 1
    %v4117 = vadd.f32 %v4115, %v4116
    %v4118 = vrot.slane %v2697, 4
    %v4119 = vadd.f32 %v2697, %v4118
    %v4120 = vrot.slane %v4119, 2
    %v4121 = vadd.f32 %v4119, %v4120
    %v4122 = vrot.slane %v4121, 1
    %v4123 = vadd.f32 %v4121, %v4122
    %v4124 = vrot.slane %v2698, 4
    %v4125 = vadd.f32 %v2698, %v4124
    %v4126 = vrot.slane %v4125, 2
    %v4127 = vadd.f32 %v4125, %v4126
    %v4128 = vrot.slane %v4127, 1
    %v4129 = vadd.f32 %v4127, %v4128
    %v4130 = vrot.slane %v2699, 4
    %v4131 = vadd.f32 %v2699, %v4130
    %v4132 = vrot.slane %v4131, 2
    %v4133 = vadd.f32 %v4131, %v4132
    %v4134 = vrot.slane %v4133, 1
    %v4135 = vadd.f32 %v4133, %v4134
    %v4136 = vrot.slane %v2700, 4
    %v4137 = vadd.f32 %v2700, %v4136
    %v4138 = vrot.slane %v4137, 2
    %v4139 = vadd.f32 %v4137, %v4138
    %v4140 = vrot.slane %v4139, 1
    %v4141 = vadd.f32 %v4139, %v4140
    %v4142 = vrot.slane %v2701, 4
    %v4143 = vadd.f32 %v2701, %v4142
    %v4144 = vrot.slane %v4143, 2
    %v4145 = vadd.f32 %v4143, %v4144
    %v4146 = vrot.slane %v4145, 1
    %v4147 = vadd.f32 %v4145, %v4146
    %v4148 = vrot.slane %v2702, 4
    %v4149 = vadd.f32 %v2702, %v4148
    %v4150 = vrot.slane %v4149, 2
    %v4151 = vadd.f32 %v4149, %v4150
    %v4152 = vrot.slane %v4151, 1
    %v4153 = vadd.f32 %v4151, %v4152
    %v4154 = vrot.slane %v2703, 4
    %v4155 = vadd.f32 %v2703, %v4154
    %v4156 = vrot.slane %v4155, 2
    %v4157 = vadd.f32 %v4155, %v4156
    %v4158 = vrot.slane %v4157, 1
    %v4159 = vadd.f32 %v4157, %v4158
    %v4160 = vrot.slane %v2704, 4
    %v4161 = vadd.f32 %v2704, %v4160
    %v4162 = vrot.slane %v4161, 2
    %v4163 = vadd.f32 %v4161, %v4162
    %v4164 = vrot.slane %v4163, 1
    %v4165 = vadd.f32 %v4163, %v4164
    %v4166 = vrot.slane %v2705, 4
    %v4167 = vadd.f32 %v2705, %v4166
    %v4168 = vrot.slane %v4167, 2
    %v4169 = vadd.f32 %v4167, %v4168
    %v4170 = vrot.slane %v4169, 1
    %v4171 = vadd.f32 %v4169, %v4170
    %v4172 = vrot.slane %v2706, 4
    %v4173 = vadd.f32 %v2706, %v4172
    %v4174 = vrot.slane %v4173, 2
    %v4175 = vadd.f32 %v4173, %v4174
    %v4176 = vrot.slane %v4175, 1
    %v4177 = vadd.f32 %v4175, %v4176
    %v4178 = vrot.slane %v2707, 4
    %v4179 = vadd.f32 %v2707, %v4178
    %v4180 = vrot.slane %v4179, 2
    %v4181 = vadd.f32 %v4179, %v4180
    %v4182 = vrot.slane %v4181, 1
    %v4183 = vadd.f32 %v4181, %v4182
    %v4184 = vrot.slane %v2708, 4
    %v4185 = vadd.f32 %v2708, %v4184
    %v4186 = vrot.slane %v4185, 2
    %v4187 = vadd.f32 %v4185, %v4186
    %v4188 = vrot.slane %v4187, 1
    %v4189 = vadd.f32 %v4187, %v4188
    %v4190 = vrot.slane %v2709, 4
    %v4191 = vadd.f32 %v2709, %v4190
    %v4192 = vrot.slane %v4191, 2
    %v4193 = vadd.f32 %v4191, %v4192
    %v4194 = vrot.slane %v4193, 1
    %v4195 = vadd.f32 %v4193, %v4194
    %v4196 = vrot.slane %v2710, 4
    %v4197 = vadd.f32 %v2710, %v4196
    %v4198 = vrot.slane %v4197, 2
    %v4199 = vadd.f32 %v4197, %v4198
    %v4200 = vrot.slane %v4199, 1
    %v4201 = vadd.f32 %v4199, %v4200
    %v4202 = vrot.slane %v2711, 4
    %v4203 = vadd.f32 %v2711, %v4202
    %v4204 = vrot.slane %v4203, 2
    %v4205 = vadd.f32 %v4203, %v4204
    %v4206 = vrot.slane %v4205, 1
    %v4207 = vadd.f32 %v4205, %v4206
    %v4208 = vrot.slane %v2712, 4
    %v4209 = vadd.f32 %v2712, %v4208
    %v4210 = vrot.slane %v4209, 2
    %v4211 = vadd.f32 %v4209, %v4210
    %v4212 = vrot.slane %v4211, 1
    %v4213 = vadd.f32 %v4211, %v4212
    %v4214 = vrot.slane %v2713, 4
    %v4215 = vadd.f32 %v2713, %v4214
    %v4216 = vrot.slane %v4215, 2
    %v4217 = vadd.f32 %v4215, %v4216
    %v4218 = vrot.slane %v4217, 1
    %v4219 = vadd.f32 %v4217, %v4218
    %v4220 = vrot.slane %v2714, 4
    %v4221 = vadd.f32 %v2714, %v4220
    %v4222 = vrot.slane %v4221, 2
    %v4223 = vadd.f32 %v4221, %v4222
    %v4224 = vrot.slane %v4223, 1
    %v4225 = vadd.f32 %v4223, %v4224
    %v4226 = vrot.slane %v2715, 4
    %v4227 = vadd.f32 %v2715, %v4226
    %v4228 = vrot.slane %v4227, 2
    %v4229 = vadd.f32 %v4227, %v4228
    %v4230 = vrot.slane %v4229, 1
    %v4231 = vadd.f32 %v4229, %v4230
    %v4232 = vrot.slane %v2716, 4
    %v4233 = vadd.f32 %v2716, %v4232
    %v4234 = vrot.slane %v4233, 2
    %v4235 = vadd.f32 %v4233, %v4234
    %v4236 = vrot.slane %v4235, 1
    %v4237 = vadd.f32 %v4235, %v4236
    %v4238 = vrot.slane %v2717, 4
    %v4239 = vadd.f32 %v2717, %v4238
    %v4240 = vrot.slane %v4239, 2
    %v4241 = vadd.f32 %v4239, %v4240
    %v4242 = vrot.slane %v4241, 1
    %v4243 = vadd.f32 %v4241, %v4242
    %v4244 = vrot.slane %v2718, 4
    %v4245 = vadd.f32 %v2718, %v4244
    %v4246 = vrot.slane %v4245, 2
    %v4247 = vadd.f32 %v4245, %v4246
    %v4248 = vrot.slane %v4247, 1
    %v4249 = vadd.f32 %v4247, %v4248
    %v4250 = vrot.slane %v2719, 4
    %v4251 = vadd.f32 %v2719, %v4250
    %v4252 = vrot.slane %v4251, 2
    %v4253 = vadd.f32 %v4251, %v4252
    %v4254 = vrot.slane %v4253, 1
    %v4255 = vadd.f32 %v4253, %v4254
    %vm4512 = vcmask 1041409
    %v4513 = vsel %vm4512, %v2731, %v2725
    %vm4514 = vcmask 1042434
    %v4515 = vsel %vm4514, %v2737, %v4513
    %vm4516 = vcmask 1043459
    %v4517 = vsel %vm4516, %v2743, %v4515
    %vm4518 = vcmask 1044484
    %v4519 = vsel %vm4518, %v2749, %v4517
    %vm4520 = vcmask 1045509
    %v4521 = vsel %vm4520, %v2755, %v4519
    %vm4522 = vcmask 1046534
    %v4523 = vsel %vm4522, %v2761, %v4521
    %vm4524 = vcmask 1047559
    %v4525 = vsel %vm4524, %v2767, %v4523
    %v4526 = vsel %vm4512, %v2779, %v2773
    %v4527 = vsel %vm4514, %v2785, %v4526
    %v4528 = vsel %vm4516, %v2791, %v4527
    %v4529 = vsel %vm4518, %v2797, %v4528
    %v4530 = vsel %vm4520, %v2803, %v4529
    %v4531 = vsel %vm4522, %v2809, %v4530
    %v4532 = vsel %vm4524, %v2815, %v4531
    %v4533 = vsel %vm4512, %v2827, %v2821
    %v4534 = vsel %vm4514, %v2833, %v4533
    %v4535 = vsel %vm4516, %v2839, %v4534
    %v4536 = vsel %vm4518, %v2845, %v4535
    %v4537 = vsel %vm4520, %v2851, %v4536
    %v4538 = vsel %vm4522, %v2857, %v4537
    %v4539 = vsel %vm4524, %v2863, %v4538
    %v4540 = vsel %vm4512, %v2875, %v2869
    %v4541 = vsel %vm4514, %v2881, %v4540
    %v4542 = vsel %vm4516, %v2887, %v4541
    %v4543 = vsel %vm4518, %v2893, %v4542
    %v4544 = vsel %vm4520, %v2899, %v4543
    %v4545 = vsel %vm4522, %v2905, %v4544
    %v4546 = vsel %vm4524, %v2911, %v4545
    %v4547 = vsel %vm4512, %v2923, %v2917
    %v4548 = vsel %vm4514, %v2929, %v4547
    %v4549 = vsel %vm4516, %v2935, %v4548
    %v4550 = vsel %vm4518, %v2941, %v4549
    %v4551 = vsel %vm4520, %v2947, %v4550
    %v4552 = vsel %vm4522, %v2953, %v4551
    %v4553 = vsel %vm4524, %v2959, %v4552
    %v4554 = vsel %vm4512, %v2971, %v2965
    %v4555 = vsel %vm4514, %v2977, %v4554
    %v4556 = vsel %vm4516, %v2983, %v4555
    %v4557 = vsel %vm4518, %v2989, %v4556
    %v4558 = vsel %vm4520, %v2995, %v4557
    %v4559 = vsel %vm4522, %v3001, %v4558
    %v4560 = vsel %vm4524, %v3007, %v4559
    %v4561 = vsel %vm4512, %v3019, %v3013
    %v4562 = vsel %vm4514, %v3025, %v4561
    %v4563 = vsel %vm4516, %v3031, %v4562
    %v4564 = vsel %vm4518, %v3037, %v4563
    %v4565 = vsel %vm4520, %v3043, %v4564
    %v4566 = vsel %vm4522, %v3049, %v4565
    %v4567 = vsel %vm4524, %v3055, %v4566
    %v4568 = vsel %vm4512, %v3067, %v3061
    %v4569 = vsel %vm4514, %v3073, %v4568
    %v4570 = vsel %vm4516, %v3079, %v4569
    %v4571 = vsel %vm4518, %v3085, %v4570
    %v4572 = vsel %vm4520, %v3091, %v4571
    %v4573 = vsel %vm4522, %v3097, %v4572
    %v4574 = vsel %vm4524, %v3103, %v4573
    %v4575 = vsel %vm4512, %v3115, %v3109
    %v4576 = vsel %vm4514, %v3121, %v4575
    %v4577 = vsel %vm4516, %v3127, %v4576
    %v4578 = vsel %vm4518, %v3133, %v4577
    %v4579 = vsel %vm4520, %v3139, %v4578
    %v4580 = vsel %vm4522, %v3145, %v4579
    %v4581 = vsel %vm4524, %v3151, %v4580
    %v4582 = vsel %vm4512, %v3163, %v3157
    %v4583 = vsel %vm4514, %v3169, %v4582
    %v4584 = vsel %vm4516, %v3175, %v4583
    %v4585 = vsel %vm4518, %v3181, %v4584
    %v4586 = vsel %vm4520, %v3187, %v4585
    %v4587 = vsel %vm4522, %v3193, %v4586
    %v4588 = vsel %vm4524, %v3199, %v4587
    %v4589 = vsel %vm4512, %v3211, %v3205
    %v4590 = vsel %vm4514, %v3217, %v4589
    %v4591 = vsel %vm4516, %v3223, %v4590
    %v4592 = vsel %vm4518, %v3229, %v4591
    %v4593 = vsel %vm4520, %v3235, %v4592
    %v4594 = vsel %vm4522, %v3241, %v4593
    %v4595 = vsel %vm4524, %v3247, %v4594
    %v4596 = vsel %vm4512, %v3259, %v3253
    %v4597 = vsel %vm4514, %v3265, %v4596
    %v4598 = vsel %vm4516, %v3271, %v4597
    %v4599 = vsel %vm4518, %v3277, %v4598
    %v4600 = vsel %vm4520, %v3283, %v4599
    %v4601 = vsel %vm4522, %v3289, %v4600
    %v4602 = vsel %vm4524, %v3295, %v4601
    %v4603 = vsel %vm4512, %v3307, %v3301
    %v4604 = vsel %vm4514, %v3313, %v4603
    %v4605 = vsel %vm4516, %v3319, %v4604
    %v4606 = vsel %vm4518, %v3325, %v4605
    %v4607 = vsel %vm4520, %v3331, %v4606
    %v4608 = vsel %vm4522, %v3337, %v4607
    %v4609 = vsel %vm4524, %v3343, %v4608
    %v4610 = vsel %vm4512, %v3355, %v3349
    %v4611 = vsel %vm4514, %v3361, %v4610
    %v4612 = vsel %vm4516, %v3367, %v4611
    %v4613 = vsel %vm4518, %v3373, %v4612
    %v4614 = vsel %vm4520, %v3379, %v4613
    %v4615 = vsel %vm4522, %v3385, %v4614
    %v4616 = vsel %vm4524, %v3391, %v4615
    %v4617 = vsel %vm4512, %v3403, %v3397
    %v4618 = vsel %vm4514, %v3409, %v4617
    %v4619 = vsel %vm4516, %v3415, %v4618
    %v4620 = vsel %vm4518, %v3421, %v4619
    %v4621 = vsel %vm4520, %v3427, %v4620
    %v4622 = vsel %vm4522, %v3433, %v4621
    %v4623 = vsel %vm4524, %v3439, %v4622
    %v4624 = vsel %vm4512, %v3451, %v3445
    %v4625 = vsel %vm4514, %v3457, %v4624
    %v4626 = vsel %vm4516, %v3463, %v4625
    %v4627 = vsel %vm4518, %v3469, %v4626
    %v4628 = vsel %vm4520, %v3475, %v4627
    %v4629 = vsel %vm4522, %v3481, %v4628
    %v4630 = vsel %vm4524, %v3487, %v4629
    %v4631 = vsel %vm4512, %v3499, %v3493
    %v4632 = vsel %vm4514, %v3505, %v4631
    %v4633 = vsel %vm4516, %v3511, %v4632
    %v4634 = vsel %vm4518, %v3517, %v4633
    %v4635 = vsel %vm4520, %v3523, %v4634
    %v4636 = vsel %vm4522, %v3529, %v4635
    %v4637 = vsel %vm4524, %v3535, %v4636
    %v4638 = vsel %vm4512, %v3547, %v3541
    %v4639 = vsel %vm4514, %v3553, %v4638
    %v4640 = vsel %vm4516, %v3559, %v4639
    %v4641 = vsel %vm4518, %v3565, %v4640
    %v4642 = vsel %vm4520, %v3571, %v4641
    %v4643 = vsel %vm4522, %v3577, %v4642
    %v4644 = vsel %vm4524, %v3583, %v4643
    %v4645 = vsel %vm4512, %v3595, %v3589
    %v4646 = vsel %vm4514, %v3601, %v4645
    %v4647 = vsel %vm4516, %v3607, %v4646
    %v4648 = vsel %vm4518, %v3613, %v4647
    %v4649 = vsel %vm4520, %v3619, %v4648
    %v4650 = vsel %vm4522, %v3625, %v4649
    %v4651 = vsel %vm4524, %v3631, %v4650
    %v4652 = vsel %vm4512, %v3643, %v3637
    %v4653 = vsel %vm4514, %v3649, %v4652
    %v4654 = vsel %vm4516, %v3655, %v4653
    %v4655 = vsel %vm4518, %v3661, %v4654
    %v4656 = vsel %vm4520, %v3667, %v4655
    %v4657 = vsel %vm4522, %v3673, %v4656
    %v4658 = vsel %vm4524, %v3679, %v4657
    %v4659 = vsel %vm4512, %v3691, %v3685
    %v4660 = vsel %vm4514, %v3697, %v4659
    %v4661 = vsel %vm4516, %v3703, %v4660
    %v4662 = vsel %vm4518, %v3709, %v4661
    %v4663 = vsel %vm4520, %v3715, %v4662
    %v4664 = vsel %vm4522, %v3721, %v4663
    %v4665 = vsel %vm4524, %v3727, %v4664
    %v4666 = vsel %vm4512, %v3739, %v3733
    %v4667 = vsel %vm4514, %v3745, %v4666
    %v4668 = vsel %vm4516, %v3751, %v4667
    %v4669 = vsel %vm4518, %v3757, %v4668
    %v4670 = vsel %vm4520, %v3763, %v4669
    %v4671 = vsel %vm4522, %v3769, %v4670
    %v4672 = vsel %vm4524, %v3775, %v4671
    %v4673 = vsel %vm4512, %v3787, %v3781
    %v4674 = vsel %vm4514, %v3793, %v4673
    %v4675 = vsel %vm4516, %v3799, %v4674
    %v4676 = vsel %vm4518, %v3805, %v4675
    %v4677 = vsel %vm4520, %v3811, %v4676
    %v4678 = vsel %vm4522, %v3817, %v4677
    %v4679 = vsel %vm4524, %v3823, %v4678
    %v4680 = vsel %vm4512, %v3835, %v3829
    %v4681 = vsel %vm4514, %v3841, %v4680
    %v4682 = vsel %vm4516, %v3847, %v4681
    %v4683 = vsel %vm4518, %v3853, %v4682
    %v4684 = vsel %vm4520, %v3859, %v4683
    %v4685 = vsel %vm4522, %v3865, %v4684
    %v4686 = vsel %vm4524, %v3871, %v4685
    %v4687 = vsel %vm4512, %v3883, %v3877
    %v4688 = vsel %vm4514, %v3889, %v4687
    %v4689 = vsel %vm4516, %v3895, %v4688
    %v4690 = vsel %vm4518, %v3901, %v4689
    %v4691 = vsel %vm4520, %v3907, %v4690
    %v4692 = vsel %vm4522, %v3913, %v4691
    %v4693 = vsel %vm4524, %v3919, %v4692
    %v4694 = vsel %vm4512, %v3931, %v3925
    %v4695 = vsel %vm4514, %v3937, %v4694
    %v4696 = vsel %vm4516, %v3943, %v4695
    %v4697 = vsel %vm4518, %v3949, %v4696
    %v4698 = vsel %vm4520, %v3955, %v4697
    %v4699 = vsel %vm4522, %v3961, %v4698
    %v4700 = vsel %vm4524, %v3967, %v4699
    %v4701 = vsel %vm4512, %v3979, %v3973
    %v4702 = vsel %vm4514, %v3985, %v4701
    %v4703 = vsel %vm4516, %v3991, %v4702
    %v4704 = vsel %vm4518, %v3997, %v4703
    %v4705 = vsel %vm4520, %v4003, %v4704
    %v4706 = vsel %vm4522, %v4009, %v4705
    %v4707 = vsel %vm4524, %v4015, %v4706
    %v4708 = vsel %vm4512, %v4027, %v4021
    %v4709 = vsel %vm4514, %v4033, %v4708
    %v4710 = vsel %vm4516, %v4039, %v4709
    %v4711 = vsel %vm4518, %v4045, %v4710
    %v4712 = vsel %vm4520, %v4051, %v4711
    %v4713 = vsel %vm4522, %v4057, %v4712
    %v4714 = vsel %vm4524, %v4063, %v4713
    %v4715 = vsel %vm4512, %v4075, %v4069
    %v4716 = vsel %vm4514, %v4081, %v4715
    %v4717 = vsel %vm4516, %v4087, %v4716
    %v4718 = vsel %vm4518, %v4093, %v4717
    %v4719 = vsel %vm4520, %v4099, %v4718
    %v4720 = vsel %vm4522, %v4105, %v4719
    %v4721 = vsel %vm4524, %v4111, %v4720
    %v4722 = vsel %vm4512, %v4123, %v4117
    %v4723 = vsel %vm4514, %v4129, %v4722
    %v4724 = vsel %vm4516, %v4135, %v4723
    %v4725 = vsel %vm4518, %v4141, %v4724
    %v4726 = vsel %vm4520, %v4147, %v4725
    %v4727 = vsel %vm4522, %v4153, %v4726
    %v4728 = vsel %vm4524, %v4159, %v4727
    %v4729 = vsel %vm4512, %v4171, %v4165
    %v4730 = vsel %vm4514, %v4177, %v4729
    %v4731 = vsel %vm4516, %v4183, %v4730
    %v4732 = vsel %vm4518, %v4189, %v4731
    %v4733 = vsel %vm4520, %v4195, %v4732
    %v4734 = vsel %vm4522, %v4201, %v4733
    %v4735 = vsel %vm4524, %v4207, %v4734
    %v4736 = vsel %vm4512, %v4219, %v4213
    %v4737 = vsel %vm4514, %v4225, %v4736
    %v4738 = vsel %vm4516, %v4231, %v4737
    %v4739 = vsel %vm4518, %v4237, %v4738
    %v4740 = vsel %vm4520, %v4243, %v4739
    %v4741 = vsel %vm4522, %v4249, %v4740
    %v4742 = vsel %vm4524, %v4255, %v4741
    %4775 = vst [vmem:[#allocation7] sm:$0xff] %v4525
    %4776 = vst [vmem:[#allocation7 + $0x8] sm:$0xff] %v4532
    %4777 = vst [vmem:[#allocation7 + $0x10] sm:$0xff] %v4539
    %4778 = vst [vmem:[#allocation7 + $0x18] sm:$0xff] %v4546
    %4779 = vst [vmem:[#allocation7 + $0x20] sm:$0xff] %v4553
    %4780 = vst [vmem:[#allocation7 + $0x28] sm:$0xff] %v4560
    %4781 = vst [vmem:[#allocation7 + $0x30] sm:$0xff] %v4567
    %4782 = vst [vmem:[#allocation7 + $0x38] sm:$0xff] %v4574
    %4783 = vst [vmem:[#allocation7 + $0x40] sm:$0xff] %v4581
    %4784 = vst [vmem:[#allocation7 + $0x48] sm:$0xff] %v4588
    %4785 = vst [vmem:[#allocation7 + $0x50] sm:$0xff] %v4595
    %4786 = vst [vmem:[#allocation7 + $0x58] sm:$0xff] %v4602
    %4787 = vst [vmem:[#allocation7 + $0x60] sm:$0xff] %v4609
    %4788 = vst [vmem:[#allocation7 + $0x68] sm:$0xff] %v4616
    %4789 = vst [vmem:[#allocation7 + $0x70] sm:$0xff] %v4623
    %4790 = vst [vmem:[#allocation7 + $0x78] sm:$0xff] %v4630
    %4791 = vst [vmem:[#allocation7 + $0x80] sm:$0xff] %v4637
    %4792 = vst [vmem:[#allocation7 + $0x88] sm:$0xff] %v4644
    %4793 = vst [vmem:[#allocation7 + $0x90] sm:$0xff] %v4651
    %4794 = vst [vmem:[#allocation7 + $0x98] sm:$0xff] %v4658
    %4795 = vst [vmem:[#allocation7 + $0xa0] sm:$0xff] %v4665
    %4796 = vst [vmem:[#allocation7 + $0xa8] sm:$0xff] %v4672
    %4797 = vst [vmem:[#allocation7 + $0xb0] sm:$0xff] %v4679
    %4798 = vst [vmem:[#allocation7 + $0xb8] sm:$0xff] %v4686
    %4799 = vst [vmem:[#allocation7 + $0xc0] sm:$0xff] %v4693
    %4800 = vst [vmem:[#allocation7 + $0xc8] sm:$0xff] %v4700
    %4801 = vst [vmem:[#allocation7 + $0xd0] sm:$0xff] %v4707
    %4802 = vst [vmem:[#allocation7 + $0xd8] sm:$0xff] %v4714
    %4803 = vst [vmem:[#allocation7 + $0xe0] sm:$0xff] %v4721
    %4804 = vst [vmem:[#allocation7 + $0xe8] sm:$0xff] %v4728
    %4805 = vst [vmem:[#allocation7 + $0xf0] sm:$0xff] %v4735
    %4806 = vst [vmem:[#allocation7 + $0xf8] sm:$0xff] %v4742
    // Predicated region
    $region26: #{semantic_attention.1} parent=1 // pred_check
      _
    $region27: #{semantic_attention.1} parent=1 // pred_check_branch
      %4808 = sbr.rel (0) target = $region29
    $region28: #{semantic_attention.1} parent=1 // pred_region
      %s4810 = ssub.s32 4096, 4096
      %4811 = vsyncadd [#allocation4], %s4810
      %s4812 = sshll.u32 [#allocation7], 4
      %s4813 = int_to_ptr.vmem [resolvable:$true] %s4812
      %4818 = dma.vmem_to_hbm [thread:$0]  %s4813, 4096, %s4, [#allocation4], 128, 128, 8
    $region29: #{semantic_attention.1} parent=1 // pred_fallthru
      _
    // Predicated region
    $region30: #{semantic_attention.1} parent=1 // pred_check
      _
    $region31: #{semantic_attention.1} parent=1 // pred_check_branch
      %4820 = sbr.rel (0) target = $region33
    $region32: #{semantic_attention.1} parent=1 // pred_region
      %4821 = dma.done [#allocation4], 4096
    $region33: #{semantic_attention.1} parent=1 // pred_fallthru
      _
    %4822 = vsyncpa [#allocation3], 1
    %4823 = vsyncpa [#allocation6], 1
    %4824 = vsyncpa [#allocation4], 1

</llo_original>
